<compile_context>
chip_gen: v5e
topology: v5e:2x2
jax: 0.10.0
libtpu: 0.0.40
codegen_flags: <defaults>
</compile_context>

<pallas_src>
import functools

import jax
import jax.numpy as jnp
from jax.experimental import pallas as pl
from jax.experimental.pallas import tpu as pltpu

# ----------------------------- static dimensions ---------------------------- #
KH = KW = 5
C_IN = 3
OC1, OC1P = 6, 8                    # conv1 out channels (padded to a sublane multiple)
K1, K1P = C_IN * KH * KW, 128       # 75 -> 128 (bias column lives at index K1=75)
OC2 = 16                            # conv2 out channels (already a multiple of 8)
K2, K2P = OC1 * KH * KW, 256        # 150 -> 256 (bias column at index K2=150)
S2, S2P = 10 * 10, 128              # conv2 spatial positions per image -> lane width
H1, H1P = 120, 128                  # fc1
H2, H2P = 84, 128                   # fc2
OP = 128                            # padded logits

TM_MAX = 2048                       # kernel A: max pooled pixels (lanes) per grid step
TB_MAX = 32                         # kernel B: max images per grid step


def _round_up(x, m):
    return (x + m - 1) // m * m


# ------------------------------- Pallas kernels ----------------------------- #

def _conv1_pool_relu_kernel(p_ref, w_ref, o_ref):
    """conv1 + bias + 2x2 maxpool + ReLU, lane-dense transposed matmul.

    p_ref : (4, K1P, TM) bf16   4 pool-window offsets x patch rows x pooled pixels
    w_ref : (OC1P, K1P)  bf16   flattened conv1 weights (bias folded into column K1)
    o_ref : (OC1P, TM)   f32    pooled activations, (oc ; n,py,px) layout
    """
    w = w_ref[...]
    y0 = jnp.dot(w, p_ref[0], preferred_element_type=jnp.float32)
    y1 = jnp.dot(w, p_ref[1], preferred_element_type=jnp.float32)
    y2 = jnp.dot(w, p_ref[2], preferred_element_type=jnp.float32)
    y3 = jnp.dot(w, p_ref[3], preferred_element_type=jnp.float32)
    y = jnp.maximum(jnp.maximum(y0, y1), jnp.maximum(y2, y3))   # maxpool (relu commutes)
    o_ref[...] = jnp.maximum(y, 0.0)                             # ReLU (f32 epilogue)


def _conv2_head_kernel(p_ref, cw_ref, f1w_ref, f1b_ref, f2w_ref, f2b_ref,
                       f3w_ref, f3b_ref, o_ref, r_scr, *, n_imgs):
    """conv2 + bias + ReLU + flatten + fc1 + ReLU + fc2 + ReLU + fc3 + log_softmax.

    p_ref  : (TB, K2P, S2P)  bf16  per-image conv2 patches (transposed, ones row at K2)
    cw_ref : (OC2, K2P)      bf16  flattened conv2 weights (+ bias column)
    f1w_ref: (OC2, S2P, H1P) bf16  fc1 weights regrouped per conv2 channel
    f2w_ref: (H1P, H2P) bf16, f3w_ref: (H2P, OP) bf16
    f*b_ref: (1, ...) f32 biases (fc3's padded columns hold -1e30)
    o_ref  : (TB, OP) f32 log-probabilities (padded columns sliced off outside)
    r_scr  : (TB, OC2, S2P) bf16 VMEM scratch holding relu(conv2) activations
    """
    cw = cw_ref[...]
    # conv2 + ReLU: one lane-dense (OC2 x S2P) matmul per image of the tile
    # (Python loop unrolls at trace time -> LLO scheduler sees all matmuls).
    for n in range(n_imgs):
        c2 = jnp.dot(cw, p_ref[n], preferred_element_type=jnp.float32)   # (OC2, S2P)
        r_scr[n] = jnp.maximum(c2, 0.0).astype(r_scr.dtype)
    # fc1: contract (oc, s) jointly by accumulating one matmul per conv2 channel
    h1 = jnp.zeros((n_imgs, H1P), jnp.float32)
    for oc in range(OC2):
        h1 = h1 + jnp.dot(r_scr[:, oc, :], f1w_ref[oc],
                          preferred_element_type=jnp.float32)
    h1 = jnp.maximum(h1 + f1b_ref[...], 0.0).astype(jnp.bfloat16)
    h2 = jnp.dot(h1, f2w_ref[...], preferred_element_type=jnp.float32) + f2b_ref[...]
    h2 = jnp.maximum(h2, 0.0).astype(jnp.bfloat16)
    logits = jnp.dot(h2, f3w_ref[...], preferred_element_type=jnp.float32) + f3b_ref[...]
    m = jnp.max(logits, axis=-1, keepdims=True)
    s = logits - m
    lse = jnp.log(jnp.sum(jnp.exp(s), axis=-1, keepdims=True))
    o_ref[...] = s - lse


# --------------------------- XLA-side patch helper --------------------------- #

def _extract_patches_nchw(x, kh, kw):
    """im2col as a single grouped conv with an identity kernel.

    x: (N, C, H, W) -> (N, C*kh*kw, OH, OW) with feature index c*(kh*kw) + i*kw + j,
    i.e. exactly PyTorch's weight.reshape(OC, -1) ordering (correct by construction).
    """
    _, c, _, _ = x.shape
    ksp = kh * kw
    eye = jnp.eye(ksp, dtype=x.dtype).reshape(ksp, 1, kh, kw)
    kern = jnp.tile(eye, (c, 1, 1, 1))                       # (c*ksp, 1, kh, kw)
    return jax.lax.conv_general_dilated(
        x, kern, window_strides=(1, 1), padding="VALID",
        dimension_numbers=("NCHW", "OIHW", "NCHW"),
        feature_group_count=c)


# ------------------------------- forward pass -------------------------------- #

def cnn4_forward(kp, x, *, output_size):
    n = x.shape[0]
    assert x.shape[1:] == (C_IN, 32, 32)
    f32 = jnp.float32
    x = x.astype(f32)

    # conv1 patches, reordered so each 2x2 pool window forms the 4 leading slabs and
    # the pooled-pixel index (n, py, px) is the lane axis (padded to a TM multiple).
    p1 = _extract_patches_nchw(x, KH, KW)                    # (N, 75, 28, 28)
    m1 = n * 14 * 14
    tm = min(TM_MAX, _round_up(m1, 512))                     # adaptive lane tile
    m1p = _round_up(m1, tm)
    p1 = p1.reshape(n, K1, 14, 2, 14, 2).transpose(3, 5, 1, 0, 2, 4)
    p1 = p1.reshape(4, K1, m1)
    p1 = jnp.concatenate(
        [p1, jnp.ones((4, 1, m1), f32), jnp.zeros((4, K1P - K1 - 1, m1), f32)], axis=1)
    p1 = jnp.pad(p1, ((0, 0), (0, 0), (0, m1p - m1))).astype(jnp.bfloat16)

    # ---- kernel A: conv1 + bias + 2x2 maxpool + ReLU (lane-dense, tiled over M) ----
    ypool = pl.pallas_call(
        _conv1_pool_relu_kernel,
        out_shape=jax.ShapeDtypeStruct((OC1P, m1p), f32),
        grid=(m1p // tm,),
        in_specs=[
            pl.BlockSpec((4, K1P, tm), lambda i: (0, 0, i)),
            pl.BlockSpec((OC1P, K1P), lambda i: (0, 0)),
        ],
        out_specs=pl.BlockSpec((OC1P, tm), lambda i: (0, i)),
        compiler_params=pltpu.CompilerParams(dimension_semantics=("parallel",)),
    )(p1, kp["c1w"])

    # ---- conv2 patches (tiny XLA glue between the two kernels) --------------------
    pooled = ypool[:OC1, :m1].reshape(OC1, n, 14, 14).transpose(1, 0, 2, 3)  # NCHW
    p2 = _extract_patches_nchw(pooled, KH, KW)               # (N, 150, 10, 10)
    p2 = p2.reshape(n, K2, S2)
    p2 = jnp.concatenate(
        [p2, jnp.ones((n, 1, S2), f32), jnp.zeros((n, K2P - K2 - 1, S2), f32)], axis=1)
    p2 = jnp.pad(p2, ((0, 0), (0, 0), (0, S2P - S2)))
    tb = min(TB_MAX, _round_up(n, 8))                        # adaptive batch tile
    np_ = _round_up(n, tb)
    p2 = jnp.pad(p2, ((0, np_ - n), (0, 0), (0, 0))).astype(jnp.bfloat16)

    # ---- kernel B: conv2 + ReLU + flatten + fc1/fc2/fc3 + log_softmax (fused) ------
    out = pl.pallas_call(
        functools.partial(_conv2_head_kernel, n_imgs=tb),
        out_shape=jax.ShapeDtypeStruct((np_, OP), f32),
        grid=(np_ // tb,),
        in_specs=[
            pl.BlockSpec((tb, K2P, S2P), lambda i: (i, 0, 0)),
            pl.BlockSpec((OC2, K2P), lambda i: (0, 0)),
            pl.BlockSpec((OC2, S2P, H1P), lambda i: (0, 0, 0)),
            pl.BlockSpec((1, H1P), lambda i: (0, 0)),
            pl.BlockSpec((H1P, H2P), lambda i: (0, 0)),
            pl.BlockSpec((1, H2P), lambda i: (0, 0)),
            pl.BlockSpec((H2P, OP), lambda i: (0, 0)),
            pl.BlockSpec((1, OP), lambda i: (0, 0)),
        ],
        out_specs=pl.BlockSpec((tb, OP), lambda i: (i, 0)),
        scratch_shapes=[pltpu.VMEM((tb, OC2, S2P), jnp.bfloat16)],
        compiler_params=pltpu.CompilerParams(dimension_semantics=("parallel",)),
    )(p2, kp["c2w"], kp["f1w"], kp["f1b"], kp["f2w"], kp["f2b"], kp["f3w"], kp["f3b"])

    return out[:n, :output_size]


# ------------------------------- parameters ---------------------------------- #

def init_params(key, output_size=10):
    """PyTorch-layout parameters (same init ranges as nn.Conv2d / nn.Linear)."""
    ks = jax.random.split(key, 10)

    def uni(k, shape, fan_in):
        bound = 1.0 / (fan_in ** 0.5)
        return jax.random.uniform(k, shape, jnp.float32, -bound, bound)

    return {
        "conv1_w": uni(ks[0], (6, 3, 5, 5), 3 * 25),
        "conv1_b": uni(ks[1], (6,), 3 * 25),
        "conv2_w": uni(ks[2], (16, 6, 5, 5), 6 * 25),
        "conv2_b": uni(ks[3], (16,), 6 * 25),
        "fc1_w": uni(ks[4], (120, 1600), 1600),
        "fc1_b": uni(ks[5], (120,), 1600),
        "fc2_w": uni(ks[6], (84, 120), 120),
        "fc2_b": uni(ks[7], (84,), 120),
        "fc3_w": uni(ks[8], (output_size, 84), 84),
        "fc3_b": uni(ks[9], (output_size,), 84),
    }


def prepare_params(params, output_size):
    """Pad / transpose / regroup the PyTorch-layout weights once and cast the MXU
    operands to bf16 (accumulation stays f32 inside the kernels)."""
    assert output_size <= OP
    f32, bf16 = jnp.float32, jnp.bfloat16

    # conv1 -> (OC1P, K1P); bias folded in as column K1 (patches carry a ones-row there)
    c1 = jnp.zeros((OC1P, K1P), f32)
    c1 = c1.at[:OC1, :K1].set(params["conv1_w"].reshape(OC1, K1))
    c1 = c1.at[:OC1, K1].set(params["conv1_b"])

    # conv2 -> (OC2, K2P); bias column at K2
    c2 = jnp.zeros((OC2, K2P), f32)
    c2 = c2.at[:, :K2].set(params["conv2_w"].reshape(OC2, K2))
    c2 = c2.at[:, K2].set(params["conv2_b"])

    # fc1 regrouped: W1r[oc, s, j] = fc1_w[j, oc*100 + s]   (matches x.view(-1, 1600))
    f1 = params["fc1_w"].reshape(H1, OC2, S2).transpose(1, 2, 0)
    f1w = jnp.zeros((OC2, S2P, H1P), f32).at[:, :S2, :H1].set(f1)
    f1b = jnp.zeros((1, H1P), f32).at[0, :H1].set(params["fc1_b"])

    f2w = jnp.zeros((H1P, H2P), f32).at[:H1, :H2].set(params["fc2_w"].T)
    f2b = jnp.zeros((1, H2P), f32).at[0, :H2].set(params["fc2_b"])

    f3w = jnp.zeros((H2P, OP), f32).at[:H2, :output_size].set(params["fc3_w"].T)
    # padded logit columns get a huge negative bias so log_softmax ignores them
    f3b = jnp.full((1, OP), -1e30, f32).at[0, :output_size].set(params["fc3_b"])

    return {
        "c1w": c1.astype(bf16), "c2w": c2.astype(bf16),
        "f1w": f1w.astype(bf16), "f1b": f1b,
        "f2w": f2w.astype(bf16), "f2b": f2b,
        "f3w": f3w.astype(bf16), "f3b": f3b,
    }


# --------------------------- plain-JAX f32 reference -------------------------- #

def cnn4_reference(params, x, output_size):
    dn = ("NCHW", "OIHW", "NCHW")
    y = jax.lax.conv_general_dilated(x, params["conv1_w"], (1, 1), "VALID",
                                     dimension_numbers=dn)
    y = jax.nn.relu(y + params["conv1_b"][None, :, None, None])
    nb, c, h, w = y.shape
    y = y.reshape(nb, c, h // 2, 2, w // 2, 2).max(axis=(3, 5))
    y = jax.lax.conv_general_dilated(y, params["conv2_w"], (1, 1), "VALID",
                                     dimension_numbers=dn)
    y = jax.nn.relu(y + params["conv2_b"][None, :, None, None])
    flat = y.reshape(nb, -1)
    h1 = jax.nn.relu(flat @ params["fc1_w"].T + params["fc1_b"])
    h2 = jax.nn.relu(h1 @ params["fc2_w"].T + params["fc2_b"])
    logits = h2 @ params["fc3_w"].T + params["fc3_b"]
    return jax.nn.log_softmax(logits, axis=-1)


if __name__ == "__main__":
    key = jax.random.PRNGKey(0)
    k_param, k_x = jax.random.split(key)

    output_size = 10
    params = init_params(k_param, output_size=output_size)
    kparams = prepare_params(params, output_size)

    # Input spatial size is fixed by fc1's 16*10*10: 32x32 RGB, small batch.
    x = jax.random.normal(k_x, (2, 3, 32, 32), dtype=jnp.float32)

    fwd = jax.jit(functools.partial(cnn4_forward, output_size=output_size))
    out = jax.block_until_ready(fwd(kparams, x))

    assert out.shape == (2, output_size)
    # log_softmax rows must exponentiate to ~1
    row_sums = jnp.exp(out).sum(axis=1)
    assert bool(jnp.all(jnp.abs(row_sums - 1.0) < 1e-3))
    # cross-check against a plain-JAX f32 reference (kernel uses bf16 MXU inputs)
    ref = cnn4_reference(params, x, output_size)
    max_err = float(jnp.max(jnp.abs(out - ref)))
    assert max_err < 1e-1, f"max abs err vs reference: {max_err}"

    print("KERNEL_OK")
</pallas_src>

<mosaic_0001>
module attributes {stable_mosaic.version = 11 : i64} {
  func.func @_conv1_pool_relu_kernel(%arg0: i32, %arg1: memref<4x128x512xbf16, #tpu.memory_space<vmem>>, %arg2: memref<8x128xbf16, #tpu.memory_space<vmem>>, %arg3: memref<8x512xf32, #tpu.memory_space<vmem>>) attributes {dimension_semantics = [#tpu.dimension_semantics<parallel>], iteration_bounds = array<i64: 1>, scalar_prefetch = 0 : i64, scratch_operands = 0 : i64, tpu.core_type = #tpu.core_type<tc>, window_params = [{transform_indices = @transform_0, window_bounds = array<i64: 4, 128, 512>}, {pipeline_mode = #tpu.pipeline_mode<synchronous>, transform_indices = @transform_1, window_bounds = array<i64: 8, 128>}, {transform_indices = @transform_2, window_bounds = array<i64: 8, 512>}]} {
    %c0 = arith.constant 0 : index
    %c0_0 = arith.constant 0 : index
    %0 = vector.load %arg2[%c0, %c0_0] : memref<8x128xbf16, #tpu.memory_space<vmem>>, vector<8x128xbf16>
    %c0_1 = arith.constant 0 : index
    %c0_2 = arith.constant 0 : index
    %c0_3 = arith.constant 0 : index
    %1 = vector.load %arg1[%c0_1, %c0_2, %c0_3] : memref<4x128x512xbf16, #tpu.memory_space<vmem>>, vector<1x128x512xbf16>
    %2 = vector.shape_cast %1 : vector<1x128x512xbf16> to vector<128x512xbf16>
    %cst = arith.constant dense<0.000000e+00> : vector<8x512xf32>
    %3 = tpu.matmul %0, %2, %cst {dimension_numbers = #tpu.dot_dimension_numbers<[1], [0], [0], [1], [0, 0, 1, 1], [], []>} : vector<8x128xbf16>, vector<128x512xbf16>, vector<8x512xf32> -> vector<8x512xf32>
    %c1 = arith.constant 1 : index
    %c0_4 = arith.constant 0 : index
    %c0_5 = arith.constant 0 : index
    %4 = vector.load %arg1[%c1, %c0_4, %c0_5] : memref<4x128x512xbf16, #tpu.memory_space<vmem>>, vector<1x128x512xbf16>
    %5 = vector.shape_cast %4 : vector<1x128x512xbf16> to vector<128x512xbf16>
    %cst_6 = arith.constant dense<0.000000e+00> : vector<8x512xf32>
    %6 = tpu.matmul %0, %5, %cst_6 {dimension_numbers = #tpu.dot_dimension_numbers<[1], [0], [0], [1], [0, 0, 1, 1], [], []>} : vector<8x128xbf16>, vector<128x512xbf16>, vector<8x512xf32> -> vector<8x512xf32>
    %c2 = arith.constant 2 : index
    %c0_7 = arith.constant 0 : index
    %c0_8 = arith.constant 0 : index
    %7 = vector.load %arg1[%c2, %c0_7, %c0_8] : memref<4x128x512xbf16, #tpu.memory_space<vmem>>, vector<1x128x512xbf16>
    %8 = vector.shape_cast %7 : vector<1x128x512xbf16> to vector<128x512xbf16>
    %cst_9 = arith.constant dense<0.000000e+00> : vector<8x512xf32>
    %9 = tpu.matmul %0, %8, %cst_9 {dimension_numbers = #tpu.dot_dimension_numbers<[1], [0], [0], [1], [0, 0, 1, 1], [], []>} : vector<8x128xbf16>, vector<128x512xbf16>, vector<8x512xf32> -> vector<8x512xf32>
    %c3 = arith.constant 3 : index
    %c0_10 = arith.constant 0 : index
    %c0_11 = arith.constant 0 : index
    %10 = vector.load %arg1[%c3, %c0_10, %c0_11] : memref<4x128x512xbf16, #tpu.memory_space<vmem>>, vector<1x128x512xbf16>
    %11 = vector.shape_cast %10 : vector<1x128x512xbf16> to vector<128x512xbf16>
    %cst_12 = arith.constant dense<0.000000e+00> : vector<8x512xf32>
    %12 = tpu.matmul %0, %11, %cst_12 {dimension_numbers = #tpu.dot_dimension_numbers<[1], [0], [0], [1], [0, 0, 1, 1], [], []>} : vector<8x128xbf16>, vector<128x512xbf16>, vector<8x512xf32> -> vector<8x512xf32>
    %13 = arith.maximumf %3, %6 : vector<8x512xf32>
    %14 = arith.maximumf %9, %12 : vector<8x512xf32>
    %15 = arith.maximumf %13, %14 : vector<8x512xf32>
    %cst_13 = arith.constant 0.000000e+00 : f32
    %16 = vector.broadcast %cst_13 : f32 to vector<8x512xf32>
    %17 = arith.maximumf %15, %16 : vector<8x512xf32>
    %c0_14 = arith.constant 0 : index
    %c0_15 = arith.constant 0 : index
    %18 = vector.load %arg3[%c0_14, %c0_15] : memref<8x512xf32, #tpu.memory_space<vmem>>, vector<8x512xf32>
    tpu.vector_store %arg3[%c0_14, %c0_15], %17 {strides = array<i32>} : memref<8x512xf32, #tpu.memory_space<vmem>>, vector<8x512xf32>,
    return
  }
  func.func @transform_0(%arg0: i32) -> (i32, i32, i32) {
    %c0_i32 = arith.constant 0 : i32
    %c0_i32_0 = arith.constant 0 : i32
    %c0_i32_1 = arith.constant 0 : i32
    return %c0_i32, %c0_i32_0, %arg0 : i32, i32, i32
  }
  func.func @transform_1(%arg0: i32) -> (i32, i32) {
    %c0_i32 = arith.constant 0 : i32
    %c0_i32_0 = arith.constant 0 : i32
    %c0_i32_1 = arith.constant 0 : i32
    return %c0_i32, %c0_i32_0 : i32, i32
  }
  func.func @transform_2(%arg0: i32) -> (i32, i32) {
    %c0_i32 = arith.constant 0 : i32
    %c0_i32_0 = arith.constant 0 : i32
    return %c0_i32, %arg0 : i32, i32
  }
}

module attributes {stable_mosaic.version = 11 : i64} {
  func.func @_conv2_head_kernel(%arg0: i32, %arg1: memref<8x256x128xbf16, #tpu.memory_space<vmem>>, %arg2: memref<16x256xbf16, #tpu.memory_space<vmem>>, %arg3: memref<16x128x128xbf16, #tpu.memory_space<vmem>>, %arg4: memref<1x128xf32, #tpu.memory_space<vmem>>, %arg5: memref<128x128xbf16, #tpu.memory_space<vmem>>, %arg6: memref<1x128xf32, #tpu.memory_space<vmem>>, %arg7: memref<128x128xbf16, #tpu.memory_space<vmem>>, %arg8: memref<1x128xf32, #tpu.memory_space<vmem>>, %arg9: memref<8x128xf32, #tpu.memory_space<vmem>>, %arg10: memref<8x16x128xbf16, #tpu.memory_space<vmem>>) attributes {dimension_semantics = [#tpu.dimension_semantics<parallel>], iteration_bounds = array<i64: 1>, scalar_prefetch = 0 : i64, scratch_operands = 1 : i64, tpu.core_type = #tpu.core_type<tc>, window_params = [{transform_indices = @transform_0, window_bounds = array<i64: 8, 256, 128>}, {pipeline_mode = #tpu.pipeline_mode<synchronous>, transform_indices = @transform_1, window_bounds = array<i64: 16, 256>}, {pipeline_mode = #tpu.pipeline_mode<synchronous>, transform_indices = @transform_2, window_bounds = array<i64: 16, 128, 128>}, {pipeline_mode = #tpu.pipeline_mode<synchronous>, transform_indices = @transform_3, window_bounds = array<i64: 1, 128>}, {pipeline_mode = #tpu.pipeline_mode<synchronous>, transform_indices = @transform_4, window_bounds = array<i64: 128, 128>}, {pipeline_mode = #tpu.pipeline_mode<synchronous>, transform_indices = @transform_5, window_bounds = array<i64: 1, 128>}, {pipeline_mode = #tpu.pipeline_mode<synchronous>, transform_indices = @transform_6, window_bounds = array<i64: 128, 128>}, {pipeline_mode = #tpu.pipeline_mode<synchronous>, transform_indices = @transform_7, window_bounds = array<i64: 1, 128>}, {transform_indices = @transform_8, window_bounds = array<i64: 8, 128>}]} {
    %c0 = arith.constant 0 : index
    %c0_0 = arith.constant 0 : index
    %0 = vector.load %arg2[%c0, %c0_0] : memref<16x256xbf16, #tpu.memory_space<vmem>>, vector<16x256xbf16>
    %c0_1 = arith.constant 0 : index
    %c0_2 = arith.constant 0 : index
    %c0_3 = arith.constant 0 : index
    %1 = vector.load %arg1[%c0_1, %c0_2, %c0_3] : memref<8x256x128xbf16, #tpu.memory_space<vmem>>, vector<1x256x128xbf16>
    %2 = vector.shape_cast %1 : vector<1x256x128xbf16> to vector<256x128xbf16>
    %cst = arith.constant dense<0.000000e+00> : vector<16x128xf32>
    %3 = tpu.matmul %0, %2, %cst {dimension_numbers = #tpu.dot_dimension_numbers<[1], [0], [0], [1], [0, 0, 1, 1], [], []>} : vector<16x256xbf16>, vector<256x128xbf16>, vector<16x128xf32> -> vector<16x128xf32>
    %cst_4 = arith.constant 0.000000e+00 : f32
    %4 = vector.broadcast %cst_4 : f32 to vector<16x128xf32>
    %5 = arith.maximumf %3, %4 : vector<16x128xf32>
    %6 = arith.truncf %5 : vector<16x128xf32> to vector<16x128xbf16>
    %c0_5 = arith.constant 0 : index
    %c0_6 = arith.constant 0 : index
    %c0_7 = arith.constant 0 : index
    %7 = vector.load %arg10[%c0_5, %c0_6, %c0_7] : memref<8x16x128xbf16, #tpu.memory_space<vmem>>, vector<1x16x128xbf16>
    %8 = vector.shape_cast %7 : vector<1x16x128xbf16> to vector<16x128xbf16>
    %9 = vector.shape_cast %6 : vector<16x128xbf16> to vector<1x16x128xbf16>
    tpu.vector_store %arg10[%c0_5, %c0_6, %c0_7], %9 {strides = array<i32>} : memref<8x16x128xbf16, #tpu.memory_space<vmem>>, vector<1x16x128xbf16>,
    %c1 = arith.constant 1 : index
    %c0_8 = arith.constant 0 : index
    %c0_9 = arith.constant 0 : index
    %10 = vector.load %arg1[%c1, %c0_8, %c0_9] : memref<8x256x128xbf16, #tpu.memory_space<vmem>>, vector<1x256x128xbf16>
    %11 = vector.shape_cast %10 : vector<1x256x128xbf16> to vector<256x128xbf16>
    %cst_10 = arith.constant dense<0.000000e+00> : vector<16x128xf32>
    %12 = tpu.matmul %0, %11, %cst_10 {dimension_numbers = #tpu.dot_dimension_numbers<[1], [0], [0], [1], [0, 0, 1, 1], [], []>} : vector<16x256xbf16>, vector<256x128xbf16>, vector<16x128xf32> -> vector<16x128xf32>
    %cst_11 = arith.constant 0.000000e+00 : f32
    %13 = vector.broadcast %cst_11 : f32 to vector<16x128xf32>
    %14 = arith.maximumf %12, %13 : vector<16x128xf32>
    %15 = arith.truncf %14 : vector<16x128xf32> to vector<16x128xbf16>
    %c1_12 = arith.constant 1 : index
    %c0_13 = arith.constant 0 : index
    %c0_14 = arith.constant 0 : index
    %16 = vector.load %arg10[%c1_12, %c0_13, %c0_14] : memref<8x16x128xbf16, #tpu.memory_space<vmem>>, vector<1x16x128xbf16>
    %17 = vector.shape_cast %16 : vector<1x16x128xbf16> to vector<16x128xbf16>
    %18 = vector.shape_cast %15 : vector<16x128xbf16> to vector<1x16x128xbf16>
    tpu.vector_store %arg10[%c1_12, %c0_13, %c0_14], %18 {strides = array<i32>} : memref<8x16x128xbf16, #tpu.memory_space<vmem>>, vector<1x16x128xbf16>,
    %c2 = arith.constant 2 : index
    %c0_15 = arith.constant 0 : index
    %c0_16 = arith.constant 0 : index
    %19 = vector.load %arg1[%c2, %c0_15, %c0_16] : memref<8x256x128xbf16, #tpu.memory_space<vmem>>, vector<1x256x128xbf16>
    %20 = vector.shape_cast %19 : vector<1x256x128xbf16> to vector<256x128xbf16>
    %cst_17 = arith.constant dense<0.000000e+00> : vector<16x128xf32>
    %21 = tpu.matmul %0, %20, %cst_17 {dimension_numbers = #tpu.dot_dimension_numbers<[1], [0], [0], [1], [0, 0, 1, 1], [], []>} : vector<16x256xbf16>, vector<256x128xbf16>, vector<16x128xf32> -> vector<16x128xf32>
    %cst_18 = arith.constant 0.000000e+00 : f32
    %22 = vector.broadcast %cst_18 : f32 to vector<16x128xf32>
    %23 = arith.maximumf %21, %22 : vector<16x128xf32>
    %24 = arith.truncf %23 : vector<16x128xf32> to vector<16x128xbf16>
    %c2_19 = arith.constant 2 : index
    %c0_20 = arith.constant 0 : index
    %c0_21 = arith.constant 0 : index
    %25 = vector.load %arg10[%c2_19, %c0_20, %c0_21] : memref<8x16x128xbf16, #tpu.memory_space<vmem>>, vector<1x16x128xbf16>
    %26 = vector.shape_cast %25 : vector<1x16x128xbf16> to vector<16x128xbf16>
    %27 = vector.shape_cast %24 : vector<16x128xbf16> to vector<1x16x128xbf16>
    tpu.vector_store %arg10[%c2_19, %c0_20, %c0_21], %27 {strides = array<i32>} : memref<8x16x128xbf16, #tpu.memory_space<vmem>>, vector<1x16x128xbf16>,
    %c3 = arith.constant 3 : index
    %c0_22 = arith.constant 0 : index
    %c0_23 = arith.constant 0 : index
    %28 = vector.load %arg1[%c3, %c0_22, %c0_23] : memref<8x256x128xbf16, #tpu.memory_space<vmem>>, vector<1x256x128xbf16>
    %29 = vector.shape_cast %28 : vector<1x256x128xbf16> to vector<256x128xbf16>
    %cst_24 = arith.constant dense<0.000000e+00> : vector<16x128xf32>
    %30 = tpu.matmul %0, %29, %cst_24 {dimension_numbers = #tpu.dot_dimension_numbers<[1], [0], [0], [1], [0, 0, 1, 1], [], []>} : vector<16x256xbf16>, vector<256x128xbf16>, vector<16x128xf32> -> vector<16x128xf32>
    %cst_25 = arith.constant 0.000000e+00 : f32
    %31 = vector.broadcast %cst_25 : f32 to vector<16x128xf32>
    %32 = arith.maximumf %30, %31 : vector<16x128xf32>
    %33 = arith.truncf %32 : vector<16x128xf32> to vector<16x128xbf16>
    %c3_26 = arith.constant 3 : index
    %c0_27 = arith.constant 0 : index
    %c0_28 = arith.constant 0 : index
    %34 = vector.load %arg10[%c3_26, %c0_27, %c0_28] : memref<8x16x128xbf16, #tpu.memory_space<vmem>>, vector<1x16x128xbf16>
    %35 = vector.shape_cast %34 : vector<1x16x128xbf16> to vector<16x128xbf16>
    %36 = vector.shape_cast %33 : vector<16x128xbf16> to vector<1x16x128xbf16>
    tpu.vector_store %arg10[%c3_26, %c0_27, %c0_28], %36 {strides = array<i32>} : memref<8x16x128xbf16, #tpu.memory_space<vmem>>, vector<1x16x128xbf16>,
    %c4 = arith.constant 4 : index
    %c0_29 = arith.constant 0 : index
    %c0_30 = arith.constant 0 : index
    %37 = vector.load %arg1[%c4, %c0_29, %c0_30] : memref<8x256x128xbf16, #tpu.memory_space<vmem>>, vector<1x256x128xbf16>
    %38 = vector.shape_cast %37 : vector<1x256x128xbf16> to vector<256x128xbf16>
    %cst_31 = arith.constant dense<0.000000e+00> : vector<16x128xf32>
    %39 = tpu.matmul %0, %38, %cst_31 {dimension_numbers = #tpu.dot_dimension_numbers<[1], [0], [0], [1], [0, 0, 1, 1], [], []>} : vector<16x256xbf16>, vector<256x128xbf16>, vector<16x128xf32> -> vector<16x128xf32>
    %cst_32 = arith.constant 0.000000e+00 : f32
    %40 = vector.broadcast %cst_32 : f32 to vector<16x128xf32>
    %41 = arith.maximumf %39, %40 : vector<16x128xf32>
    %42 = arith.truncf %41 : vector<16x128xf32> to vector<16x128xbf16>
    %c4_33 = arith.constant 4 : index
    %c0_34 = arith.constant 0 : index
    %c0_35 = arith.constant 0 : index
    %43 = vector.load %arg10[%c4_33, %c0_34, %c0_35] : memref<8x16x128xbf16, #tpu.memory_space<vmem>>, vector<1x16x128xbf16>
    %44 = vector.shape_cast %43 : vector<1x16x128xbf16> to vector<16x128xbf16>
    %45 = vector.shape_cast %42 : vector<16x128xbf16> to vector<1x16x128xbf16>
    tpu.vector_store %arg10[%c4_33, %c0_34, %c0_35], %45 {strides = array<i32>} : memref<8x16x128xbf16, #tpu.memory_space<vmem>>, vector<1x16x128xbf16>,
    %c5 = arith.constant 5 : index
    %c0_36 = arith.constant 0 : index
    %c0_37 = arith.constant 0 : index
    %46 = vector.load %arg1[%c5, %c0_36, %c0_37] : memref<8x256x128xbf16, #tpu.memory_space<vmem>>, vector<1x256x128xbf16>
    %47 = vector.shape_cast %46 : vector<1x256x128xbf16> to vector<256x128xbf16>
    %cst_38 = arith.constant dense<0.000000e+00> : vector<16x128xf32>
    %48 = tpu.matmul %0, %47, %cst_38 {dimension_numbers = #tpu.dot_dimension_numbers<[1], [0], [0], [1], [0, 0, 1, 1], [], []>} : vector<16x256xbf16>, vector<256x128xbf16>, vector<16x128xf32> -> vector<16x128xf32>
    %cst_39 = arith.constant 0.000000e+00 : f32
    %49 = vector.broadcast %cst_39 : f32 to vector<16x128xf32>
    %50 = arith.maximumf %48, %49 : vector<16x128xf32>
    %51 = arith.truncf %50 : vector<16x128xf32> to vector<16x128xbf16>
    %c5_40 = arith.constant 5 : index
    %c0_41 = arith.constant 0 : index
    %c0_42 = arith.constant 0 : index
    %52 = vector.load %arg10[%c5_40, %c0_41, %c0_42] : memref<8x16x128xbf16, #tpu.memory_space<vmem>>, vector<1x16x128xbf16>
    %53 = vector.shape_cast %52 : vector<1x16x128xbf16> to vector<16x128xbf16>
    %54 = vector.shape_cast %51 : vector<16x128xbf16> to vector<1x16x128xbf16>
    tpu.vector_store %arg10[%c5_40, %c0_41, %c0_42], %54 {strides = array<i32>} : memref<8x16x128xbf16, #tpu.memory_space<vmem>>, vector<1x16x128xbf16>,
    %c6 = arith.constant 6 : index
    %c0_43 = arith.constant 0 : index
    %c0_44 = arith.constant 0 : index
    %55 = vector.load %arg1[%c6, %c0_43, %c0_44] : memref<8x256x128xbf16, #tpu.memory_space<vmem>>, vector<1x256x128xbf16>
    %56 = vector.shape_cast %55 : vector<1x256x128xbf16> to vector<256x128xbf16>
    %cst_45 = arith.constant dense<0.000000e+00> : vector<16x128xf32>
    %57 = tpu.matmul %0, %56, %cst_45 {dimension_numbers = #tpu.dot_dimension_numbers<[1], [0], [0], [1], [0, 0, 1, 1], [], []>} : vector<16x256xbf16>, vector<256x128xbf16>, vector<16x128xf32> -> vector<16x128xf32>
    %cst_46 = arith.constant 0.000000e+00 : f32
    %58 = vector.broadcast %cst_46 : f32 to vector<16x128xf32>
    %59 = arith.maximumf %57, %58 : vector<16x128xf32>
    %60 = arith.truncf %59 : vector<16x128xf32> to vector<16x128xbf16>
    %c6_47 = arith.constant 6 : index
    %c0_48 = arith.constant 0 : index
    %c0_49 = arith.constant 0 : index
    %61 = vector.load %arg10[%c6_47, %c0_48, %c0_49] : memref<8x16x128xbf16, #tpu.memory_space<vmem>>, vector<1x16x128xbf16>
    %62 = vector.shape_cast %61 : vector<1x16x128xbf16> to vector<16x128xbf16>
    %63 = vector.shape_cast %60 : vector<16x128xbf16> to vector<1x16x128xbf16>
    tpu.vector_store %arg10[%c6_47, %c0_48, %c0_49], %63 {strides = array<i32>} : memref<8x16x128xbf16, #tpu.memory_space<vmem>>, vector<1x16x128xbf16>,
    %c7 = arith.constant 7 : index
    %c0_50 = arith.constant 0 : index
    %c0_51 = arith.constant 0 : index
    %64 = vector.load %arg1[%c7, %c0_50, %c0_51] : memref<8x256x128xbf16, #tpu.memory_space<vmem>>, vector<1x256x128xbf16>
    %65 = vector.shape_cast %64 : vector<1x256x128xbf16> to vector<256x128xbf16>
    %cst_52 = arith.constant dense<0.000000e+00> : vector<16x128xf32>
    %66 = tpu.matmul %0, %65, %cst_52 {dimension_numbers = #tpu.dot_dimension_numbers<[1], [0], [0], [1], [0, 0, 1, 1], [], []>} : vector<16x256xbf16>, vector<256x128xbf16>, vector<16x128xf32> -> vector<16x128xf32>
    %cst_53 = arith.constant 0.000000e+00 : f32
    %67 = vector.broadcast %cst_53 : f32 to vector<16x128xf32>
    %68 = arith.maximumf %66, %67 : vector<16x128xf32>
    %69 = arith.truncf %68 : vector<16x128xf32> to vector<16x128xbf16>
    %c7_54 = arith.constant 7 : index
    %c0_55 = arith.constant 0 : index
    %c0_56 = arith.constant 0 : index
    %70 = vector.load %arg10[%c7_54, %c0_55, %c0_56] : memref<8x16x128xbf16, #tpu.memory_space<vmem>>, vector<1x16x128xbf16>
    %71 = vector.shape_cast %70 : vector<1x16x128xbf16> to vector<16x128xbf16>
    %72 = vector.shape_cast %69 : vector<16x128xbf16> to vector<1x16x128xbf16>
    tpu.vector_store %arg10[%c7_54, %c0_55, %c0_56], %72 {strides = array<i32>} : memref<8x16x128xbf16, #tpu.memory_space<vmem>>, vector<1x16x128xbf16>,
    %cst_57 = arith.constant 0.000000e+00 : f32
    %73 = vector.broadcast %cst_57 : f32 to vector<8x128xf32>
    %c0_58 = arith.constant 0 : index
    %c0_59 = arith.constant 0 : index
    %c0_60 = arith.constant 0 : index
    %74 = vector.load %arg10[%c0_58, %c0_59, %c0_60] : memref<8x16x128xbf16, #tpu.memory_space<vmem>>, vector<8x1x128xbf16>
    %75 = vector.shape_cast %74 : vector<8x1x128xbf16> to vector<8x128xbf16>
    %c0_61 = arith.constant 0 : index
    %c0_62 = arith.constant 0 : index
    %c0_63 = arith.constant 0 : index
    %76 = vector.load %arg3[%c0_61, %c0_62, %c0_63] : memref<16x128x128xbf16, #tpu.memory_space<vmem>>, vector<1x128x128xbf16>
    %77 = vector.shape_cast %76 : vector<1x128x128xbf16> to vector<128x128xbf16>
    %cst_64 = arith.constant dense<0.000000e+00> : vector<8x128xf32>
    %78 = tpu.matmul %75, %77, %cst_64 {dimension_numbers = #tpu.dot_dimension_numbers<[1], [0], [0], [1], [0, 0, 1, 1], [], []>} : vector<8x128xbf16>, vector<128x128xbf16>, vector<8x128xf32> -> vector<8x128xf32>
    %79 = arith.addf %73, %78 : vector<8x128xf32>
    %c0_65 = arith.constant 0 : index
    %c1_66 = arith.constant 1 : index
    %c0_67 = arith.constant 0 : index
    %80 = vector.load %arg10[%c0_65, %c1_66, %c0_67] : memref<8x16x128xbf16, #tpu.memory_space<vmem>>, vector<8x1x128xbf16>
    %81 = vector.shape_cast %80 : vector<8x1x128xbf16> to vector<8x128xbf16>
    %c1_68 = arith.constant 1 : index
    %c0_69 = arith.constant 0 : index
    %c0_70 = arith.constant 0 : index
    %82 = vector.load %arg3[%c1_68, %c0_69, %c0_70] : memref<16x128x128xbf16, #tpu.memory_space<vmem>>, vector<1x128x128xbf16>
    %83 = vector.shape_cast %82 : vector<1x128x128xbf16> to vector<128x128xbf16>
    %cst_71 = arith.constant dense<0.000000e+00> : vector<8x128xf32>
    %84 = tpu.matmul %81, %83, %cst_71 {dimension_numbers = #tpu.dot_dimension_numbers<[1], [0], [0], [1], [0, 0, 1, 1], [], []>} : vector<8x128xbf16>, vector<128x128xbf16>, vector<8x128xf32> -> vector<8x128xf32>
    %85 = arith.addf %79, %84 : vector<8x128xf32>
    %c0_72 = arith.constant 0 : index
    %c2_73 = arith.constant 2 : index
    %c0_74 = arith.constant 0 : index
    %86 = vector.load %arg10[%c0_72, %c2_73, %c0_74] : memref<8x16x128xbf16, #tpu.memory_space<vmem>>, vector<8x1x128xbf16>
    %87 = vector.shape_cast %86 : vector<8x1x128xbf16> to vector<8x128xbf16>
    %c2_75 = arith.constant 2 : index
    %c0_76 = arith.constant 0 : index
    %c0_77 = arith.constant 0 : index
    %88 = vector.load %arg3[%c2_75, %c0_76, %c0_77] : memref<16x128x128xbf16, #tpu.memory_space<vmem>>, vector<1x128x128xbf16>
    %89 = vector.shape_cast %88 : vector<1x128x128xbf16> to vector<128x128xbf16>
    %cst_78 = arith.constant dense<0.000000e+00> : vector<8x128xf32>
    %90 = tpu.matmul %87, %89, %cst_78 {dimension_numbers = #tpu.dot_dimension_numbers<[1], [0], [0], [1], [0, 0, 1, 1], [], []>} : vector<8x128xbf16>, vector<128x128xbf16>, vector<8x128xf32> -> vector<8x128xf32>
    %91 = arith.addf %85, %90 : vector<8x128xf32>
    %c0_79 = arith.constant 0 : index
    %c3_80 = arith.constant 3 : index
    %c0_81 = arith.constant 0 : index
    %92 = vector.load %arg10[%c0_79, %c3_80, %c0_81] : memref<8x16x128xbf16, #tpu.memory_space<vmem>>, vector<8x1x128xbf16>
    %93 = vector.shape_cast %92 : vector<8x1x128xbf16> to vector<8x128xbf16>
    %c3_82 = arith.constant 3 : index
    %c0_83 = arith.constant 0 : index
    %c0_84 = arith.constant 0 : index
    %94 = vector.load %arg3[%c3_82, %c0_83, %c0_84] : memref<16x128x128xbf16, #tpu.memory_space<vmem>>, vector<1x128x128xbf16>
    %95 = vector.shape_cast %94 : vector<1x128x128xbf16> to vector<128x128xbf16>
    %cst_85 = arith.constant dense<0.000000e+00> : vector<8x128xf32>
    %96 = tpu.matmul %93, %95, %cst_85 {dimension_numbers = #tpu.dot_dimension_numbers<[1], [0], [0], [1], [0, 0, 1, 1], [], []>} : vector<8x128xbf16>, vector<128x128xbf16>, vector<8x128xf32> -> vector<8x128xf32>
    %97 = arith.addf %91, %96 : vector<8x128xf32>
    %c0_86 = arith.constant 0 : index
    %c4_87 = arith.constant 4 : index
    %c0_88 = arith.constant 0 : index
    %98 = vector.load %arg10[%c0_86, %c4_87, %c0_88] : memref<8x16x128xbf16, #tpu.memory_space<vmem>>, vector<8x1x128xbf16>
    %99 = vector.shape_cast %98 : vector<8x1x128xbf16> to vector<8x128xbf16>
    %c4_89 = arith.constant 4 : index
    %c0_90 = arith.constant 0 : index
    %c0_91 = arith.constant 0 : index
    %100 = vector.load %arg3[%c4_89, %c0_90, %c0_91] : memref<16x128x128xbf16, #tpu.memory_space<vmem>>, vector<1x128x128xbf16>
    %101 = vector.shape_cast %100 : vector<1x128x128xbf16> to vector<128x128xbf16>
    %cst_92 = arith.constant dense<0.000000e+00> : vector<8x128xf32>
    %102 = tpu.matmul %99, %101, %cst_92 {dimension_numbers = #tpu.dot_dimension_numbers<[1], [0], [0], [1], [0, 0, 1, 1], [], []>} : vector<8x128xbf16>, vector<128x128xbf16>, vector<8x128xf32> -> vector<8x128xf32>
    %103 = arith.addf %97, %102 : vector<8x128xf32>
    %c0_93 = arith.constant 0 : index
    %c5_94 = arith.constant 5 : index
    %c0_95 = arith.constant 0 : index
    %104 = vector.load %arg10[%c0_93, %c5_94, %c0_95] : memref<8x16x128xbf16, #tpu.memory_space<vmem>>, vector<8x1x128xbf16>
    %105 = vector.shape_cast %104 : vector<8x1x128xbf16> to vector<8x128xbf16>
    %c5_96 = arith.constant 5 : index
    %c0_97 = arith.constant 0 : index
    %c0_98 = arith.constant 0 : index
    %106 = vector.load %arg3[%c5_96, %c0_97, %c0_98] : memref<16x128x128xbf16, #tpu.memory_space<vmem>>, vector<1x128x128xbf16>
    %107 = vector.shape_cast %106 : vector<1x128x128xbf16> to vector<128x128xbf16>
    %cst_99 = arith.constant dense<0.000000e+00> : vector<8x128xf32>
    %108 = tpu.matmul %105, %107, %cst_99 {dimension_numbers = #tpu.dot_dimension_numbers<[1], [0], [0], [1], [0, 0, 1, 1], [], []>} : vector<8x128xbf16>, vector<128x128xbf16>, vector<8x128xf32> -> vector<8x128xf32>
    %109 = arith.addf %103, %108 : vector<8x128xf32>
    %c0_100 = arith.constant 0 : index
    %c6_101 = arith.constant 6 : index
    %c0_102 = arith.constant 0 : index
    %110 = vector.load %arg10[%c0_100, %c6_101, %c0_102] : memref<8x16x128xbf16, #tpu.memory_space<vmem>>, vector<8x1x128xbf16>
    %111 = vector.shape_cast %110 : vector<8x1x128xbf16> to vector<8x128xbf16>
    %c6_103 = arith.constant 6 : index
    %c0_104 = arith.constant 0 : index
    %c0_105 = arith.constant 0 : index
    %112 = vector.load %arg3[%c6_103, %c0_104, %c0_105] : memref<16x128x128xbf16, #tpu.memory_space<vmem>>, vector<1x128x128xbf16>
    %113 = vector.shape_cast %112 : vector<1x128x128xbf16> to vector<128x128xbf16>
    %cst_106 = arith.constant dense<0.000000e+00> : vector<8x128xf32>
    %114 = tpu.matmul %111, %113, %cst_106 {dimension_numbers = #tpu.dot_dimension_numbers<[1], [0], [0], [1], [0, 0, 1, 1], [], []>} : vector<8x128xbf16>, vector<128x128xbf16>, vector<8x128xf32> -> vector<8x128xf32>
    %115 = arith.addf %109, %114 : vector<8x128xf32>
    %c0_107 = arith.constant 0 : index
    %c7_108 = arith.constant 7 : index
    %c0_109 = arith.constant 0 : index
    %116 = vector.load %arg10[%c0_107, %c7_108, %c0_109] : memref<8x16x128xbf16, #tpu.memory_space<vmem>>, vector<8x1x128xbf16>
    %117 = vector.shape_cast %116 : vector<8x1x128xbf16> to vector<8x128xbf16>
    %c7_110 = arith.constant 7 : index
    %c0_111 = arith.constant 0 : index
    %c0_112 = arith.constant 0 : index
    %118 = vector.load %arg3[%c7_110, %c0_111, %c0_112] : memref<16x128x128xbf16, #tpu.memory_space<vmem>>, vector<1x128x128xbf16>
    %119 = vector.shape_cast %118 : vector<1x128x128xbf16> to vector<128x128xbf16>
    %cst_113 = arith.constant dense<0.000000e+00> : vector<8x128xf32>
    %120 = tpu.matmul %117, %119, %cst_113 {dimension_numbers = #tpu.dot_dimension_numbers<[1], [0], [0], [1], [0, 0, 1, 1], [], []>} : vector<8x128xbf16>, vector<128x128xbf16>, vector<8x128xf32> -> vector<8x128xf32>
    %121 = arith.addf %115, %120 : vector<8x128xf32>
    %c0_114 = arith.constant 0 : index
    %c8 = arith.constant 8 : index
    %c0_115 = arith.constant 0 : index
    %122 = vector.load %arg10[%c0_114, %c8, %c0_115] : memref<8x16x128xbf16, #tpu.memory_space<vmem>>, vector<8x1x128xbf16>
    %123 = vector.shape_cast %122 : vector<8x1x128xbf16> to vector<8x128xbf16>
    %c8_116 = arith.constant 8 : index
    %c0_117 = arith.constant 0 : index
    %c0_118 = arith.constant 0 : index
    %124 = vector.load %arg3[%c8_116, %c0_117, %c0_118] : memref<16x128x128xbf16, #tpu.memory_space<vmem>>, vector<1x128x128xbf16>
    %125 = vector.shape_cast %124 : vector<1x128x128xbf16> to vector<128x128xbf16>
    %cst_119 = arith.constant dense<0.000000e+00> : vector<8x128xf32>
    %126 = tpu.matmul %123, %125, %cst_119 {dimension_numbers = #tpu.dot_dimension_numbers<[1], [0], [0], [1], [0, 0, 1, 1], [], []>} : vector<8x128xbf16>, vector<128x128xbf16>, vector<8x128xf32> -> vector<8x128xf32>
    %127 = arith.addf %121, %126 : vector<8x128xf32>
    %c0_120 = arith.constant 0 : index
    %c9 = arith.constant 9 : index
    %c0_121 = arith.constant 0 : index
    %128 = vector.load %arg10[%c0_120, %c9, %c0_121] : memref<8x16x128xbf16, #tpu.memory_space<vmem>>, vector<8x1x128xbf16>
    %129 = vector.shape_cast %128 : vector<8x1x128xbf16> to vector<8x128xbf16>
    %c9_122 = arith.constant 9 : index
    %c0_123 = arith.constant 0 : index
    %c0_124 = arith.constant 0 : index
    %130 = vector.load %arg3[%c9_122, %c0_123, %c0_124] : memref<16x128x128xbf16, #tpu.memory_space<vmem>>, vector<1x128x128xbf16>
    %131 = vector.shape_cast %130 : vector<1x128x128xbf16> to vector<128x128xbf16>
    %cst_125 = arith.constant dense<0.000000e+00> : vector<8x128xf32>
    %132 = tpu.matmul %129, %131, %cst_125 {dimension_numbers = #tpu.dot_dimension_numbers<[1], [0], [0], [1], [0, 0, 1, 1], [], []>} : vector<8x128xbf16>, vector<128x128xbf16>, vector<8x128xf32> -> vector<8x128xf32>
    %133 = arith.addf %127, %132 : vector<8x128xf32>
    %c0_126 = arith.constant 0 : index
    %c10 = arith.constant 10 : index
    %c0_127 = arith.constant 0 : index
    %134 = vector.load %arg10[%c0_126, %c10, %c0_127] : memref<8x16x128xbf16, #tpu.memory_space<vmem>>, vector<8x1x128xbf16>
    %135 = vector.shape_cast %134 : vector<8x1x128xbf16> to vector<8x128xbf16>
    %c10_128 = arith.constant 10 : index
    %c0_129 = arith.constant 0 : index
    %c0_130 = arith.constant 0 : index
    %136 = vector.load %arg3[%c10_128, %c0_129, %c0_130] : memref<16x128x128xbf16, #tpu.memory_space<vmem>>, vector<1x128x128xbf16>
    %137 = vector.shape_cast %136 : vector<1x128x128xbf16> to vector<128x128xbf16>
    %cst_131 = arith.constant dense<0.000000e+00> : vector<8x128xf32>
    %138 = tpu.matmul %135, %137, %cst_131 {dimension_numbers = #tpu.dot_dimension_numbers<[1], [0], [0], [1], [0, 0, 1, 1], [], []>} : vector<8x128xbf16>, vector<128x128xbf16>, vector<8x128xf32> -> vector<8x128xf32>
    %139 = arith.addf %133, %138 : vector<8x128xf32>
    %c0_132 = arith.constant 0 : index
    %c11 = arith.constant 11 : index
    %c0_133 = arith.constant 0 : index
    %140 = vector.load %arg10[%c0_132, %c11, %c0_133] : memref<8x16x128xbf16, #tpu.memory_space<vmem>>, vector<8x1x128xbf16>
    %141 = vector.shape_cast %140 : vector<8x1x128xbf16> to vector<8x128xbf16>
    %c11_134 = arith.constant 11 : index
    %c0_135 = arith.constant 0 : index
    %c0_136 = arith.constant 0 : index
    %142 = vector.load %arg3[%c11_134, %c0_135, %c0_136] : memref<16x128x128xbf16, #tpu.memory_space<vmem>>, vector<1x128x128xbf16>
    %143 = vector.shape_cast %142 : vector<1x128x128xbf16> to vector<128x128xbf16>
    %cst_137 = arith.constant dense<0.000000e+00> : vector<8x128xf32>
    %144 = tpu.matmul %141, %143, %cst_137 {dimension_numbers = #tpu.dot_dimension_numbers<[1], [0], [0], [1], [0, 0, 1, 1], [], []>} : vector<8x128xbf16>, vector<128x128xbf16>, vector<8x128xf32> -> vector<8x128xf32>
    %145 = arith.addf %139, %144 : vector<8x128xf32>
    %c0_138 = arith.constant 0 : index
    %c12 = arith.constant 12 : index
    %c0_139 = arith.constant 0 : index
    %146 = vector.load %arg10[%c0_138, %c12, %c0_139] : memref<8x16x128xbf16, #tpu.memory_space<vmem>>, vector<8x1x128xbf16>
    %147 = vector.shape_cast %146 : vector<8x1x128xbf16> to vector<8x128xbf16>
    %c12_140 = arith.constant 12 : index
    %c0_141 = arith.constant 0 : index
    %c0_142 = arith.constant 0 : index
    %148 = vector.load %arg3[%c12_140, %c0_141, %c0_142] : memref<16x128x128xbf16, #tpu.memory_space<vmem>>, vector<1x128x128xbf16>
    %149 = vector.shape_cast %148 : vector<1x128x128xbf16> to vector<128x128xbf16>
    %cst_143 = arith.constant dense<0.000000e+00> : vector<8x128xf32>
    %150 = tpu.matmul %147, %149, %cst_143 {dimension_numbers = #tpu.dot_dimension_numbers<[1], [0], [0], [1], [0, 0, 1, 1], [], []>} : vector<8x128xbf16>, vector<128x128xbf16>, vector<8x128xf32> -> vector<8x128xf32>
    %151 = arith.addf %145, %150 : vector<8x128xf32>
    %c0_144 = arith.constant 0 : index
    %c13 = arith.constant 13 : index
    %c0_145 = arith.constant 0 : index
    %152 = vector.load %arg10[%c0_144, %c13, %c0_145] : memref<8x16x128xbf16, #tpu.memory_space<vmem>>, vector<8x1x128xbf16>
    %153 = vector.shape_cast %152 : vector<8x1x128xbf16> to vector<8x128xbf16>
    %c13_146 = arith.constant 13 : index
    %c0_147 = arith.constant 0 : index
    %c0_148 = arith.constant 0 : index
    %154 = vector.load %arg3[%c13_146, %c0_147, %c0_148] : memref<16x128x128xbf16, #tpu.memory_space<vmem>>, vector<1x128x128xbf16>
    %155 = vector.shape_cast %154 : vector<1x128x128xbf16> to vector<128x128xbf16>
    %cst_149 = arith.constant dense<0.000000e+00> : vector<8x128xf32>
    %156 = tpu.matmul %153, %155, %cst_149 {dimension_numbers = #tpu.dot_dimension_numbers<[1], [0], [0], [1], [0, 0, 1, 1], [], []>} : vector<8x128xbf16>, vector<128x128xbf16>, vector<8x128xf32> -> vector<8x128xf32>
    %157 = arith.addf %151, %156 : vector<8x128xf32>
    %c0_150 = arith.constant 0 : index
    %c14 = arith.constant 14 : index
    %c0_151 = arith.constant 0 : index
    %158 = vector.load %arg10[%c0_150, %c14, %c0_151] : memref<8x16x128xbf16, #tpu.memory_space<vmem>>, vector<8x1x128xbf16>
    %159 = vector.shape_cast %158 : vector<8x1x128xbf16> to vector<8x128xbf16>
    %c14_152 = arith.constant 14 : index
    %c0_153 = arith.constant 0 : index
    %c0_154 = arith.constant 0 : index
    %160 = vector.load %arg3[%c14_152, %c0_153, %c0_154] : memref<16x128x128xbf16, #tpu.memory_space<vmem>>, vector<1x128x128xbf16>
    %161 = vector.shape_cast %160 : vector<1x128x128xbf16> to vector<128x128xbf16>
    %cst_155 = arith.constant dense<0.000000e+00> : vector<8x128xf32>
    %162 = tpu.matmul %159, %161, %cst_155 {dimension_numbers = #tpu.dot_dimension_numbers<[1], [0], [0], [1], [0, 0, 1, 1], [], []>} : vector<8x128xbf16>, vector<128x128xbf16>, vector<8x128xf32> -> vector<8x128xf32>
    %163 = arith.addf %157, %162 : vector<8x128xf32>
    %c0_156 = arith.constant 0 : index
    %c15 = arith.constant 15 : index
    %c0_157 = arith.constant 0 : index
    %164 = vector.load %arg10[%c0_156, %c15, %c0_157] : memref<8x16x128xbf16, #tpu.memory_space<vmem>>, vector<8x1x128xbf16>
    %165 = vector.shape_cast %164 : vector<8x1x128xbf16> to vector<8x128xbf16>
    %c15_158 = arith.constant 15 : index
    %c0_159 = arith.constant 0 : index
    %c0_160 = arith.constant 0 : index
    %166 = vector.load %arg3[%c15_158, %c0_159, %c0_160] : memref<16x128x128xbf16, #tpu.memory_space<vmem>>, vector<1x128x128xbf16>
    %167 = vector.shape_cast %166 : vector<1x128x128xbf16> to vector<128x128xbf16>
    %cst_161 = arith.constant dense<0.000000e+00> : vector<8x128xf32>
    %168 = tpu.matmul %165, %167, %cst_161 {dimension_numbers = #tpu.dot_dimension_numbers<[1], [0], [0], [1], [0, 0, 1, 1], [], []>} : vector<8x128xbf16>, vector<128x128xbf16>, vector<8x128xf32> -> vector<8x128xf32>
    %169 = arith.addf %163, %168 : vector<8x128xf32>
    %c0_162 = arith.constant 0 : index
    %c0_163 = arith.constant 0 : index
    %170 = vector.load %arg4[%c0_162, %c0_163] : memref<1x128xf32, #tpu.memory_space<vmem>>, vector<1x128xf32>
    %171 = vector.broadcast %170 : vector<1x128xf32> to vector<8x128xf32>
    %172 = arith.addf %169, %171 : vector<8x128xf32>
    %cst_164 = arith.constant 0.000000e+00 : f32
    %173 = vector.broadcast %cst_164 : f32 to vector<8x128xf32>
    %174 = arith.maximumf %172, %173 : vector<8x128xf32>
    %175 = arith.truncf %174 : vector<8x128xf32> to vector<8x128xbf16>
    %c0_165 = arith.constant 0 : index
    %c0_166 = arith.constant 0 : index
    %176 = vector.load %arg5[%c0_165, %c0_166] : memref<128x128xbf16, #tpu.memory_space<vmem>>, vector<128x128xbf16>
    %cst_167 = arith.constant dense<0.000000e+00> : vector<8x128xf32>
    %177 = tpu.matmul %175, %176, %cst_167 {dimension_numbers = #tpu.dot_dimension_numbers<[1], [0], [0], [1], [0, 0, 1, 1], [], []>} : vector<8x128xbf16>, vector<128x128xbf16>, vector<8x128xf32> -> vector<8x128xf32>
    %c0_168 = arith.constant 0 : index
    %c0_169 = arith.constant 0 : index
    %178 = vector.load %arg6[%c0_168, %c0_169] : memref<1x128xf32, #tpu.memory_space<vmem>>, vector<1x128xf32>
    %179 = vector.broadcast %178 : vector<1x128xf32> to vector<8x128xf32>
    %180 = arith.addf %177, %179 : vector<8x128xf32>
    %cst_170 = arith.constant 0.000000e+00 : f32
    %181 = vector.broadcast %cst_170 : f32 to vector<8x128xf32>
    %182 = arith.maximumf %180, %181 : vector<8x128xf32>
    %183 = arith.truncf %182 : vector<8x128xf32> to vector<8x128xbf16>
    %c0_171 = arith.constant 0 : index
    %c0_172 = arith.constant 0 : index
    %184 = vector.load %arg7[%c0_171, %c0_172] : memref<128x128xbf16, #tpu.memory_space<vmem>>, vector<128x128xbf16>
    %cst_173 = arith.constant dense<0.000000e+00> : vector<8x128xf32>
    %185 = tpu.matmul %183, %184, %cst_173 {dimension_numbers = #tpu.dot_dimension_numbers<[1], [0], [0], [1], [0, 0, 1, 1], [], []>} : vector<8x128xbf16>, vector<128x128xbf16>, vector<8x128xf32> -> vector<8x128xf32>
    %c0_174 = arith.constant 0 : index
    %c0_175 = arith.constant 0 : index
    %186 = vector.load %arg8[%c0_174, %c0_175] : memref<1x128xf32, #tpu.memory_space<vmem>>, vector<1x128xf32>
    %187 = vector.broadcast %186 : vector<1x128xf32> to vector<8x128xf32>
    %188 = arith.addf %185, %187 : vector<8x128xf32>
    %cst_176 = arith.constant dense<0xFF800000> : vector<8xf32>
    %189 = vector.multi_reduction <maximumf>, %188, %cst_176 [1] : vector<8x128xf32> to vector<8xf32>
    %190 = vector.shape_cast %189 : vector<8xf32> to vector<8x1xf32>
    %191 = vector.broadcast %190 : vector<8x1xf32> to vector<8x128xf32>
    %192 = arith.subf %188, %191 : vector<8x128xf32>
    %193 = math.exp %192 : vector<8x128xf32>
    %cst_177 = arith.constant dense<0.000000e+00> : vector<8xf32>
    %194 = vector.multi_reduction <add>, %193, %cst_177 [1] : vector<8x128xf32> to vector<8xf32>
    %195 = vector.shape_cast %194 : vector<8xf32> to vector<8x1xf32>
    %196 = math.log %195 : vector<8x1xf32>
    %197 = vector.broadcast %196 : vector<8x1xf32> to vector<8x128xf32>
    %198 = arith.subf %192, %197 : vector<8x128xf32>
    %c0_178 = arith.constant 0 : index
    %c0_179 = arith.constant 0 : index
    %199 = vector.load %arg9[%c0_178, %c0_179] : memref<8x128xf32, #tpu.memory_space<vmem>>, vector<8x128xf32>
    tpu.vector_store %arg9[%c0_178, %c0_179], %198 {strides = array<i32>} : memref<8x128xf32, #tpu.memory_space<vmem>>, vector<8x128xf32>,
    return
  }
  func.func @transform_0(%arg0: i32) -> (i32, i32, i32) {
    %c0_i32 = arith.constant 0 : i32
    %c0_i32_0 = arith.constant 0 : i32
    %c0_i32_1 = arith.constant 0 : i32
    return %arg0, %c0_i32, %c0_i32_0 : i32, i32, i32
  }
  func.func @transform_1(%arg0: i32) -> (i32, i32) {
    %c0_i32 = arith.constant 0 : i32
    %c0_i32_0 = arith.constant 0 : i32
    %c0_i32_1 = arith.constant 0 : i32
    return %c0_i32, %c0_i32_0 : i32, i32
  }
  func.func @transform_2(%arg0: i32) -> (i32, i32, i32) {
    %c0_i32 = arith.constant 0 : i32
    %c0_i32_0 = arith.constant 0 : i32
    %c0_i32_1 = arith.constant 0 : i32
    %c0_i32_2 = arith.constant 0 : i32
    return %c0_i32, %c0_i32_0, %c0_i32_1 : i32, i32, i32
  }
  func.func @transform_3(%arg0: i32) -> (i32, i32) {
    %c0_i32 = arith.constant 0 : i32
    %c0_i32_0 = arith.constant 0 : i32
    %c0_i32_1 = arith.constant 0 : i32
    return %c0_i32, %c0_i32_0 : i32, i32
  }
  func.func @transform_4(%arg0: i32) -> (i32, i32) {
    %c0_i32 = arith.constant 0 : i32
    %c0_i32_0 = arith.constant 0 : i32
    %c0_i32_1 = arith.constant 0 : i32
    return %c0_i32, %c0_i32_0 : i32, i32
  }
  func.func @transform_5(%arg0: i32) -> (i32, i32) {
    %c0_i32 = arith.constant 0 : i32
    %c0_i32_0 = arith.constant 0 : i32
    %c0_i32_1 = arith.constant 0 : i32
    return %c0_i32, %c0_i32_0 : i32, i32
  }
  func.func @transform_6(%arg0: i32) -> (i32, i32) {
    %c0_i32 = arith.constant 0 : i32
    %c0_i32_0 = arith.constant 0 : i32
    %c0_i32_1 = arith.constant 0 : i32
    return %c0_i32, %c0_i32_0 : i32, i32
  }
  func.func @transform_7(%arg0: i32) -> (i32, i32) {
    %c0_i32 = arith.constant 0 : i32
    %c0_i32_0 = arith.constant 0 : i32
    %c0_i32_1 = arith.constant 0 : i32
    return %c0_i32, %c0_i32_0 : i32, i32
  }
  func.func @transform_8(%arg0: i32) -> (i32, i32) {
    %c0_i32 = arith.constant 0 : i32
    %c0_i32_0 = arith.constant 0 : i32
    return %arg0, %c0_i32 : i32, i32
  }
}

</mosaic_0001>

<llo_original>
// kernel: cnn4_forward.2
$region0: #{cnn4_forward.2}
  #allocation0 [shape = 'u32[]', space=smem, size = 0x4, offset = 0x4, fixed_abs, tag = 'smem constant byte address 0x4 - core index']
  #allocation1 [shape = 'u32[72,128]{1,0:T(1,128)}', space=vmem, size = 0x9000, scoped, tag = 'internal scratch']
  %s0 = inlined_call_operand.vmem [shape: bf16[4,128,512], index: 0, kind: input, shape index: {}]
  %s1 = inlined_call_operand.vmem [shape: bf16[8,128], index: 1, kind: input, shape index: {}]
  %s2 = inlined_call_operand.vmem [shape: f32[8,512], index: 2, kind: output, shape index: {}]
  %s3 = sld [smem:[#allocation0]]
  $region18: #{cnn4_forward.2} parent=0
    _
  %s5 = ssub.s32 1, %s3
  %s6 = scalar_select 0, %s5, %s3
  // Predicated region
  $region2: #{cnn4_forward.2} parent=0 // pred_check
    _
  $region3: #{cnn4_forward.2} parent=0 // pred_check_branch
    %8 = sbr.rel (0) target = $region5
  $region4: #{cnn4_forward.2} parent=0 // pred_region
    _
  $region5: #{cnn4_forward.2} parent=0 // pred_fallthru
    _
  // Predicated region
  $region6: #{cnn4_forward.2} parent=0 // pred_check
    _
  $region7: #{cnn4_forward.2} parent=0 // pred_check_branch
    %10 = sbr.rel (0) target = $region9
  $region8: #{cnn4_forward.2} parent=0 // pred_region
    _
  $region9: #{cnn4_forward.2} parent=0 // pred_fallthru
    _
  %v11 = vld [vmem:[%s1] sm:$0xf]
  %v12 = vld [vmem:[%s0] sm:$0xff]
  %v13 = vld [vmem:[%s0 + $0x8] sm:$0xff]
  %v14 = vld [vmem:[%s0 + $0x10] sm:$0xff]
  %v15 = vld [vmem:[%s0 + $0x18] sm:$0xff]
  %v16 = vld [vmem:[%s0 + $0x20] sm:$0xff]
  %v17 = vld [vmem:[%s0 + $0x28] sm:$0xff]
  %v18 = vld [vmem:[%s0 + $0x30] sm:$0xff]
  %v19 = vld [vmem:[%s0 + $0x38] sm:$0xff]
  %v20 = vld [vmem:[%s0 + $0x40] sm:$0xff]
  %v21 = vld [vmem:[%s0 + $0x48] sm:$0xff]
  %v22 = vld [vmem:[%s0 + $0x50] sm:$0xff]
  %v23 = vld [vmem:[%s0 + $0x58] sm:$0xff]
  %v24 = vld [vmem:[%s0 + $0x60] sm:$0xff]
  %v25 = vld [vmem:[%s0 + $0x68] sm:$0xff]
  %v26 = vld [vmem:[%s0 + $0x70] sm:$0xff]
  %v27 = vld [vmem:[%s0 + $0x78] sm:$0xff]
  %v28 = vld [vmem:[%s0 + $0x80] sm:$0xff]
  %v29 = vld [vmem:[%s0 + $0x88] sm:$0xff]
  %v30 = vld [vmem:[%s0 + $0x90] sm:$0xff]
  %v31 = vld [vmem:[%s0 + $0x98] sm:$0xff]
  %v32 = vld [vmem:[%s0 + $0xa0] sm:$0xff]
  %v33 = vld [vmem:[%s0 + $0xa8] sm:$0xff]
  %v34 = vld [vmem:[%s0 + $0xb0] sm:$0xff]
  %v35 = vld [vmem:[%s0 + $0xb8] sm:$0xff]
  %v36 = vld [vmem:[%s0 + $0xc0] sm:$0xff]
  %v37 = vld [vmem:[%s0 + $0xc8] sm:$0xff]
  %v38 = vld [vmem:[%s0 + $0xd0] sm:$0xff]
  %v39 = vld [vmem:[%s0 + $0xd8] sm:$0xff]
  %v40 = vld [vmem:[%s0 + $0xe0] sm:$0xff]
  %v41 = vld [vmem:[%s0 + $0xe8] sm:$0xff]
  %v42 = vld [vmem:[%s0 + $0xf0] sm:$0xff]
  %v43 = vld [vmem:[%s0 + $0xf8] sm:$0xff]
  %v76 = vunpack.c.l.b16 %v12
  %v77 = vunpack.c.h.b16 %v12
  %v78 = vunpack.c.l.b16 %v13
  %v79 = vunpack.c.h.b16 %v13
  %v80 = vunpack.c.l.b16 %v14
  %v81 = vunpack.c.h.b16 %v14
  %v82 = vunpack.c.l.b16 %v15
  %v83 = vunpack.c.h.b16 %v15
  %v84 = vunpack.c.l.b16 %v16
  %v85 = vunpack.c.h.b16 %v16
  %v86 = vunpack.c.l.b16 %v17
  %v87 = vunpack.c.h.b16 %v17
  %v88 = vunpack.c.l.b16 %v18
  %v89 = vunpack.c.h.b16 %v18
  %v90 = vunpack.c.l.b16 %v19
  %v91 = vunpack.c.h.b16 %v19
  %v92 = vunpack.c.l.b16 %v20
  %v93 = vunpack.c.h.b16 %v20
  %v94 = vunpack.c.l.b16 %v21
  %v95 = vunpack.c.h.b16 %v21
  %v96 = vunpack.c.l.b16 %v22
  %v97 = vunpack.c.h.b16 %v22
  %v98 = vunpack.c.l.b16 %v23
  %v99 = vunpack.c.h.b16 %v23
  %v100 = vunpack.c.l.b16 %v24
  %v101 = vunpack.c.h.b16 %v24
  %v102 = vunpack.c.l.b16 %v25
  %v103 = vunpack.c.h.b16 %v25
  %v104 = vunpack.c.l.b16 %v26
  %v105 = vunpack.c.h.b16 %v26
  %v106 = vunpack.c.l.b16 %v27
  %v107 = vunpack.c.h.b16 %v27
  %v108 = vunpack.c.l.b16 %v28
  %v109 = vunpack.c.h.b16 %v28
  %v110 = vunpack.c.l.b16 %v29
  %v111 = vunpack.c.h.b16 %v29
  %v112 = vunpack.c.l.b16 %v30
  %v113 = vunpack.c.h.b16 %v30
  %v114 = vunpack.c.l.b16 %v31
  %v115 = vunpack.c.h.b16 %v31
  %v116 = vunpack.c.l.b16 %v32
  %v117 = vunpack.c.h.b16 %v32
  %v118 = vunpack.c.l.b16 %v33
  %v119 = vunpack.c.h.b16 %v33
  %v120 = vunpack.c.l.b16 %v34
  %v121 = vunpack.c.h.b16 %v34
  %v122 = vunpack.c.l.b16 %v35
  %v123 = vunpack.c.h.b16 %v35
  %v124 = vunpack.c.l.b16 %v36
  %v125 = vunpack.c.h.b16 %v36
  %v126 = vunpack.c.l.b16 %v37
  %v127 = vunpack.c.h.b16 %v37
  %v128 = vunpack.c.l.b16 %v38
  %v129 = vunpack.c.h.b16 %v38
  %v130 = vunpack.c.l.b16 %v39
  %v131 = vunpack.c.h.b16 %v39
  %v132 = vunpack.c.l.b16 %v40
  %v133 = vunpack.c.h.b16 %v40
  %v134 = vunpack.c.l.b16 %v41
  %v135 = vunpack.c.h.b16 %v41
  %v136 = vunpack.c.l.b16 %v42
  %v137 = vunpack.c.h.b16 %v42
  %v138 = vunpack.c.l.b16 %v43
  %v139 = vunpack.c.h.b16 %v43
  %v140 = vpack.c.b16 %v80, %v76
  %v141 = vpack.c.b16 %v81, %v77
  %v142 = vpack.c.b16 %v82, %v78
  %v143 = vpack.c.b16 %v83, %v79
  %v144 = vpack.c.b16 %v88, %v84
  %v145 = vpack.c.b16 %v89, %v85
  %v146 = vpack.c.b16 %v90, %v86
  %v147 = vpack.c.b16 %v91, %v87
  %v148 = vpack.c.b16 %v96, %v92
  %v149 = vpack.c.b16 %v97, %v93
  %v150 = vpack.c.b16 %v98, %v94
  %v151 = vpack.c.b16 %v99, %v95
  %v152 = vpack.c.b16 %v104, %v100
  %v153 = vpack.c.b16 %v105, %v101
  %v154 = vpack.c.b16 %v106, %v102
  %v155 = vpack.c.b16 %v107, %v103
  %v156 = vpack.c.b16 %v112, %v108
  %v157 = vpack.c.b16 %v113, %v109
  %v158 = vpack.c.b16 %v114, %v110
  %v159 = vpack.c.b16 %v115, %v111
  %v160 = vpack.c.b16 %v120, %v116
  %v161 = vpack.c.b16 %v121, %v117
  %v162 = vpack.c.b16 %v122, %v118
  %v163 = vpack.c.b16 %v123, %v119
  %v164 = vpack.c.b16 %v128, %v124
  %v165 = vpack.c.b16 %v129, %v125
  %v166 = vpack.c.b16 %v130, %v126
  %v167 = vpack.c.b16 %v131, %v127
  %v168 = vpack.c.b16 %v136, %v132
  %v169 = vpack.c.b16 %v137, %v133
  %v170 = vpack.c.b16 %v138, %v134
  %v171 = vpack.c.b16 %v139, %v135
  %204 = vmatpush.bf16.msra.mxu0 %v168
  %205 = vmatpush.bf16.msra.mxu0 %v164
  %206 = vmatpush.bf16.msra.mxu0 %v160
  %207 = vmatpush.bf16.msra.mxu0 %v156
  %208 = vmatpush.bf16.msra.mxu0 %v152
  %209 = vmatpush.bf16.msra.mxu0 %v148
  %210 = vmatpush.bf16.msra.mxu0 %v144
  %211 = vmatpush.bf16.msra.mxu0 %v140
  %212 = vmatmul.bf16.gmra.mxu0 %v11
  %v213 = vpop.f32.mrf.mxu0
  %v214 = vadd.f32 0.0, %v213
  %v215 = vpop.f32.mrf.mxu0
  %216 = vdwg.mxu0
  %217 = vmatpush.bf16.msra.mxu0 %v169
  %218 = vmatpush.bf16.msra.mxu0 %v165
  %219 = vmatpush.bf16.msra.mxu0 %v161
  %220 = vmatpush.bf16.msra.mxu0 %v157
  %221 = vmatpush.bf16.msra.mxu0 %v153
  %222 = vmatpush.bf16.msra.mxu0 %v149
  %223 = vmatpush.bf16.msra.mxu0 %v145
  %224 = vmatpush.bf16.msra.mxu0 %v141
  %225 = vmatmul.bf16.gmra.mxu0 %v11
  %v226 = vpop.f32.mrf.mxu0
  %v227 = vadd.f32 0.0, %v226
  %v228 = vpop.f32.mrf.mxu0
  %229 = vdwg.mxu0
  %230 = vmatpush.bf16.msra.mxu0 %v170
  %231 = vmatpush.bf16.msra.mxu0 %v166
  %232 = vmatpush.bf16.msra.mxu0 %v162
  %233 = vmatpush.bf16.msra.mxu0 %v158
  %234 = vmatpush.bf16.msra.mxu0 %v154
  %235 = vmatpush.bf16.msra.mxu0 %v150
  %236 = vmatpush.bf16.msra.mxu0 %v146
  %237 = vmatpush.bf16.msra.mxu0 %v142
  %238 = vmatmul.bf16.gmra.mxu0 %v11
  %v239 = vpop.f32.mrf.mxu0
  %v240 = vadd.f32 0.0, %v239
  %v241 = vpop.f32.mrf.mxu0
  %242 = vdwg.mxu0
  %243 = vmatpush.bf16.msra.mxu0 %v171
  %244 = vmatpush.bf16.msra.mxu0 %v167
  %245 = vmatpush.bf16.msra.mxu0 %v163
  %246 = vmatpush.bf16.msra.mxu0 %v159
  %247 = vmatpush.bf16.msra.mxu0 %v155
  %248 = vmatpush.bf16.msra.mxu0 %v151
  %249 = vmatpush.bf16.msra.mxu0 %v147
  %250 = vmatpush.bf16.msra.mxu0 %v143
  %251 = vmatmul.bf16.gmra.mxu0 %v11
  %v252 = vpop.f32.mrf.mxu0
  %v253 = vadd.f32 0.0, %v252
  %v254 = vpop.f32.mrf.mxu0
  %255 = vdwg.mxu0
  %s256 = scalar_lea.vmem %s0, 256
  %v257 = vld [vmem:[%s256] sm:$0xff]
  %v258 = vld [vmem:[%s256 + $0x8] sm:$0xff]
  %v259 = vld [vmem:[%s256 + $0x10] sm:$0xff]
  %v260 = vld [vmem:[%s256 + $0x18] sm:$0xff]
  %v261 = vld [vmem:[%s256 + $0x20] sm:$0xff]
  %v262 = vld [vmem:[%s256 + $0x28] sm:$0xff]
  %v263 = vld [vmem:[%s256 + $0x30] sm:$0xff]
  %v264 = vld [vmem:[%s256 + $0x38] sm:$0xff]
  %v265 = vld [vmem:[%s256 + $0x40] sm:$0xff]
  %v266 = vld [vmem:[%s256 + $0x48] sm:$0xff]
  %v267 = vld [vmem:[%s256 + $0x50] sm:$0xff]
  %v268 = vld [vmem:[%s256 + $0x58] sm:$0xff]
  %v269 = vld [vmem:[%s256 + $0x60] sm:$0xff]
  %v270 = vld [vmem:[%s256 + $0x68] sm:$0xff]
  %v271 = vld [vmem:[%s256 + $0x70] sm:$0xff]
  %v272 = vld [vmem:[%s256 + $0x78] sm:$0xff]
  %v273 = vld [vmem:[%s256 + $0x80] sm:$0xff]
  %v274 = vld [vmem:[%s256 + $0x88] sm:$0xff]
  %v275 = vld [vmem:[%s256 + $0x90] sm:$0xff]
  %v276 = vld [vmem:[%s256 + $0x98] sm:$0xff]
  %v277 = vld [vmem:[%s256 + $0xa0] sm:$0xff]
  %v278 = vld [vmem:[%s256 + $0xa8] sm:$0xff]
  %v279 = vld [vmem:[%s256 + $0xb0] sm:$0xff]
  %v280 = vld [vmem:[%s256 + $0xb8] sm:$0xff]
  %v281 = vld [vmem:[%s256 + $0xc0] sm:$0xff]
  %v282 = vld [vmem:[%s256 + $0xc8] sm:$0xff]
  %v283 = vld [vmem:[%s256 + $0xd0] sm:$0xff]
  %v284 = vld [vmem:[%s256 + $0xd8] sm:$0xff]
  %v285 = vld [vmem:[%s256 + $0xe0] sm:$0xff]
  %v286 = vld [vmem:[%s256 + $0xe8] sm:$0xff]
  %v287 = vld [vmem:[%s256 + $0xf0] sm:$0xff]
  %v288 = vld [vmem:[%s256 + $0xf8] sm:$0xff]
  %v321 = vunpack.c.l.b16 %v257
  %v322 = vunpack.c.h.b16 %v257
  %v323 = vunpack.c.l.b16 %v258
  %v324 = vunpack.c.h.b16 %v258
  %v325 = vunpack.c.l.b16 %v259
  %v326 = vunpack.c.h.b16 %v259
  %v327 = vunpack.c.l.b16 %v260
  %v328 = vunpack.c.h.b16 %v260
  %v329 = vunpack.c.l.b16 %v261
  %v330 = vunpack.c.h.b16 %v261
  %v331 = vunpack.c.l.b16 %v262
  %v332 = vunpack.c.h.b16 %v262
  %v333 = vunpack.c.l.b16 %v263
  %v334 = vunpack.c.h.b16 %v263
  %v335 = vunpack.c.l.b16 %v264
  %v336 = vunpack.c.h.b16 %v264
  %v337 = vunpack.c.l.b16 %v265
  %v338 = vunpack.c.h.b16 %v265
  %v339 = vunpack.c.l.b16 %v266
  %v340 = vunpack.c.h.b16 %v266
  %v341 = vunpack.c.l.b16 %v267
  %v342 = vunpack.c.h.b16 %v267
  %v343 = vunpack.c.l.b16 %v268
  %v344 = vunpack.c.h.b16 %v268
  %v345 = vunpack.c.l.b16 %v269
  %v346 = vunpack.c.h.b16 %v269
  %v347 = vunpack.c.l.b16 %v270
  %v348 = vunpack.c.h.b16 %v270
  %v349 = vunpack.c.l.b16 %v271
  %v350 = vunpack.c.h.b16 %v271
  %v351 = vunpack.c.l.b16 %v272
  %v352 = vunpack.c.h.b16 %v272
  %v353 = vunpack.c.l.b16 %v273
  %v354 = vunpack.c.h.b16 %v273
  %v355 = vunpack.c.l.b16 %v274
  %v356 = vunpack.c.h.b16 %v274
  %v357 = vunpack.c.l.b16 %v275
  %v358 = vunpack.c.h.b16 %v275
  %v359 = vunpack.c.l.b16 %v276
  %v360 = vunpack.c.h.b16 %v276
  %v361 = vunpack.c.l.b16 %v277
  %v362 = vunpack.c.h.b16 %v277
  %v363 = vunpack.c.l.b16 %v278
  %v364 = vunpack.c.h.b16 %v278
  %v365 = vunpack.c.l.b16 %v279
  %v366 = vunpack.c.h.b16 %v279
  %v367 = vunpack.c.l.b16 %v280
  %v368 = vunpack.c.h.b16 %v280
  %v369 = vunpack.c.l.b16 %v281
  %v370 = vunpack.c.h.b16 %v281
  %v371 = vunpack.c.l.b16 %v282
  %v372 = vunpack.c.h.b16 %v282
  %v373 = vunpack.c.l.b16 %v283
  %v374 = vunpack.c.h.b16 %v283
  %v375 = vunpack.c.l.b16 %v284
  %v376 = vunpack.c.h.b16 %v284
  %v377 = vunpack.c.l.b16 %v285
  %v378 = vunpack.c.h.b16 %v285
  %v379 = vunpack.c.l.b16 %v286
  %v380 = vunpack.c.h.b16 %v286
  %v381 = vunpack.c.l.b16 %v287
  %v382 = vunpack.c.h.b16 %v287
  %v383 = vunpack.c.l.b16 %v288
  %v384 = vunpack.c.h.b16 %v288
  %v385 = vpack.c.b16 %v325, %v321
  %v386 = vpack.c.b16 %v326, %v322
  %v387 = vpack.c.b16 %v327, %v323
  %v388 = vpack.c.b16 %v328, %v324
  %v389 = vpack.c.b16 %v333, %v329
  %v390 = vpack.c.b16 %v334, %v330
  %v391 = vpack.c.b16 %v335, %v331
  %v392 = vpack.c.b16 %v336, %v332
  %v393 = vpack.c.b16 %v341, %v337
  %v394 = vpack.c.b16 %v342, %v338
  %v395 = vpack.c.b16 %v343, %v339
  %v396 = vpack.c.b16 %v344, %v340
  %v397 = vpack.c.b16 %v349, %v345
  %v398 = vpack.c.b16 %v350, %v346
  %v399 = vpack.c.b16 %v351, %v347
  %v400 = vpack.c.b16 %v352, %v348
  %v401 = vpack.c.b16 %v357, %v353
  %v402 = vpack.c.b16 %v358, %v354
  %v403 = vpack.c.b16 %v359, %v355
  %v404 = vpack.c.b16 %v360, %v356
  %v405 = vpack.c.b16 %v365, %v361
  %v406 = vpack.c.b16 %v366, %v362
  %v407 = vpack.c.b16 %v367, %v363
  %v408 = vpack.c.b16 %v368, %v364
  %v409 = vpack.c.b16 %v373, %v369
  %v410 = vpack.c.b16 %v374, %v370
  %v411 = vpack.c.b16 %v375, %v371
  %v412 = vpack.c.b16 %v376, %v372
  %v413 = vpack.c.b16 %v381, %v377
  %v414 = vpack.c.b16 %v382, %v378
  %v415 = vpack.c.b16 %v383, %v379
  %v416 = vpack.c.b16 %v384, %v380
  %449 = vmatpush.bf16.msra.mxu0 %v413
  %450 = vmatpush.bf16.msra.mxu0 %v409
  %451 = vmatpush.bf16.msra.mxu0 %v405
  %452 = vmatpush.bf16.msra.mxu0 %v401
  %453 = vmatpush.bf16.msra.mxu0 %v397
  %454 = vmatpush.bf16.msra.mxu0 %v393
  %455 = vmatpush.bf16.msra.mxu0 %v389
  %456 = vmatpush.bf16.msra.mxu0 %v385
  %457 = vmatmul.bf16.gmra.mxu0 %v11
  %v458 = vpop.f32.mrf.mxu0
  %v459 = vadd.f32 0.0, %v458
  %v460 = vpop.f32.mrf.mxu0
  %461 = vdwg.mxu0
  %462 = vmatpush.bf16.msra.mxu0 %v414
  %463 = vmatpush.bf16.msra.mxu0 %v410
  %464 = vmatpush.bf16.msra.mxu0 %v406
  %465 = vmatpush.bf16.msra.mxu0 %v402
  %466 = vmatpush.bf16.msra.mxu0 %v398
  %467 = vmatpush.bf16.msra.mxu0 %v394
  %468 = vmatpush.bf16.msra.mxu0 %v390
  %469 = vmatpush.bf16.msra.mxu0 %v386
  %470 = vmatmul.bf16.gmra.mxu0 %v11
  %v471 = vpop.f32.mrf.mxu0
  %v472 = vadd.f32 0.0, %v471
  %v473 = vpop.f32.mrf.mxu0
  %474 = vdwg.mxu0
  %475 = vmatpush.bf16.msra.mxu0 %v415
  %476 = vmatpush.bf16.msra.mxu0 %v411
  %477 = vmatpush.bf16.msra.mxu0 %v407
  %478 = vmatpush.bf16.msra.mxu0 %v403
  %479 = vmatpush.bf16.msra.mxu0 %v399
  %480 = vmatpush.bf16.msra.mxu0 %v395
  %481 = vmatpush.bf16.msra.mxu0 %v391
  %482 = vmatpush.bf16.msra.mxu0 %v387
  %483 = vmatmul.bf16.gmra.mxu0 %v11
  %v484 = vpop.f32.mrf.mxu0
  %v485 = vadd.f32 0.0, %v484
  %v486 = vpop.f32.mrf.mxu0
  %487 = vdwg.mxu0
  %488 = vmatpush.bf16.msra.mxu0 %v416
  %489 = vmatpush.bf16.msra.mxu0 %v412
  %490 = vmatpush.bf16.msra.mxu0 %v408
  %491 = vmatpush.bf16.msra.mxu0 %v404
  %492 = vmatpush.bf16.msra.mxu0 %v400
  %493 = vmatpush.bf16.msra.mxu0 %v396
  %494 = vmatpush.bf16.msra.mxu0 %v392
  %495 = vmatpush.bf16.msra.mxu0 %v388
  %496 = vmatmul.bf16.gmra.mxu0 %v11
  %v497 = vpop.f32.mrf.mxu0
  %v498 = vadd.f32 0.0, %v497
  %v499 = vpop.f32.mrf.mxu0
  %500 = vdwg.mxu0
  %s501 = scalar_lea.vmem %s0, 512
  %v502 = vld [vmem:[%s501] sm:$0xff]
  %v503 = vld [vmem:[%s501 + $0x8] sm:$0xff]
  %v504 = vld [vmem:[%s501 + $0x10] sm:$0xff]
  %v505 = vld [vmem:[%s501 + $0x18] sm:$0xff]
  %v506 = vld [vmem:[%s501 + $0x20] sm:$0xff]
  %v507 = vld [vmem:[%s501 + $0x28] sm:$0xff]
  %v508 = vld [vmem:[%s501 + $0x30] sm:$0xff]
  %v509 = vld [vmem:[%s501 + $0x38] sm:$0xff]
  %v510 = vld [vmem:[%s501 + $0x40] sm:$0xff]
  %v511 = vld [vmem:[%s501 + $0x48] sm:$0xff]
  %v512 = vld [vmem:[%s501 + $0x50] sm:$0xff]
  %v513 = vld [vmem:[%s501 + $0x58] sm:$0xff]
  %v514 = vld [vmem:[%s501 + $0x60] sm:$0xff]
  %v515 = vld [vmem:[%s501 + $0x68] sm:$0xff]
  %v516 = vld [vmem:[%s501 + $0x70] sm:$0xff]
  %v517 = vld [vmem:[%s501 + $0x78] sm:$0xff]
  %v518 = vld [vmem:[%s501 + $0x80] sm:$0xff]
  %v519 = vld [vmem:[%s501 + $0x88] sm:$0xff]
  %v520 = vld [vmem:[%s501 + $0x90] sm:$0xff]
  %v521 = vld [vmem:[%s501 + $0x98] sm:$0xff]
  %v522 = vld [vmem:[%s501 + $0xa0] sm:$0xff]
  %v523 = vld [vmem:[%s501 + $0xa8] sm:$0xff]
  %v524 = vld [vmem:[%s501 + $0xb0] sm:$0xff]
  %v525 = vld [vmem:[%s501 + $0xb8] sm:$0xff]
  %v526 = vld [vmem:[%s501 + $0xc0] sm:$0xff]
  %v527 = vld [vmem:[%s501 + $0xc8] sm:$0xff]
  %v528 = vld [vmem:[%s501 + $0xd0] sm:$0xff]
  %v529 = vld [vmem:[%s501 + $0xd8] sm:$0xff]
  %v530 = vld [vmem:[%s501 + $0xe0] sm:$0xff]
  %v531 = vld [vmem:[%s501 + $0xe8] sm:$0xff]
  %v532 = vld [vmem:[%s501 + $0xf0] sm:$0xff]
  %v533 = vld [vmem:[%s501 + $0xf8] sm:$0xff]
  %v566 = vunpack.c.l.b16 %v502
  %v567 = vunpack.c.h.b16 %v502
  %v568 = vunpack.c.l.b16 %v503
  %v569 = vunpack.c.h.b16 %v503
  %v570 = vunpack.c.l.b16 %v504
  %v571 = vunpack.c.h.b16 %v504
  %v572 = vunpack.c.l.b16 %v505
  %v573 = vunpack.c.h.b16 %v505
  %v574 = vunpack.c.l.b16 %v506
  %v575 = vunpack.c.h.b16 %v506
  %v576 = vunpack.c.l.b16 %v507
  %v577 = vunpack.c.h.b16 %v507
  %v578 = vunpack.c.l.b16 %v508
  %v579 = vunpack.c.h.b16 %v508
  %v580 = vunpack.c.l.b16 %v509
  %v581 = vunpack.c.h.b16 %v509
  %v582 = vunpack.c.l.b16 %v510
  %v583 = vunpack.c.h.b16 %v510
  %v584 = vunpack.c.l.b16 %v511
  %v585 = vunpack.c.h.b16 %v511
  %v586 = vunpack.c.l.b16 %v512
  %v587 = vunpack.c.h.b16 %v512
  %v588 = vunpack.c.l.b16 %v513
  %v589 = vunpack.c.h.b16 %v513
  %v590 = vunpack.c.l.b16 %v514
  %v591 = vunpack.c.h.b16 %v514
  %v592 = vunpack.c.l.b16 %v515
  %v593 = vunpack.c.h.b16 %v515
  %v594 = vunpack.c.l.b16 %v516
  %v595 = vunpack.c.h.b16 %v516
  %v596 = vunpack.c.l.b16 %v517
  %v597 = vunpack.c.h.b16 %v517
  %v598 = vunpack.c.l.b16 %v518
  %v599 = vunpack.c.h.b16 %v518
  %v600 = vunpack.c.l.b16 %v519
  %v601 = vunpack.c.h.b16 %v519
  %v602 = vunpack.c.l.b16 %v520
  %v603 = vunpack.c.h.b16 %v520
  %v604 = vunpack.c.l.b16 %v521
  %v605 = vunpack.c.h.b16 %v521
  %v606 = vunpack.c.l.b16 %v522
  %v607 = vunpack.c.h.b16 %v522
  %v608 = vunpack.c.l.b16 %v523
  %v609 = vunpack.c.h.b16 %v523
  %v610 = vunpack.c.l.b16 %v524
  %v611 = vunpack.c.h.b16 %v524
  %v612 = vunpack.c.l.b16 %v525
  %v613 = vunpack.c.h.b16 %v525
  %v614 = vunpack.c.l.b16 %v526
  %v615 = vunpack.c.h.b16 %v526
  %v616 = vunpack.c.l.b16 %v527
  %v617 = vunpack.c.h.b16 %v527
  %v618 = vunpack.c.l.b16 %v528
  %v619 = vunpack.c.h.b16 %v528
  %v620 = vunpack.c.l.b16 %v529
  %v621 = vunpack.c.h.b16 %v529
  %v622 = vunpack.c.l.b16 %v530
  %v623 = vunpack.c.h.b16 %v530
  %v624 = vunpack.c.l.b16 %v531
  %v625 = vunpack.c.h.b16 %v531
  %v626 = vunpack.c.l.b16 %v532
  %v627 = vunpack.c.h.b16 %v532
  %v628 = vunpack.c.l.b16 %v533
  %v629 = vunpack.c.h.b16 %v533
  %v630 = vpack.c.b16 %v570, %v566
  %v631 = vpack.c.b16 %v571, %v567
  %v632 = vpack.c.b16 %v572, %v568
  %v633 = vpack.c.b16 %v573, %v569
  %v634 = vpack.c.b16 %v578, %v574
  %v635 = vpack.c.b16 %v579, %v575
  %v636 = vpack.c.b16 %v580, %v576
  %v637 = vpack.c.b16 %v581, %v577
  %v638 = vpack.c.b16 %v586, %v582
  %v639 = vpack.c.b16 %v587, %v583
  %v640 = vpack.c.b16 %v588, %v584
  %v641 = vpack.c.b16 %v589, %v585
  %v642 = vpack.c.b16 %v594, %v590
  %v643 = vpack.c.b16 %v595, %v591
  %v644 = vpack.c.b16 %v596, %v592
  %v645 = vpack.c.b16 %v597, %v593
  %v646 = vpack.c.b16 %v602, %v598
  %v647 = vpack.c.b16 %v603, %v599
  %v648 = vpack.c.b16 %v604, %v600
  %v649 = vpack.c.b16 %v605, %v601
  %v650 = vpack.c.b16 %v610, %v606
  %v651 = vpack.c.b16 %v611, %v607
  %v652 = vpack.c.b16 %v612, %v608
  %v653 = vpack.c.b16 %v613, %v609
  %v654 = vpack.c.b16 %v618, %v614
  %v655 = vpack.c.b16 %v619, %v615
  %v656 = vpack.c.b16 %v620, %v616
  %v657 = vpack.c.b16 %v621, %v617
  %v658 = vpack.c.b16 %v626, %v622
  %v659 = vpack.c.b16 %v627, %v623
  %v660 = vpack.c.b16 %v628, %v624
  %v661 = vpack.c.b16 %v629, %v625
  %694 = vmatpush.bf16.msra.mxu0 %v658
  %695 = vmatpush.bf16.msra.mxu0 %v654
  %696 = vmatpush.bf16.msra.mxu0 %v650
  %697 = vmatpush.bf16.msra.mxu0 %v646
  %698 = vmatpush.bf16.msra.mxu0 %v642
  %699 = vmatpush.bf16.msra.mxu0 %v638
  %700 = vmatpush.bf16.msra.mxu0 %v634
  %701 = vmatpush.bf16.msra.mxu0 %v630
  %702 = vmatmul.bf16.gmra.mxu0 %v11
  %v703 = vpop.f32.mrf.mxu0
  %v704 = vadd.f32 0.0, %v703
  %v705 = vpop.f32.mrf.mxu0
  %706 = vdwg.mxu0
  %707 = vmatpush.bf16.msra.mxu0 %v659
  %708 = vmatpush.bf16.msra.mxu0 %v655
  %709 = vmatpush.bf16.msra.mxu0 %v651
  %710 = vmatpush.bf16.msra.mxu0 %v647
  %711 = vmatpush.bf16.msra.mxu0 %v643
  %712 = vmatpush.bf16.msra.mxu0 %v639
  %713 = vmatpush.bf16.msra.mxu0 %v635
  %714 = vmatpush.bf16.msra.mxu0 %v631
  %715 = vmatmul.bf16.gmra.mxu0 %v11
  %v716 = vpop.f32.mrf.mxu0
  %v717 = vadd.f32 0.0, %v716
  %v718 = vpop.f32.mrf.mxu0
  %719 = vdwg.mxu0
  %720 = vmatpush.bf16.msra.mxu0 %v660
  %721 = vmatpush.bf16.msra.mxu0 %v656
  %722 = vmatpush.bf16.msra.mxu0 %v652
  %723 = vmatpush.bf16.msra.mxu0 %v648
  %724 = vmatpush.bf16.msra.mxu0 %v644
  %725 = vmatpush.bf16.msra.mxu0 %v640
  %726 = vmatpush.bf16.msra.mxu0 %v636
  %727 = vmatpush.bf16.msra.mxu0 %v632
  %728 = vmatmul.bf16.gmra.mxu0 %v11
  %v729 = vpop.f32.mrf.mxu0
  %v730 = vadd.f32 0.0, %v729
  %v731 = vpop.f32.mrf.mxu0
  %732 = vdwg.mxu0
  %733 = vmatpush.bf16.msra.mxu0 %v661
  %734 = vmatpush.bf16.msra.mxu0 %v657
  %735 = vmatpush.bf16.msra.mxu0 %v653
  %736 = vmatpush.bf16.msra.mxu0 %v649
  %737 = vmatpush.bf16.msra.mxu0 %v645
  %738 = vmatpush.bf16.msra.mxu0 %v641
  %739 = vmatpush.bf16.msra.mxu0 %v637
  %740 = vmatpush.bf16.msra.mxu0 %v633
  %741 = vmatmul.bf16.gmra.mxu0 %v11
  %v742 = vpop.f32.mrf.mxu0
  %v743 = vadd.f32 0.0, %v742
  %v744 = vpop.f32.mrf.mxu0
  %745 = vdwg.mxu0
  %s746 = scalar_lea.vmem %s0, 768
  %v747 = vld [vmem:[%s746] sm:$0xff]
  %v748 = vld [vmem:[%s746 + $0x8] sm:$0xff]
  %v749 = vld [vmem:[%s746 + $0x10] sm:$0xff]
  %v750 = vld [vmem:[%s746 + $0x18] sm:$0xff]
  %v751 = vld [vmem:[%s746 + $0x20] sm:$0xff]
  %v752 = vld [vmem:[%s746 + $0x28] sm:$0xff]
  %v753 = vld [vmem:[%s746 + $0x30] sm:$0xff]
  %v754 = vld [vmem:[%s746 + $0x38] sm:$0xff]
  %v755 = vld [vmem:[%s746 + $0x40] sm:$0xff]
  %v756 = vld [vmem:[%s746 + $0x48] sm:$0xff]
  %v757 = vld [vmem:[%s746 + $0x50] sm:$0xff]
  %v758 = vld [vmem:[%s746 + $0x58] sm:$0xff]
  %v759 = vld [vmem:[%s746 + $0x60] sm:$0xff]
  %v760 = vld [vmem:[%s746 + $0x68] sm:$0xff]
  %v761 = vld [vmem:[%s746 + $0x70] sm:$0xff]
  %v762 = vld [vmem:[%s746 + $0x78] sm:$0xff]
  %v763 = vld [vmem:[%s746 + $0x80] sm:$0xff]
  %v764 = vld [vmem:[%s746 + $0x88] sm:$0xff]
  %v765 = vld [vmem:[%s746 + $0x90] sm:$0xff]
  %v766 = vld [vmem:[%s746 + $0x98] sm:$0xff]
  %v767 = vld [vmem:[%s746 + $0xa0] sm:$0xff]
  %v768 = vld [vmem:[%s746 + $0xa8] sm:$0xff]
  %v769 = vld [vmem:[%s746 + $0xb0] sm:$0xff]
  %v770 = vld [vmem:[%s746 + $0xb8] sm:$0xff]
  %v771 = vld [vmem:[%s746 + $0xc0] sm:$0xff]
  %v772 = vld [vmem:[%s746 + $0xc8] sm:$0xff]
  %v773 = vld [vmem:[%s746 + $0xd0] sm:$0xff]
  %v774 = vld [vmem:[%s746 + $0xd8] sm:$0xff]
  %v775 = vld [vmem:[%s746 + $0xe0] sm:$0xff]
  %v776 = vld [vmem:[%s746 + $0xe8] sm:$0xff]
  %v777 = vld [vmem:[%s746 + $0xf0] sm:$0xff]
  %v778 = vld [vmem:[%s746 + $0xf8] sm:$0xff]
  %v811 = vunpack.c.l.b16 %v747
  %v812 = vunpack.c.h.b16 %v747
  %v813 = vunpack.c.l.b16 %v748
  %v814 = vunpack.c.h.b16 %v748
  %v815 = vunpack.c.l.b16 %v749
  %v816 = vunpack.c.h.b16 %v749
  %v817 = vunpack.c.l.b16 %v750
  %v818 = vunpack.c.h.b16 %v750
  %v819 = vunpack.c.l.b16 %v751
  %v820 = vunpack.c.h.b16 %v751
  %v821 = vunpack.c.l.b16 %v752
  %v822 = vunpack.c.h.b16 %v752
  %v823 = vunpack.c.l.b16 %v753
  %v824 = vunpack.c.h.b16 %v753
  %v825 = vunpack.c.l.b16 %v754
  %v826 = vunpack.c.h.b16 %v754
  %v827 = vunpack.c.l.b16 %v755
  %v828 = vunpack.c.h.b16 %v755
  %v829 = vunpack.c.l.b16 %v756
  %v830 = vunpack.c.h.b16 %v756
  %v831 = vunpack.c.l.b16 %v757
  %v832 = vunpack.c.h.b16 %v757
  %v833 = vunpack.c.l.b16 %v758
  %v834 = vunpack.c.h.b16 %v758
  %v835 = vunpack.c.l.b16 %v759
  %v836 = vunpack.c.h.b16 %v759
  %v837 = vunpack.c.l.b16 %v760
  %v838 = vunpack.c.h.b16 %v760
  %v839 = vunpack.c.l.b16 %v761
  %v840 = vunpack.c.h.b16 %v761
  %v841 = vunpack.c.l.b16 %v762
  %v842 = vunpack.c.h.b16 %v762
  %v843 = vunpack.c.l.b16 %v763
  %v844 = vunpack.c.h.b16 %v763
  %v845 = vunpack.c.l.b16 %v764
  %v846 = vunpack.c.h.b16 %v764
  %v847 = vunpack.c.l.b16 %v765
  %v848 = vunpack.c.h.b16 %v765
  %v849 = vunpack.c.l.b16 %v766
  %v850 = vunpack.c.h.b16 %v766
  %v851 = vunpack.c.l.b16 %v767
  %v852 = vunpack.c.h.b16 %v767
  %v853 = vunpack.c.l.b16 %v768
  %v854 = vunpack.c.h.b16 %v768
  %v855 = vunpack.c.l.b16 %v769
  %v856 = vunpack.c.h.b16 %v769
  %v857 = vunpack.c.l.b16 %v770
  %v858 = vunpack.c.h.b16 %v770
  %v859 = vunpack.c.l.b16 %v771
  %v860 = vunpack.c.h.b16 %v771
  %v861 = vunpack.c.l.b16 %v772
  %v862 = vunpack.c.h.b16 %v772
  %v863 = vunpack.c.l.b16 %v773
  %v864 = vunpack.c.h.b16 %v773
  %v865 = vunpack.c.l.b16 %v774
  %v866 = vunpack.c.h.b16 %v774
  %v867 = vunpack.c.l.b16 %v775
  %v868 = vunpack.c.h.b16 %v775
  %v869 = vunpack.c.l.b16 %v776
  %v870 = vunpack.c.h.b16 %v776
  %v871 = vunpack.c.l.b16 %v777
  %v872 = vunpack.c.h.b16 %v777
  %v873 = vunpack.c.l.b16 %v778
  %v874 = vunpack.c.h.b16 %v778
  %v875 = vpack.c.b16 %v815, %v811
  %v876 = vpack.c.b16 %v816, %v812
  %v877 = vpack.c.b16 %v817, %v813
  %v878 = vpack.c.b16 %v818, %v814
  %v879 = vpack.c.b16 %v823, %v819
  %v880 = vpack.c.b16 %v824, %v820
  %v881 = vpack.c.b16 %v825, %v821
  %v882 = vpack.c.b16 %v826, %v822
  %v883 = vpack.c.b16 %v831, %v827
  %v884 = vpack.c.b16 %v832, %v828
  %v885 = vpack.c.b16 %v833, %v829
  %v886 = vpack.c.b16 %v834, %v830
  %v887 = vpack.c.b16 %v839, %v835
  %v888 = vpack.c.b16 %v840, %v836
  %v889 = vpack.c.b16 %v841, %v837
  %v890 = vpack.c.b16 %v842, %v838
  %v891 = vpack.c.b16 %v847, %v843
  %v892 = vpack.c.b16 %v848, %v844
  %v893 = vpack.c.b16 %v849, %v845
  %v894 = vpack.c.b16 %v850, %v846
  %v895 = vpack.c.b16 %v855, %v851
  %v896 = vpack.c.b16 %v856, %v852
  %v897 = vpack.c.b16 %v857, %v853
  %v898 = vpack.c.b16 %v858, %v854
  %v899 = vpack.c.b16 %v863, %v859
  %v900 = vpack.c.b16 %v864, %v860
  %v901 = vpack.c.b16 %v865, %v861
  %v902 = vpack.c.b16 %v866, %v862
  %v903 = vpack.c.b16 %v871, %v867
  %v904 = vpack.c.b16 %v872, %v868
  %v905 = vpack.c.b16 %v873, %v869
  %v906 = vpack.c.b16 %v874, %v870
  %939 = vmatpush.bf16.msra.mxu0 %v903
  %940 = vmatpush.bf16.msra.mxu0 %v899
  %941 = vmatpush.bf16.msra.mxu0 %v895
  %942 = vmatpush.bf16.msra.mxu0 %v891
  %943 = vmatpush.bf16.msra.mxu0 %v887
  %944 = vmatpush.bf16.msra.mxu0 %v883
  %945 = vmatpush.bf16.msra.mxu0 %v879
  %946 = vmatpush.bf16.msra.mxu0 %v875
  %947 = vmatmul.bf16.gmra.mxu0 %v11
  %v948 = vpop.f32.mrf.mxu0
  %v949 = vadd.f32 0.0, %v948
  %v950 = vpop.f32.mrf.mxu0
  %951 = vdwg.mxu0
  %952 = vmatpush.bf16.msra.mxu0 %v904
  %953 = vmatpush.bf16.msra.mxu0 %v900
  %954 = vmatpush.bf16.msra.mxu0 %v896
  %955 = vmatpush.bf16.msra.mxu0 %v892
  %956 = vmatpush.bf16.msra.mxu0 %v888
  %957 = vmatpush.bf16.msra.mxu0 %v884
  %958 = vmatpush.bf16.msra.mxu0 %v880
  %959 = vmatpush.bf16.msra.mxu0 %v876
  %960 = vmatmul.bf16.gmra.mxu0 %v11
  %v961 = vpop.f32.mrf.mxu0
  %v962 = vadd.f32 0.0, %v961
  %v963 = vpop.f32.mrf.mxu0
  %964 = vdwg.mxu0
  %965 = vmatpush.bf16.msra.mxu0 %v905
  %966 = vmatpush.bf16.msra.mxu0 %v901
  %967 = vmatpush.bf16.msra.mxu0 %v897
  %968 = vmatpush.bf16.msra.mxu0 %v893
  %969 = vmatpush.bf16.msra.mxu0 %v889
  %970 = vmatpush.bf16.msra.mxu0 %v885
  %971 = vmatpush.bf16.msra.mxu0 %v881
  %972 = vmatpush.bf16.msra.mxu0 %v877
  %973 = vmatmul.bf16.gmra.mxu0 %v11
  %v974 = vpop.f32.mrf.mxu0
  %v975 = vadd.f32 0.0, %v974
  %v976 = vpop.f32.mrf.mxu0
  %977 = vdwg.mxu0
  %978 = vmatpush.bf16.msra.mxu0 %v906
  %979 = vmatpush.bf16.msra.mxu0 %v902
  %980 = vmatpush.bf16.msra.mxu0 %v898
  %981 = vmatpush.bf16.msra.mxu0 %v894
  %982 = vmatpush.bf16.msra.mxu0 %v890
  %983 = vmatpush.bf16.msra.mxu0 %v886
  %984 = vmatpush.bf16.msra.mxu0 %v882
  %985 = vmatpush.bf16.msra.mxu0 %v878
  %986 = vmatmul.bf16.gmra.mxu0 %v11
  %v987 = vpop.f32.mrf.mxu0
  %v988 = vadd.f32 0.0, %v987
  %v989 = vpop.f32.mrf.mxu0
  %990 = vdwg.mxu0
  %v991 = vmax.f32 %v214, %v459
  %v992 = vmax.f32 %v227, %v472
  %v993 = vmax.f32 %v240, %v485
  %v994 = vmax.f32 %v253, %v498
  %v995 = vmax.f32 %v704, %v949
  %v996 = vmax.f32 %v717, %v962
  %v997 = vmax.f32 %v730, %v975
  %v998 = vmax.f32 %v743, %v988
  %v999 = vmax.f32 %v991, %v995
  %v1000 = vmax.f32 %v992, %v996
  %v1001 = vmax.f32 %v993, %v997
  %v1002 = vmax.f32 %v994, %v998
  %v1003 = vmax.f32 %v999, 0.0
  %v1004 = vmax.f32 %v1000, 0.0
  %v1005 = vmax.f32 %v1001, 0.0
  %v1006 = vmax.f32 %v1002, 0.0
  %1007 = vst [vmem:[%s2] sm:$0xff] %v1003
  %1008 = vst [vmem:[%s2 + $0x8] sm:$0xff] %v1004
  %1009 = vst [vmem:[%s2 + $0x10] sm:$0xff] %v1005
  %1010 = vst [vmem:[%s2 + $0x18] sm:$0xff] %v1006
  // Predicated region
  $region10: #{cnn4_forward.2} parent=0 // pred_check
    _
  $region11: #{cnn4_forward.2} parent=0 // pred_check_branch
    %1012 = sbr.rel (0) target = $region13
  $region12: #{cnn4_forward.2} parent=0 // pred_region
    _
  $region13: #{cnn4_forward.2} parent=0 // pred_fallthru
    _
  // Predicated region
  $region14: #{cnn4_forward.2} parent=0 // pred_check
    _
  $region15: #{cnn4_forward.2} parent=0 // pred_check_branch
    %1014 = sbr.rel (0) target = $region17
  $region16: #{cnn4_forward.2} parent=0 // pred_region
    _
  $region17: #{cnn4_forward.2} parent=0 // pred_fallthru
    _

// kernel: cnn4_forward.3
$region0: #{cnn4_forward.3}
  #allocation0 [shape = 'u32[]', space=smem, size = 0x4, offset = 0x4, fixed_abs, tag = 'smem constant byte address 0x4 - core index']
  #allocation1 [shape = 'u32[72,128]{1,0:T(1,128)}', space=vmem, size = 0x9000, scoped, tag = 'internal scratch']
  #allocation2 [shape = 'bf16[8,16,128]{2,1,0:T(8,128)(2,1)}', space=vmem, size = 0x8000, scoped, tag = 'scratch operand']
  %s0 = inlined_call_operand.vmem [shape: bf16[8,256,128], index: 0, kind: input, shape index: {}]
  %s1 = inlined_call_operand.vmem [shape: bf16[16,256], index: 1, kind: input, shape index: {}]
  %s2 = inlined_call_operand.vmem [shape: bf16[16,128,128], index: 2, kind: input, shape index: {}]
  %s3 = inlined_call_operand.vmem [shape: f32[1,128], index: 3, kind: input, shape index: {}]
  %s4 = inlined_call_operand.vmem [shape: bf16[128,128], index: 4, kind: input, shape index: {}]
  %s5 = inlined_call_operand.vmem [shape: f32[1,128], index: 5, kind: input, shape index: {}]
  %s6 = inlined_call_operand.vmem [shape: bf16[128,128], index: 6, kind: input, shape index: {}]
  %s7 = inlined_call_operand.vmem [shape: f32[1,128], index: 7, kind: input, shape index: {}]
  %s8 = inlined_call_operand.vmem [shape: f32[8,128], index: 8, kind: output, shape index: {}]
  %s9 = sld [smem:[#allocation0]]
  $region42: #{cnn4_forward.3} parent=0
    _
  %s11 = ssub.s32 1, %s9
  %s12 = scalar_select 0, %s11, %s9
  // Predicated region
  $region2: #{cnn4_forward.3} parent=0 // pred_check
    _
  $region3: #{cnn4_forward.3} parent=0 // pred_check_branch
    %14 = sbr.rel (0) target = $region5
  $region4: #{cnn4_forward.3} parent=0 // pred_region
    _
  $region5: #{cnn4_forward.3} parent=0 // pred_fallthru
    _
  // Predicated region
  $region6: #{cnn4_forward.3} parent=0 // pred_check
    _
  $region7: #{cnn4_forward.3} parent=0 // pred_check_branch
    %16 = sbr.rel (0) target = $region9
  $region8: #{cnn4_forward.3} parent=0 // pred_region
    _
  $region9: #{cnn4_forward.3} parent=0 // pred_fallthru
    _
  // Predicated region
  $region10: #{cnn4_forward.3} parent=0 // pred_check
    _
  $region11: #{cnn4_forward.3} parent=0 // pred_check_branch
    %18 = sbr.rel (0) target = $region13
  $region12: #{cnn4_forward.3} parent=0 // pred_region
    _
  $region13: #{cnn4_forward.3} parent=0 // pred_fallthru
    _
  // Predicated region
  $region14: #{cnn4_forward.3} parent=0 // pred_check
    _
  $region15: #{cnn4_forward.3} parent=0 // pred_check_branch
    %20 = sbr.rel (0) target = $region17
  $region16: #{cnn4_forward.3} parent=0 // pred_region
    _
  $region17: #{cnn4_forward.3} parent=0 // pred_fallthru
    _
  // Predicated region
  $region18: #{cnn4_forward.3} parent=0 // pred_check
    _
  $region19: #{cnn4_forward.3} parent=0 // pred_check_branch
    %22 = sbr.rel (0) target = $region21
  $region20: #{cnn4_forward.3} parent=0 // pred_region
    _
  $region21: #{cnn4_forward.3} parent=0 // pred_fallthru
    _
  // Predicated region
  $region22: #{cnn4_forward.3} parent=0 // pred_check
    _
  $region23: #{cnn4_forward.3} parent=0 // pred_check_branch
    %24 = sbr.rel (0) target = $region25
  $region24: #{cnn4_forward.3} parent=0 // pred_region
    _
  $region25: #{cnn4_forward.3} parent=0 // pred_fallthru
    _
  // Predicated region
  $region26: #{cnn4_forward.3} parent=0 // pred_check
    _
  $region27: #{cnn4_forward.3} parent=0 // pred_check_branch
    %26 = sbr.rel (0) target = $region29
  $region28: #{cnn4_forward.3} parent=0 // pred_region
    _
  $region29: #{cnn4_forward.3} parent=0 // pred_fallthru
    _
  // Predicated region
  $region30: #{cnn4_forward.3} parent=0 // pred_check
    _
  $region31: #{cnn4_forward.3} parent=0 // pred_check_branch
    %28 = sbr.rel (0) target = $region33
  $region32: #{cnn4_forward.3} parent=0 // pred_region
    _
  $region33: #{cnn4_forward.3} parent=0 // pred_fallthru
    _
  %v29 = vld [vmem:[%s1] sm:$0xff]
  %v30 = vld [vmem:[%s1 + $0x8] sm:$0xff]
  %v31 = vld [vmem:[%s0] sm:$0xf]
  %v32 = vld [vmem:[%s0 + $0x4] sm:$0xf]
  %v33 = vld [vmem:[%s0 + $0x8] sm:$0xf]
  %v34 = vld [vmem:[%s0 + $0xc] sm:$0xf]
  %v35 = vld [vmem:[%s0 + $0x10] sm:$0xf]
  %v36 = vld [vmem:[%s0 + $0x14] sm:$0xf]
  %v37 = vld [vmem:[%s0 + $0x18] sm:$0xf]
  %v38 = vld [vmem:[%s0 + $0x1c] sm:$0xf]
  %v39 = vld [vmem:[%s0 + $0x20] sm:$0xf]
  %v40 = vld [vmem:[%s0 + $0x24] sm:$0xf]
  %v41 = vld [vmem:[%s0 + $0x28] sm:$0xf]
  %v42 = vld [vmem:[%s0 + $0x2c] sm:$0xf]
  %v43 = vld [vmem:[%s0 + $0x30] sm:$0xf]
  %v44 = vld [vmem:[%s0 + $0x34] sm:$0xf]
  %v45 = vld [vmem:[%s0 + $0x38] sm:$0xf]
  %v46 = vld [vmem:[%s0 + $0x3c] sm:$0xf]
  %v47 = vld [vmem:[%s0 + $0x40] sm:$0xf]
  %v48 = vld [vmem:[%s0 + $0x44] sm:$0xf]
  %v49 = vld [vmem:[%s0 + $0x48] sm:$0xf]
  %v50 = vld [vmem:[%s0 + $0x4c] sm:$0xf]
  %v51 = vld [vmem:[%s0 + $0x50] sm:$0xf]
  %v52 = vld [vmem:[%s0 + $0x54] sm:$0xf]
  %v53 = vld [vmem:[%s0 + $0x58] sm:$0xf]
  %v54 = vld [vmem:[%s0 + $0x5c] sm:$0xf]
  %v55 = vld [vmem:[%s0 + $0x60] sm:$0xf]
  %v56 = vld [vmem:[%s0 + $0x64] sm:$0xf]
  %v57 = vld [vmem:[%s0 + $0x68] sm:$0xf]
  %v58 = vld [vmem:[%s0 + $0x6c] sm:$0xf]
  %v59 = vld [vmem:[%s0 + $0x70] sm:$0xf]
  %v60 = vld [vmem:[%s0 + $0x74] sm:$0xf]
  %v61 = vld [vmem:[%s0 + $0x78] sm:$0xf]
  %v62 = vld [vmem:[%s0 + $0x7c] sm:$0xf]
  %v65 = vunpack.c.l.b16 %v29
  %v66 = vunpack.c.h.b16 %v29
  %v67 = vunpack.c.l.b16 %v30
  %v68 = vunpack.c.h.b16 %v30
  %v69 = vpack.c.b16 %v67, %v65
  %v70 = vpack.c.b16 %v68, %v66
  %v105 = vunpack.c.l.b16 %v31
  %v106 = vunpack.c.l.b16 %v32
  %v107 = vunpack.c.l.b16 %v33
  %v108 = vunpack.c.l.b16 %v34
  %v109 = vunpack.c.l.b16 %v35
  %v110 = vunpack.c.l.b16 %v36
  %v111 = vunpack.c.l.b16 %v37
  %v112 = vunpack.c.l.b16 %v38
  %v113 = vunpack.c.l.b16 %v39
  %v114 = vunpack.c.l.b16 %v40
  %v115 = vunpack.c.l.b16 %v41
  %v116 = vunpack.c.l.b16 %v42
  %v117 = vunpack.c.l.b16 %v43
  %v118 = vunpack.c.l.b16 %v44
  %v119 = vunpack.c.l.b16 %v45
  %v120 = vunpack.c.l.b16 %v46
  %v121 = vunpack.c.l.b16 %v47
  %v122 = vunpack.c.l.b16 %v48
  %v123 = vunpack.c.l.b16 %v49
  %v124 = vunpack.c.l.b16 %v50
  %v125 = vunpack.c.l.b16 %v51
  %v126 = vunpack.c.l.b16 %v52
  %v127 = vunpack.c.l.b16 %v53
  %v128 = vunpack.c.l.b16 %v54
  %v129 = vunpack.c.l.b16 %v55
  %v130 = vunpack.c.l.b16 %v56
  %v131 = vunpack.c.l.b16 %v57
  %v132 = vunpack.c.l.b16 %v58
  %v133 = vunpack.c.l.b16 %v59
  %v134 = vunpack.c.l.b16 %v60
  %v135 = vunpack.c.l.b16 %v61
  %v136 = vunpack.c.l.b16 %v62
  %v137 = vpack.c.b16 %v106, %v105
  %v138 = vpack.c.b16 %v108, %v107
  %v139 = vpack.c.b16 %v110, %v109
  %v140 = vpack.c.b16 %v112, %v111
  %v141 = vpack.c.b16 %v114, %v113
  %v142 = vpack.c.b16 %v116, %v115
  %v143 = vpack.c.b16 %v118, %v117
  %v144 = vpack.c.b16 %v120, %v119
  %v145 = vpack.c.b16 %v122, %v121
  %v146 = vpack.c.b16 %v124, %v123
  %v147 = vpack.c.b16 %v126, %v125
  %v148 = vpack.c.b16 %v128, %v127
  %v149 = vpack.c.b16 %v130, %v129
  %v150 = vpack.c.b16 %v132, %v131
  %v151 = vpack.c.b16 %v134, %v133
  %v152 = vpack.c.b16 %v136, %v135
  %169 = vmatpush.bf16.msra.mxu0 %v144
  %170 = vmatpush.bf16.msra.mxu0 %v143
  %171 = vmatpush.bf16.msra.mxu0 %v142
  %172 = vmatpush.bf16.msra.mxu0 %v141
  %173 = vmatpush.bf16.msra.mxu0 %v140
  %174 = vmatpush.bf16.msra.mxu0 %v139
  %175 = vmatpush.bf16.msra.mxu0 %v138
  %176 = vmatpush.bf16.msra.mxu0 %v137
  %177 = vmatmul.bf16.gmra.mxu0 %v69
  %v178 = vpop.f32.mrf.mxu0
  %v179 = vadd.f32 0.0, %v178
  %v180 = vpop.f32.mrf.mxu0
  %v181 = vadd.f32 0.0, %v180
  %182 = vdwg.mxu0
  %183 = vmatpush.bf16.msra.mxu0 %v152
  %184 = vmatpush.bf16.msra.mxu0 %v151
  %185 = vmatpush.bf16.msra.mxu0 %v150
  %186 = vmatpush.bf16.msra.mxu0 %v149
  %187 = vmatpush.bf16.msra.mxu0 %v148
  %188 = vmatpush.bf16.msra.mxu0 %v147
  %189 = vmatpush.bf16.msra.mxu0 %v146
  %190 = vmatpush.bf16.msra.mxu0 %v145
  %191 = vmatmul.bf16.gmra.mxu0 %v70
  %v192 = vpop.f32.mrf.mxu0
  %v193 = vadd.f32 %v179, %v192
  %v194 = vpop.f32.mrf.mxu0
  %v195 = vadd.f32 %v181, %v194
  %196 = vdwg.mxu0
  %v197 = vmax.f32 %v193, 0.0
  %v198 = vmax.f32 %v195, 0.0
  %v199 = vpack.c.bf16 %v197, %v197
  %v200 = vpack.c.bf16 %v198, %v198
  %201 = vst [vmem:[#allocation2] sm:$0xf] %v199
  %202 = vst [vmem:[#allocation2 + $0x4] sm:$0xf] %v200
  %s203 = scalar_lea.vmem %s0, 128
  %v204 = vld [vmem:[%s203] sm:$0xf]
  %v205 = vld [vmem:[%s203 + $0x4] sm:$0xf]
  %v206 = vld [vmem:[%s203 + $0x8] sm:$0xf]
  %v207 = vld [vmem:[%s203 + $0xc] sm:$0xf]
  %v208 = vld [vmem:[%s203 + $0x10] sm:$0xf]
  %v209 = vld [vmem:[%s203 + $0x14] sm:$0xf]
  %v210 = vld [vmem:[%s203 + $0x18] sm:$0xf]
  %v211 = vld [vmem:[%s203 + $0x1c] sm:$0xf]
  %v212 = vld [vmem:[%s203 + $0x20] sm:$0xf]
  %v213 = vld [vmem:[%s203 + $0x24] sm:$0xf]
  %v214 = vld [vmem:[%s203 + $0x28] sm:$0xf]
  %v215 = vld [vmem:[%s203 + $0x2c] sm:$0xf]
  %v216 = vld [vmem:[%s203 + $0x30] sm:$0xf]
  %v217 = vld [vmem:[%s203 + $0x34] sm:$0xf]
  %v218 = vld [vmem:[%s203 + $0x38] sm:$0xf]
  %v219 = vld [vmem:[%s203 + $0x3c] sm:$0xf]
  %v220 = vld [vmem:[%s203 + $0x40] sm:$0xf]
  %v221 = vld [vmem:[%s203 + $0x44] sm:$0xf]
  %v222 = vld [vmem:[%s203 + $0x48] sm:$0xf]
  %v223 = vld [vmem:[%s203 + $0x4c] sm:$0xf]
  %v224 = vld [vmem:[%s203 + $0x50] sm:$0xf]
  %v225 = vld [vmem:[%s203 + $0x54] sm:$0xf]
  %v226 = vld [vmem:[%s203 + $0x58] sm:$0xf]
  %v227 = vld [vmem:[%s203 + $0x5c] sm:$0xf]
  %v228 = vld [vmem:[%s203 + $0x60] sm:$0xf]
  %v229 = vld [vmem:[%s203 + $0x64] sm:$0xf]
  %v230 = vld [vmem:[%s203 + $0x68] sm:$0xf]
  %v231 = vld [vmem:[%s203 + $0x6c] sm:$0xf]
  %v232 = vld [vmem:[%s203 + $0x70] sm:$0xf]
  %v233 = vld [vmem:[%s203 + $0x74] sm:$0xf]
  %v234 = vld [vmem:[%s203 + $0x78] sm:$0xf]
  %v235 = vld [vmem:[%s203 + $0x7c] sm:$0xf]
  %v268 = vunpack.c.l.b16 %v204
  %v269 = vunpack.c.l.b16 %v205
  %v270 = vunpack.c.l.b16 %v206
  %v271 = vunpack.c.l.b16 %v207
  %v272 = vunpack.c.l.b16 %v208
  %v273 = vunpack.c.l.b16 %v209
  %v274 = vunpack.c.l.b16 %v210
  %v275 = vunpack.c.l.b16 %v211
  %v276 = vunpack.c.l.b16 %v212
  %v277 = vunpack.c.l.b16 %v213
  %v278 = vunpack.c.l.b16 %v214
  %v279 = vunpack.c.l.b16 %v215
  %v280 = vunpack.c.l.b16 %v216
  %v281 = vunpack.c.l.b16 %v217
  %v282 = vunpack.c.l.b16 %v218
  %v283 = vunpack.c.l.b16 %v219
  %v284 = vunpack.c.l.b16 %v220
  %v285 = vunpack.c.l.b16 %v221
  %v286 = vunpack.c.l.b16 %v222
  %v287 = vunpack.c.l.b16 %v223
  %v288 = vunpack.c.l.b16 %v224
  %v289 = vunpack.c.l.b16 %v225
  %v290 = vunpack.c.l.b16 %v226
  %v291 = vunpack.c.l.b16 %v227
  %v292 = vunpack.c.l.b16 %v228
  %v293 = vunpack.c.l.b16 %v229
  %v294 = vunpack.c.l.b16 %v230
  %v295 = vunpack.c.l.b16 %v231
  %v296 = vunpack.c.l.b16 %v232
  %v297 = vunpack.c.l.b16 %v233
  %v298 = vunpack.c.l.b16 %v234
  %v299 = vunpack.c.l.b16 %v235
  %v300 = vpack.c.b16 %v269, %v268
  %v301 = vpack.c.b16 %v271, %v270
  %v302 = vpack.c.b16 %v273, %v272
  %v303 = vpack.c.b16 %v275, %v274
  %v304 = vpack.c.b16 %v277, %v276
  %v305 = vpack.c.b16 %v279, %v278
  %v306 = vpack.c.b16 %v281, %v280
  %v307 = vpack.c.b16 %v283, %v282
  %v308 = vpack.c.b16 %v285, %v284
  %v309 = vpack.c.b16 %v287, %v286
  %v310 = vpack.c.b16 %v289, %v288
  %v311 = vpack.c.b16 %v291, %v290
  %v312 = vpack.c.b16 %v293, %v292
  %v313 = vpack.c.b16 %v295, %v294
  %v314 = vpack.c.b16 %v297, %v296
  %v315 = vpack.c.b16 %v299, %v298
  %332 = vmatpush.bf16.msra.mxu0 %v307
  %333 = vmatpush.bf16.msra.mxu0 %v306
  %334 = vmatpush.bf16.msra.mxu0 %v305
  %335 = vmatpush.bf16.msra.mxu0 %v304
  %336 = vmatpush.bf16.msra.mxu0 %v303
  %337 = vmatpush.bf16.msra.mxu0 %v302
  %338 = vmatpush.bf16.msra.mxu0 %v301
  %339 = vmatpush.bf16.msra.mxu0 %v300
  %340 = vmatmul.bf16.gmra.mxu0 %v69
  %v341 = vpop.f32.mrf.mxu0
  %v342 = vadd.f32 0.0, %v341
  %v343 = vpop.f32.mrf.mxu0
  %v344 = vadd.f32 0.0, %v343
  %345 = vdwg.mxu0
  %346 = vmatpush.bf16.msra.mxu0 %v315
  %347 = vmatpush.bf16.msra.mxu0 %v314
  %348 = vmatpush.bf16.msra.mxu0 %v313
  %349 = vmatpush.bf16.msra.mxu0 %v312
  %350 = vmatpush.bf16.msra.mxu0 %v311
  %351 = vmatpush.bf16.msra.mxu0 %v310
  %352 = vmatpush.bf16.msra.mxu0 %v309
  %353 = vmatpush.bf16.msra.mxu0 %v308
  %354 = vmatmul.bf16.gmra.mxu0 %v70
  %v355 = vpop.f32.mrf.mxu0
  %v356 = vadd.f32 %v342, %v355
  %v357 = vpop.f32.mrf.mxu0
  %v358 = vadd.f32 %v344, %v357
  %359 = vdwg.mxu0
  %v360 = vmax.f32 %v356, 0.0
  %v361 = vmax.f32 %v358, 0.0
  %v362 = vpack.c.bf16 %v360, %v360
  %v363 = vpack.c.bf16 %v361, %v361
  %s364 = scalar_lea.vmem [#allocation2], 8
  %365 = vst [vmem:[%s364] sm:$0xf] %v362
  %366 = vst [vmem:[%s364 + $0x4] sm:$0xf] %v363
  %s367 = scalar_lea.vmem %s0, 256
  %v368 = vld [vmem:[%s367] sm:$0xf]
  %v369 = vld [vmem:[%s367 + $0x4] sm:$0xf]
  %v370 = vld [vmem:[%s367 + $0x8] sm:$0xf]
  %v371 = vld [vmem:[%s367 + $0xc] sm:$0xf]
  %v372 = vld [vmem:[%s367 + $0x10] sm:$0xf]
  %v373 = vld [vmem:[%s367 + $0x14] sm:$0xf]
  %v374 = vld [vmem:[%s367 + $0x18] sm:$0xf]
  %v375 = vld [vmem:[%s367 + $0x1c] sm:$0xf]
  %v376 = vld [vmem:[%s367 + $0x20] sm:$0xf]
  %v377 = vld [vmem:[%s367 + $0x24] sm:$0xf]
  %v378 = vld [vmem:[%s367 + $0x28] sm:$0xf]
  %v379 = vld [vmem:[%s367 + $0x2c] sm:$0xf]
  %v380 = vld [vmem:[%s367 + $0x30] sm:$0xf]
  %v381 = vld [vmem:[%s367 + $0x34] sm:$0xf]
  %v382 = vld [vmem:[%s367 + $0x38] sm:$0xf]
  %v383 = vld [vmem:[%s367 + $0x3c] sm:$0xf]
  %v384 = vld [vmem:[%s367 + $0x40] sm:$0xf]
  %v385 = vld [vmem:[%s367 + $0x44] sm:$0xf]
  %v386 = vld [vmem:[%s367 + $0x48] sm:$0xf]
  %v387 = vld [vmem:[%s367 + $0x4c] sm:$0xf]
  %v388 = vld [vmem:[%s367 + $0x50] sm:$0xf]
  %v389 = vld [vmem:[%s367 + $0x54] sm:$0xf]
  %v390 = vld [vmem:[%s367 + $0x58] sm:$0xf]
  %v391 = vld [vmem:[%s367 + $0x5c] sm:$0xf]
  %v392 = vld [vmem:[%s367 + $0x60] sm:$0xf]
  %v393 = vld [vmem:[%s367 + $0x64] sm:$0xf]
  %v394 = vld [vmem:[%s367 + $0x68] sm:$0xf]
  %v395 = vld [vmem:[%s367 + $0x6c] sm:$0xf]
  %v396 = vld [vmem:[%s367 + $0x70] sm:$0xf]
  %v397 = vld [vmem:[%s367 + $0x74] sm:$0xf]
  %v398 = vld [vmem:[%s367 + $0x78] sm:$0xf]
  %v399 = vld [vmem:[%s367 + $0x7c] sm:$0xf]
  %v432 = vunpack.c.l.b16 %v368
  %v433 = vunpack.c.l.b16 %v369
  %v434 = vunpack.c.l.b16 %v370
  %v435 = vunpack.c.l.b16 %v371
  %v436 = vunpack.c.l.b16 %v372
  %v437 = vunpack.c.l.b16 %v373
  %v438 = vunpack.c.l.b16 %v374
  %v439 = vunpack.c.l.b16 %v375
  %v440 = vunpack.c.l.b16 %v376
  %v441 = vunpack.c.l.b16 %v377
  %v442 = vunpack.c.l.b16 %v378
  %v443 = vunpack.c.l.b16 %v379
  %v444 = vunpack.c.l.b16 %v380
  %v445 = vunpack.c.l.b16 %v381
  %v446 = vunpack.c.l.b16 %v382
  %v447 = vunpack.c.l.b16 %v383
  %v448 = vunpack.c.l.b16 %v384
  %v449 = vunpack.c.l.b16 %v385
  %v450 = vunpack.c.l.b16 %v386
  %v451 = vunpack.c.l.b16 %v387
  %v452 = vunpack.c.l.b16 %v388
  %v453 = vunpack.c.l.b16 %v389
  %v454 = vunpack.c.l.b16 %v390
  %v455 = vunpack.c.l.b16 %v391
  %v456 = vunpack.c.l.b16 %v392
  %v457 = vunpack.c.l.b16 %v393
  %v458 = vunpack.c.l.b16 %v394
  %v459 = vunpack.c.l.b16 %v395
  %v460 = vunpack.c.l.b16 %v396
  %v461 = vunpack.c.l.b16 %v397
  %v462 = vunpack.c.l.b16 %v398
  %v463 = vunpack.c.l.b16 %v399
  %v464 = vpack.c.b16 %v433, %v432
  %v465 = vpack.c.b16 %v435, %v434
  %v466 = vpack.c.b16 %v437, %v436
  %v467 = vpack.c.b16 %v439, %v438
  %v468 = vpack.c.b16 %v441, %v440
  %v469 = vpack.c.b16 %v443, %v442
  %v470 = vpack.c.b16 %v445, %v444
  %v471 = vpack.c.b16 %v447, %v446
  %v472 = vpack.c.b16 %v449, %v448
  %v473 = vpack.c.b16 %v451, %v450
  %v474 = vpack.c.b16 %v453, %v452
  %v475 = vpack.c.b16 %v455, %v454
  %v476 = vpack.c.b16 %v457, %v456
  %v477 = vpack.c.b16 %v459, %v458
  %v478 = vpack.c.b16 %v461, %v460
  %v479 = vpack.c.b16 %v463, %v462
  %496 = vmatpush.bf16.msra.mxu0 %v471
  %497 = vmatpush.bf16.msra.mxu0 %v470
  %498 = vmatpush.bf16.msra.mxu0 %v469
  %499 = vmatpush.bf16.msra.mxu0 %v468
  %500 = vmatpush.bf16.msra.mxu0 %v467
  %501 = vmatpush.bf16.msra.mxu0 %v466
  %502 = vmatpush.bf16.msra.mxu0 %v465
  %503 = vmatpush.bf16.msra.mxu0 %v464
  %504 = vmatmul.bf16.gmra.mxu0 %v69
  %v505 = vpop.f32.mrf.mxu0
  %v506 = vadd.f32 0.0, %v505
  %v507 = vpop.f32.mrf.mxu0
  %v508 = vadd.f32 0.0, %v507
  %509 = vdwg.mxu0
  %510 = vmatpush.bf16.msra.mxu0 %v479
  %511 = vmatpush.bf16.msra.mxu0 %v478
  %512 = vmatpush.bf16.msra.mxu0 %v477
  %513 = vmatpush.bf16.msra.mxu0 %v476
  %514 = vmatpush.bf16.msra.mxu0 %v475
  %515 = vmatpush.bf16.msra.mxu0 %v474
  %516 = vmatpush.bf16.msra.mxu0 %v473
  %517 = vmatpush.bf16.msra.mxu0 %v472
  %518 = vmatmul.bf16.gmra.mxu0 %v70
  %v519 = vpop.f32.mrf.mxu0
  %v520 = vadd.f32 %v506, %v519
  %v521 = vpop.f32.mrf.mxu0
  %v522 = vadd.f32 %v508, %v521
  %523 = vdwg.mxu0
  %v524 = vmax.f32 %v520, 0.0
  %v525 = vmax.f32 %v522, 0.0
  %v526 = vpack.c.bf16 %v524, %v524
  %v527 = vpack.c.bf16 %v525, %v525
  %s528 = scalar_lea.vmem [#allocation2], 16
  %529 = vst [vmem:[%s528] sm:$0xf] %v526
  %530 = vst [vmem:[%s528 + $0x4] sm:$0xf] %v527
  %s531 = scalar_lea.vmem %s0, 384
  %v532 = vld [vmem:[%s531] sm:$0xf]
  %v533 = vld [vmem:[%s531 + $0x4] sm:$0xf]
  %v534 = vld [vmem:[%s531 + $0x8] sm:$0xf]
  %v535 = vld [vmem:[%s531 + $0xc] sm:$0xf]
  %v536 = vld [vmem:[%s531 + $0x10] sm:$0xf]
  %v537 = vld [vmem:[%s531 + $0x14] sm:$0xf]
  %v538 = vld [vmem:[%s531 + $0x18] sm:$0xf]
  %v539 = vld [vmem:[%s531 + $0x1c] sm:$0xf]
  %v540 = vld [vmem:[%s531 + $0x20] sm:$0xf]
  %v541 = vld [vmem:[%s531 + $0x24] sm:$0xf]
  %v542 = vld [vmem:[%s531 + $0x28] sm:$0xf]
  %v543 = vld [vmem:[%s531 + $0x2c] sm:$0xf]
  %v544 = vld [vmem:[%s531 + $0x30] sm:$0xf]
  %v545 = vld [vmem:[%s531 + $0x34] sm:$0xf]
  %v546 = vld [vmem:[%s531 + $0x38] sm:$0xf]
  %v547 = vld [vmem:[%s531 + $0x3c] sm:$0xf]
  %v548 = vld [vmem:[%s531 + $0x40] sm:$0xf]
  %v549 = vld [vmem:[%s531 + $0x44] sm:$0xf]
  %v550 = vld [vmem:[%s531 + $0x48] sm:$0xf]
  %v551 = vld [vmem:[%s531 + $0x4c] sm:$0xf]
  %v552 = vld [vmem:[%s531 + $0x50] sm:$0xf]
  %v553 = vld [vmem:[%s531 + $0x54] sm:$0xf]
  %v554 = vld [vmem:[%s531 + $0x58] sm:$0xf]
  %v555 = vld [vmem:[%s531 + $0x5c] sm:$0xf]
  %v556 = vld [vmem:[%s531 + $0x60] sm:$0xf]
  %v557 = vld [vmem:[%s531 + $0x64] sm:$0xf]
  %v558 = vld [vmem:[%s531 + $0x68] sm:$0xf]
  %v559 = vld [vmem:[%s531 + $0x6c] sm:$0xf]
  %v560 = vld [vmem:[%s531 + $0x70] sm:$0xf]
  %v561 = vld [vmem:[%s531 + $0x74] sm:$0xf]
  %v562 = vld [vmem:[%s531 + $0x78] sm:$0xf]
  %v563 = vld [vmem:[%s531 + $0x7c] sm:$0xf]
  %v596 = vunpack.c.l.b16 %v532
  %v597 = vunpack.c.l.b16 %v533
  %v598 = vunpack.c.l.b16 %v534
  %v599 = vunpack.c.l.b16 %v535
  %v600 = vunpack.c.l.b16 %v536
  %v601 = vunpack.c.l.b16 %v537
  %v602 = vunpack.c.l.b16 %v538
  %v603 = vunpack.c.l.b16 %v539
  %v604 = vunpack.c.l.b16 %v540
  %v605 = vunpack.c.l.b16 %v541
  %v606 = vunpack.c.l.b16 %v542
  %v607 = vunpack.c.l.b16 %v543
  %v608 = vunpack.c.l.b16 %v544
  %v609 = vunpack.c.l.b16 %v545
  %v610 = vunpack.c.l.b16 %v546
  %v611 = vunpack.c.l.b16 %v547
  %v612 = vunpack.c.l.b16 %v548
  %v613 = vunpack.c.l.b16 %v549
  %v614 = vunpack.c.l.b16 %v550
  %v615 = vunpack.c.l.b16 %v551
  %v616 = vunpack.c.l.b16 %v552
  %v617 = vunpack.c.l.b16 %v553
  %v618 = vunpack.c.l.b16 %v554
  %v619 = vunpack.c.l.b16 %v555
  %v620 = vunpack.c.l.b16 %v556
  %v621 = vunpack.c.l.b16 %v557
  %v622 = vunpack.c.l.b16 %v558
  %v623 = vunpack.c.l.b16 %v559
  %v624 = vunpack.c.l.b16 %v560
  %v625 = vunpack.c.l.b16 %v561
  %v626 = vunpack.c.l.b16 %v562
  %v627 = vunpack.c.l.b16 %v563
  %v628 = vpack.c.b16 %v597, %v596
  %v629 = vpack.c.b16 %v599, %v598
  %v630 = vpack.c.b16 %v601, %v600
  %v631 = vpack.c.b16 %v603, %v602
  %v632 = vpack.c.b16 %v605, %v604
  %v633 = vpack.c.b16 %v607, %v606
  %v634 = vpack.c.b16 %v609, %v608
  %v635 = vpack.c.b16 %v611, %v610
  %v636 = vpack.c.b16 %v613, %v612
  %v637 = vpack.c.b16 %v615, %v614
  %v638 = vpack.c.b16 %v617, %v616
  %v639 = vpack.c.b16 %v619, %v618
  %v640 = vpack.c.b16 %v621, %v620
  %v641 = vpack.c.b16 %v623, %v622
  %v642 = vpack.c.b16 %v625, %v624
  %v643 = vpack.c.b16 %v627, %v626
  %660 = vmatpush.bf16.msra.mxu0 %v635
  %661 = vmatpush.bf16.msra.mxu0 %v634
  %662 = vmatpush.bf16.msra.mxu0 %v633
  %663 = vmatpush.bf16.msra.mxu0 %v632
  %664 = vmatpush.bf16.msra.mxu0 %v631
  %665 = vmatpush.bf16.msra.mxu0 %v630
  %666 = vmatpush.bf16.msra.mxu0 %v629
  %667 = vmatpush.bf16.msra.mxu0 %v628
  %668 = vmatmul.bf16.gmra.mxu0 %v69
  %v669 = vpop.f32.mrf.mxu0
  %v670 = vadd.f32 0.0, %v669
  %v671 = vpop.f32.mrf.mxu0
  %v672 = vadd.f32 0.0, %v671
  %673 = vdwg.mxu0
  %674 = vmatpush.bf16.msra.mxu0 %v643
  %675 = vmatpush.bf16.msra.mxu0 %v642
  %676 = vmatpush.bf16.msra.mxu0 %v641
  %677 = vmatpush.bf16.msra.mxu0 %v640
  %678 = vmatpush.bf16.msra.mxu0 %v639
  %679 = vmatpush.bf16.msra.mxu0 %v638
  %680 = vmatpush.bf16.msra.mxu0 %v637
  %681 = vmatpush.bf16.msra.mxu0 %v636
  %682 = vmatmul.bf16.gmra.mxu0 %v70
  %v683 = vpop.f32.mrf.mxu0
  %v684 = vadd.f32 %v670, %v683
  %v685 = vpop.f32.mrf.mxu0
  %v686 = vadd.f32 %v672, %v685
  %687 = vdwg.mxu0
  %v688 = vmax.f32 %v684, 0.0
  %v689 = vmax.f32 %v686, 0.0
  %v690 = vpack.c.bf16 %v688, %v688
  %v691 = vpack.c.bf16 %v689, %v689
  %s692 = scalar_lea.vmem [#allocation2], 24
  %693 = vst [vmem:[%s692] sm:$0xf] %v690
  %694 = vst [vmem:[%s692 + $0x4] sm:$0xf] %v691
  %s695 = scalar_lea.vmem %s0, 512
  %v696 = vld [vmem:[%s695] sm:$0xf]
  %v697 = vld [vmem:[%s695 + $0x4] sm:$0xf]
  %v698 = vld [vmem:[%s695 + $0x8] sm:$0xf]
  %v699 = vld [vmem:[%s695 + $0xc] sm:$0xf]
  %v700 = vld [vmem:[%s695 + $0x10] sm:$0xf]
  %v701 = vld [vmem:[%s695 + $0x14] sm:$0xf]
  %v702 = vld [vmem:[%s695 + $0x18] sm:$0xf]
  %v703 = vld [vmem:[%s695 + $0x1c] sm:$0xf]
  %v704 = vld [vmem:[%s695 + $0x20] sm:$0xf]
  %v705 = vld [vmem:[%s695 + $0x24] sm:$0xf]
  %v706 = vld [vmem:[%s695 + $0x28] sm:$0xf]
  %v707 = vld [vmem:[%s695 + $0x2c] sm:$0xf]
  %v708 = vld [vmem:[%s695 + $0x30] sm:$0xf]
  %v709 = vld [vmem:[%s695 + $0x34] sm:$0xf]
  %v710 = vld [vmem:[%s695 + $0x38] sm:$0xf]
  %v711 = vld [vmem:[%s695 + $0x3c] sm:$0xf]
  %v712 = vld [vmem:[%s695 + $0x40] sm:$0xf]
  %v713 = vld [vmem:[%s695 + $0x44] sm:$0xf]
  %v714 = vld [vmem:[%s695 + $0x48] sm:$0xf]
  %v715 = vld [vmem:[%s695 + $0x4c] sm:$0xf]
  %v716 = vld [vmem:[%s695 + $0x50] sm:$0xf]
  %v717 = vld [vmem:[%s695 + $0x54] sm:$0xf]
  %v718 = vld [vmem:[%s695 + $0x58] sm:$0xf]
  %v719 = vld [vmem:[%s695 + $0x5c] sm:$0xf]
  %v720 = vld [vmem:[%s695 + $0x60] sm:$0xf]
  %v721 = vld [vmem:[%s695 + $0x64] sm:$0xf]
  %v722 = vld [vmem:[%s695 + $0x68] sm:$0xf]
  %v723 = vld [vmem:[%s695 + $0x6c] sm:$0xf]
  %v724 = vld [vmem:[%s695 + $0x70] sm:$0xf]
  %v725 = vld [vmem:[%s695 + $0x74] sm:$0xf]
  %v726 = vld [vmem:[%s695 + $0x78] sm:$0xf]
  %v727 = vld [vmem:[%s695 + $0x7c] sm:$0xf]
  %v760 = vunpack.c.l.b16 %v696
  %v761 = vunpack.c.l.b16 %v697
  %v762 = vunpack.c.l.b16 %v698
  %v763 = vunpack.c.l.b16 %v699
  %v764 = vunpack.c.l.b16 %v700
  %v765 = vunpack.c.l.b16 %v701
  %v766 = vunpack.c.l.b16 %v702
  %v767 = vunpack.c.l.b16 %v703
  %v768 = vunpack.c.l.b16 %v704
  %v769 = vunpack.c.l.b16 %v705
  %v770 = vunpack.c.l.b16 %v706
  %v771 = vunpack.c.l.b16 %v707
  %v772 = vunpack.c.l.b16 %v708
  %v773 = vunpack.c.l.b16 %v709
  %v774 = vunpack.c.l.b16 %v710
  %v775 = vunpack.c.l.b16 %v711
  %v776 = vunpack.c.l.b16 %v712
  %v777 = vunpack.c.l.b16 %v713
  %v778 = vunpack.c.l.b16 %v714
  %v779 = vunpack.c.l.b16 %v715
  %v780 = vunpack.c.l.b16 %v716
  %v781 = vunpack.c.l.b16 %v717
  %v782 = vunpack.c.l.b16 %v718
  %v783 = vunpack.c.l.b16 %v719
  %v784 = vunpack.c.l.b16 %v720
  %v785 = vunpack.c.l.b16 %v721
  %v786 = vunpack.c.l.b16 %v722
  %v787 = vunpack.c.l.b16 %v723
  %v788 = vunpack.c.l.b16 %v724
  %v789 = vunpack.c.l.b16 %v725
  %v790 = vunpack.c.l.b16 %v726
  %v791 = vunpack.c.l.b16 %v727
  %v792 = vpack.c.b16 %v761, %v760
  %v793 = vpack.c.b16 %v763, %v762
  %v794 = vpack.c.b16 %v765, %v764
  %v795 = vpack.c.b16 %v767, %v766
  %v796 = vpack.c.b16 %v769, %v768
  %v797 = vpack.c.b16 %v771, %v770
  %v798 = vpack.c.b16 %v773, %v772
  %v799 = vpack.c.b16 %v775, %v774
  %v800 = vpack.c.b16 %v777, %v776
  %v801 = vpack.c.b16 %v779, %v778
  %v802 = vpack.c.b16 %v781, %v780
  %v803 = vpack.c.b16 %v783, %v782
  %v804 = vpack.c.b16 %v785, %v784
  %v805 = vpack.c.b16 %v787, %v786
  %v806 = vpack.c.b16 %v789, %v788
  %v807 = vpack.c.b16 %v791, %v790
  %824 = vmatpush.bf16.msra.mxu0 %v799
  %825 = vmatpush.bf16.msra.mxu0 %v798
  %826 = vmatpush.bf16.msra.mxu0 %v797
  %827 = vmatpush.bf16.msra.mxu0 %v796
  %828 = vmatpush.bf16.msra.mxu0 %v795
  %829 = vmatpush.bf16.msra.mxu0 %v794
  %830 = vmatpush.bf16.msra.mxu0 %v793
  %831 = vmatpush.bf16.msra.mxu0 %v792
  %832 = vmatmul.bf16.gmra.mxu0 %v69
  %v833 = vpop.f32.mrf.mxu0
  %v834 = vadd.f32 0.0, %v833
  %v835 = vpop.f32.mrf.mxu0
  %v836 = vadd.f32 0.0, %v835
  %837 = vdwg.mxu0
  %838 = vmatpush.bf16.msra.mxu0 %v807
  %839 = vmatpush.bf16.msra.mxu0 %v806
  %840 = vmatpush.bf16.msra.mxu0 %v805
  %841 = vmatpush.bf16.msra.mxu0 %v804
  %842 = vmatpush.bf16.msra.mxu0 %v803
  %843 = vmatpush.bf16.msra.mxu0 %v802
  %844 = vmatpush.bf16.msra.mxu0 %v801
  %845 = vmatpush.bf16.msra.mxu0 %v800
  %846 = vmatmul.bf16.gmra.mxu0 %v70
  %v847 = vpop.f32.mrf.mxu0
  %v848 = vadd.f32 %v834, %v847
  %v849 = vpop.f32.mrf.mxu0
  %v850 = vadd.f32 %v836, %v849
  %851 = vdwg.mxu0
  %v852 = vmax.f32 %v848, 0.0
  %v853 = vmax.f32 %v850, 0.0
  %v854 = vpack.c.bf16 %v852, %v852
  %v855 = vpack.c.bf16 %v853, %v853
  %s856 = scalar_lea.vmem [#allocation2], 32
  %857 = vst [vmem:[%s856] sm:$0xf] %v854
  %858 = vst [vmem:[%s856 + $0x4] sm:$0xf] %v855
  %s859 = scalar_lea.vmem %s0, 640
  %v860 = vld [vmem:[%s859] sm:$0xf]
  %v861 = vld [vmem:[%s859 + $0x4] sm:$0xf]
  %v862 = vld [vmem:[%s859 + $0x8] sm:$0xf]
  %v863 = vld [vmem:[%s859 + $0xc] sm:$0xf]
  %v864 = vld [vmem:[%s859 + $0x10] sm:$0xf]
  %v865 = vld [vmem:[%s859 + $0x14] sm:$0xf]
  %v866 = vld [vmem:[%s859 + $0x18] sm:$0xf]
  %v867 = vld [vmem:[%s859 + $0x1c] sm:$0xf]
  %v868 = vld [vmem:[%s859 + $0x20] sm:$0xf]
  %v869 = vld [vmem:[%s859 + $0x24] sm:$0xf]
  %v870 = vld [vmem:[%s859 + $0x28] sm:$0xf]
  %v871 = vld [vmem:[%s859 + $0x2c] sm:$0xf]
  %v872 = vld [vmem:[%s859 + $0x30] sm:$0xf]
  %v873 = vld [vmem:[%s859 + $0x34] sm:$0xf]
  %v874 = vld [vmem:[%s859 + $0x38] sm:$0xf]
  %v875 = vld [vmem:[%s859 + $0x3c] sm:$0xf]
  %v876 = vld [vmem:[%s859 + $0x40] sm:$0xf]
  %v877 = vld [vmem:[%s859 + $0x44] sm:$0xf]
  %v878 = vld [vmem:[%s859 + $0x48] sm:$0xf]
  %v879 = vld [vmem:[%s859 + $0x4c] sm:$0xf]
  %v880 = vld [vmem:[%s859 + $0x50] sm:$0xf]
  %v881 = vld [vmem:[%s859 + $0x54] sm:$0xf]
  %v882 = vld [vmem:[%s859 + $0x58] sm:$0xf]
  %v883 = vld [vmem:[%s859 + $0x5c] sm:$0xf]
  %v884 = vld [vmem:[%s859 + $0x60] sm:$0xf]
  %v885 = vld [vmem:[%s859 + $0x64] sm:$0xf]
  %v886 = vld [vmem:[%s859 + $0x68] sm:$0xf]
  %v887 = vld [vmem:[%s859 + $0x6c] sm:$0xf]
  %v888 = vld [vmem:[%s859 + $0x70] sm:$0xf]
  %v889 = vld [vmem:[%s859 + $0x74] sm:$0xf]
  %v890 = vld [vmem:[%s859 + $0x78] sm:$0xf]
  %v891 = vld [vmem:[%s859 + $0x7c] sm:$0xf]
  %v924 = vunpack.c.l.b16 %v860
  %v925 = vunpack.c.l.b16 %v861
  %v926 = vunpack.c.l.b16 %v862
  %v927 = vunpack.c.l.b16 %v863
  %v928 = vunpack.c.l.b16 %v864
  %v929 = vunpack.c.l.b16 %v865
  %v930 = vunpack.c.l.b16 %v866
  %v931 = vunpack.c.l.b16 %v867
  %v932 = vunpack.c.l.b16 %v868
  %v933 = vunpack.c.l.b16 %v869
  %v934 = vunpack.c.l.b16 %v870
  %v935 = vunpack.c.l.b16 %v871
  %v936 = vunpack.c.l.b16 %v872
  %v937 = vunpack.c.l.b16 %v873
  %v938 = vunpack.c.l.b16 %v874
  %v939 = vunpack.c.l.b16 %v875
  %v940 = vunpack.c.l.b16 %v876
  %v941 = vunpack.c.l.b16 %v877
  %v942 = vunpack.c.l.b16 %v878
  %v943 = vunpack.c.l.b16 %v879
  %v944 = vunpack.c.l.b16 %v880
  %v945 = vunpack.c.l.b16 %v881
  %v946 = vunpack.c.l.b16 %v882
  %v947 = vunpack.c.l.b16 %v883
  %v948 = vunpack.c.l.b16 %v884
  %v949 = vunpack.c.l.b16 %v885
  %v950 = vunpack.c.l.b16 %v886
  %v951 = vunpack.c.l.b16 %v887
  %v952 = vunpack.c.l.b16 %v888
  %v953 = vunpack.c.l.b16 %v889
  %v954 = vunpack.c.l.b16 %v890
  %v955 = vunpack.c.l.b16 %v891
  %v956 = vpack.c.b16 %v925, %v924
  %v957 = vpack.c.b16 %v927, %v926
  %v958 = vpack.c.b16 %v929, %v928
  %v959 = vpack.c.b16 %v931, %v930
  %v960 = vpack.c.b16 %v933, %v932
  %v961 = vpack.c.b16 %v935, %v934
  %v962 = vpack.c.b16 %v937, %v936
  %v963 = vpack.c.b16 %v939, %v938
  %v964 = vpack.c.b16 %v941, %v940
  %v965 = vpack.c.b16 %v943, %v942
  %v966 = vpack.c.b16 %v945, %v944
  %v967 = vpack.c.b16 %v947, %v946
  %v968 = vpack.c.b16 %v949, %v948
  %v969 = vpack.c.b16 %v951, %v950
  %v970 = vpack.c.b16 %v953, %v952
  %v971 = vpack.c.b16 %v955, %v954
  %988 = vmatpush.bf16.msra.mxu0 %v963
  %989 = vmatpush.bf16.msra.mxu0 %v962
  %990 = vmatpush.bf16.msra.mxu0 %v961
  %991 = vmatpush.bf16.msra.mxu0 %v960
  %992 = vmatpush.bf16.msra.mxu0 %v959
  %993 = vmatpush.bf16.msra.mxu0 %v958
  %994 = vmatpush.bf16.msra.mxu0 %v957
  %995 = vmatpush.bf16.msra.mxu0 %v956
  %996 = vmatmul.bf16.gmra.mxu0 %v69
  %v997 = vpop.f32.mrf.mxu0
  %v998 = vadd.f32 0.0, %v997
  %v999 = vpop.f32.mrf.mxu0
  %v1000 = vadd.f32 0.0, %v999
  %1001 = vdwg.mxu0
  %1002 = vmatpush.bf16.msra.mxu0 %v971
  %1003 = vmatpush.bf16.msra.mxu0 %v970
  %1004 = vmatpush.bf16.msra.mxu0 %v969
  %1005 = vmatpush.bf16.msra.mxu0 %v968
  %1006 = vmatpush.bf16.msra.mxu0 %v967
  %1007 = vmatpush.bf16.msra.mxu0 %v966
  %1008 = vmatpush.bf16.msra.mxu0 %v965
  %1009 = vmatpush.bf16.msra.mxu0 %v964
  %1010 = vmatmul.bf16.gmra.mxu0 %v70
  %v1011 = vpop.f32.mrf.mxu0
  %v1012 = vadd.f32 %v998, %v1011
  %v1013 = vpop.f32.mrf.mxu0
  %v1014 = vadd.f32 %v1000, %v1013
  %1015 = vdwg.mxu0
  %v1016 = vmax.f32 %v1012, 0.0
  %v1017 = vmax.f32 %v1014, 0.0
  %v1018 = vpack.c.bf16 %v1016, %v1016
  %v1019 = vpack.c.bf16 %v1017, %v1017
  %s1020 = scalar_lea.vmem [#allocation2], 40
  %1021 = vst [vmem:[%s1020] sm:$0xf] %v1018
  %1022 = vst [vmem:[%s1020 + $0x4] sm:$0xf] %v1019
  %s1023 = scalar_lea.vmem %s0, 768
  %v1024 = vld [vmem:[%s1023] sm:$0xf]
  %v1025 = vld [vmem:[%s1023 + $0x4] sm:$0xf]
  %v1026 = vld [vmem:[%s1023 + $0x8] sm:$0xf]
  %v1027 = vld [vmem:[%s1023 + $0xc] sm:$0xf]
  %v1028 = vld [vmem:[%s1023 + $0x10] sm:$0xf]
  %v1029 = vld [vmem:[%s1023 + $0x14] sm:$0xf]
  %v1030 = vld [vmem:[%s1023 + $0x18] sm:$0xf]
  %v1031 = vld [vmem:[%s1023 + $0x1c] sm:$0xf]
  %v1032 = vld [vmem:[%s1023 + $0x20] sm:$0xf]
  %v1033 = vld [vmem:[%s1023 + $0x24] sm:$0xf]
  %v1034 = vld [vmem:[%s1023 + $0x28] sm:$0xf]
  %v1035 = vld [vmem:[%s1023 + $0x2c] sm:$0xf]
  %v1036 = vld [vmem:[%s1023 + $0x30] sm:$0xf]
  %v1037 = vld [vmem:[%s1023 + $0x34] sm:$0xf]
  %v1038 = vld [vmem:[%s1023 + $0x38] sm:$0xf]
  %v1039 = vld [vmem:[%s1023 + $0x3c] sm:$0xf]
  %v1040 = vld [vmem:[%s1023 + $0x40] sm:$0xf]
  %v1041 = vld [vmem:[%s1023 + $0x44] sm:$0xf]
  %v1042 = vld [vmem:[%s1023 + $0x48] sm:$0xf]
  %v1043 = vld [vmem:[%s1023 + $0x4c] sm:$0xf]
  %v1044 = vld [vmem:[%s1023 + $0x50] sm:$0xf]
  %v1045 = vld [vmem:[%s1023 + $0x54] sm:$0xf]
  %v1046 = vld [vmem:[%s1023 + $0x58] sm:$0xf]
  %v1047 = vld [vmem:[%s1023 + $0x5c] sm:$0xf]
  %v1048 = vld [vmem:[%s1023 + $0x60] sm:$0xf]
  %v1049 = vld [vmem:[%s1023 + $0x64] sm:$0xf]
  %v1050 = vld [vmem:[%s1023 + $0x68] sm:$0xf]
  %v1051 = vld [vmem:[%s1023 + $0x6c] sm:$0xf]
  %v1052 = vld [vmem:[%s1023 + $0x70] sm:$0xf]
  %v1053 = vld [vmem:[%s1023 + $0x74] sm:$0xf]
  %v1054 = vld [vmem:[%s1023 + $0x78] sm:$0xf]
  %v1055 = vld [vmem:[%s1023 + $0x7c] sm:$0xf]
  %v1088 = vunpack.c.l.b16 %v1024
  %v1089 = vunpack.c.l.b16 %v1025
  %v1090 = vunpack.c.l.b16 %v1026
  %v1091 = vunpack.c.l.b16 %v1027
  %v1092 = vunpack.c.l.b16 %v1028
  %v1093 = vunpack.c.l.b16 %v1029
  %v1094 = vunpack.c.l.b16 %v1030
  %v1095 = vunpack.c.l.b16 %v1031
  %v1096 = vunpack.c.l.b16 %v1032
  %v1097 = vunpack.c.l.b16 %v1033
  %v1098 = vunpack.c.l.b16 %v1034
  %v1099 = vunpack.c.l.b16 %v1035
  %v1100 = vunpack.c.l.b16 %v1036
  %v1101 = vunpack.c.l.b16 %v1037
  %v1102 = vunpack.c.l.b16 %v1038
  %v1103 = vunpack.c.l.b16 %v1039
  %v1104 = vunpack.c.l.b16 %v1040
  %v1105 = vunpack.c.l.b16 %v1041
  %v1106 = vunpack.c.l.b16 %v1042
  %v1107 = vunpack.c.l.b16 %v1043
  %v1108 = vunpack.c.l.b16 %v1044
  %v1109 = vunpack.c.l.b16 %v1045
  %v1110 = vunpack.c.l.b16 %v1046
  %v1111 = vunpack.c.l.b16 %v1047
  %v1112 = vunpack.c.l.b16 %v1048
  %v1113 = vunpack.c.l.b16 %v1049
  %v1114 = vunpack.c.l.b16 %v1050
  %v1115 = vunpack.c.l.b16 %v1051
  %v1116 = vunpack.c.l.b16 %v1052
  %v1117 = vunpack.c.l.b16 %v1053
  %v1118 = vunpack.c.l.b16 %v1054
  %v1119 = vunpack.c.l.b16 %v1055
  %v1120 = vpack.c.b16 %v1089, %v1088
  %v1121 = vpack.c.b16 %v1091, %v1090
  %v1122 = vpack.c.b16 %v1093, %v1092
  %v1123 = vpack.c.b16 %v1095, %v1094
  %v1124 = vpack.c.b16 %v1097, %v1096
  %v1125 = vpack.c.b16 %v1099, %v1098
  %v1126 = vpack.c.b16 %v1101, %v1100
  %v1127 = vpack.c.b16 %v1103, %v1102
  %v1128 = vpack.c.b16 %v1105, %v1104
  %v1129 = vpack.c.b16 %v1107, %v1106
  %v1130 = vpack.c.b16 %v1109, %v1108
  %v1131 = vpack.c.b16 %v1111, %v1110
  %v1132 = vpack.c.b16 %v1113, %v1112
  %v1133 = vpack.c.b16 %v1115, %v1114
  %v1134 = vpack.c.b16 %v1117, %v1116
  %v1135 = vpack.c.b16 %v1119, %v1118
  %1152 = vmatpush.bf16.msra.mxu0 %v1127
  %1153 = vmatpush.bf16.msra.mxu0 %v1126
  %1154 = vmatpush.bf16.msra.mxu0 %v1125
  %1155 = vmatpush.bf16.msra.mxu0 %v1124
  %1156 = vmatpush.bf16.msra.mxu0 %v1123
  %1157 = vmatpush.bf16.msra.mxu0 %v1122
  %1158 = vmatpush.bf16.msra.mxu0 %v1121
  %1159 = vmatpush.bf16.msra.mxu0 %v1120
  %1160 = vmatmul.bf16.gmra.mxu0 %v69
  %v1161 = vpop.f32.mrf.mxu0
  %v1162 = vadd.f32 0.0, %v1161
  %v1163 = vpop.f32.mrf.mxu0
  %v1164 = vadd.f32 0.0, %v1163
  %1165 = vdwg.mxu0
  %1166 = vmatpush.bf16.msra.mxu0 %v1135
  %1167 = vmatpush.bf16.msra.mxu0 %v1134
  %1168 = vmatpush.bf16.msra.mxu0 %v1133
  %1169 = vmatpush.bf16.msra.mxu0 %v1132
  %1170 = vmatpush.bf16.msra.mxu0 %v1131
  %1171 = vmatpush.bf16.msra.mxu0 %v1130
  %1172 = vmatpush.bf16.msra.mxu0 %v1129
  %1173 = vmatpush.bf16.msra.mxu0 %v1128
  %1174 = vmatmul.bf16.gmra.mxu0 %v70
  %v1175 = vpop.f32.mrf.mxu0
  %v1176 = vadd.f32 %v1162, %v1175
  %v1177 = vpop.f32.mrf.mxu0
  %v1178 = vadd.f32 %v1164, %v1177
  %1179 = vdwg.mxu0
  %v1180 = vmax.f32 %v1176, 0.0
  %v1181 = vmax.f32 %v1178, 0.0
  %v1182 = vpack.c.bf16 %v1180, %v1180
  %v1183 = vpack.c.bf16 %v1181, %v1181
  %s1184 = scalar_lea.vmem [#allocation2], 48
  %1185 = vst [vmem:[%s1184] sm:$0xf] %v1182
  %1186 = vst [vmem:[%s1184 + $0x4] sm:$0xf] %v1183
  %s1187 = scalar_lea.vmem %s0, 896
  %v1188 = vld [vmem:[%s1187] sm:$0xf]
  %v1189 = vld [vmem:[%s1187 + $0x4] sm:$0xf]
  %v1190 = vld [vmem:[%s1187 + $0x8] sm:$0xf]
  %v1191 = vld [vmem:[%s1187 + $0xc] sm:$0xf]
  %v1192 = vld [vmem:[%s1187 + $0x10] sm:$0xf]
  %v1193 = vld [vmem:[%s1187 + $0x14] sm:$0xf]
  %v1194 = vld [vmem:[%s1187 + $0x18] sm:$0xf]
  %v1195 = vld [vmem:[%s1187 + $0x1c] sm:$0xf]
  %v1196 = vld [vmem:[%s1187 + $0x20] sm:$0xf]
  %v1197 = vld [vmem:[%s1187 + $0x24] sm:$0xf]
  %v1198 = vld [vmem:[%s1187 + $0x28] sm:$0xf]
  %v1199 = vld [vmem:[%s1187 + $0x2c] sm:$0xf]
  %v1200 = vld [vmem:[%s1187 + $0x30] sm:$0xf]
  %v1201 = vld [vmem:[%s1187 + $0x34] sm:$0xf]
  %v1202 = vld [vmem:[%s1187 + $0x38] sm:$0xf]
  %v1203 = vld [vmem:[%s1187 + $0x3c] sm:$0xf]
  %v1204 = vld [vmem:[%s1187 + $0x40] sm:$0xf]
  %v1205 = vld [vmem:[%s1187 + $0x44] sm:$0xf]
  %v1206 = vld [vmem:[%s1187 + $0x48] sm:$0xf]
  %v1207 = vld [vmem:[%s1187 + $0x4c] sm:$0xf]
  %v1208 = vld [vmem:[%s1187 + $0x50] sm:$0xf]
  %v1209 = vld [vmem:[%s1187 + $0x54] sm:$0xf]
  %v1210 = vld [vmem:[%s1187 + $0x58] sm:$0xf]
  %v1211 = vld [vmem:[%s1187 + $0x5c] sm:$0xf]
  %v1212 = vld [vmem:[%s1187 + $0x60] sm:$0xf]
  %v1213 = vld [vmem:[%s1187 + $0x64] sm:$0xf]
  %v1214 = vld [vmem:[%s1187 + $0x68] sm:$0xf]
  %v1215 = vld [vmem:[%s1187 + $0x6c] sm:$0xf]
  %v1216 = vld [vmem:[%s1187 + $0x70] sm:$0xf]
  %v1217 = vld [vmem:[%s1187 + $0x74] sm:$0xf]
  %v1218 = vld [vmem:[%s1187 + $0x78] sm:$0xf]
  %v1219 = vld [vmem:[%s1187 + $0x7c] sm:$0xf]
  %v1252 = vunpack.c.l.b16 %v1188
  %v1253 = vunpack.c.l.b16 %v1189
  %v1254 = vunpack.c.l.b16 %v1190
  %v1255 = vunpack.c.l.b16 %v1191
  %v1256 = vunpack.c.l.b16 %v1192
  %v1257 = vunpack.c.l.b16 %v1193
  %v1258 = vunpack.c.l.b16 %v1194
  %v1259 = vunpack.c.l.b16 %v1195
  %v1260 = vunpack.c.l.b16 %v1196
  %v1261 = vunpack.c.l.b16 %v1197
  %v1262 = vunpack.c.l.b16 %v1198
  %v1263 = vunpack.c.l.b16 %v1199
  %v1264 = vunpack.c.l.b16 %v1200
  %v1265 = vunpack.c.l.b16 %v1201
  %v1266 = vunpack.c.l.b16 %v1202
  %v1267 = vunpack.c.l.b16 %v1203
  %v1268 = vunpack.c.l.b16 %v1204
  %v1269 = vunpack.c.l.b16 %v1205
  %v1270 = vunpack.c.l.b16 %v1206
  %v1271 = vunpack.c.l.b16 %v1207
  %v1272 = vunpack.c.l.b16 %v1208
  %v1273 = vunpack.c.l.b16 %v1209
  %v1274 = vunpack.c.l.b16 %v1210
  %v1275 = vunpack.c.l.b16 %v1211
  %v1276 = vunpack.c.l.b16 %v1212
  %v1277 = vunpack.c.l.b16 %v1213
  %v1278 = vunpack.c.l.b16 %v1214
  %v1279 = vunpack.c.l.b16 %v1215
  %v1280 = vunpack.c.l.b16 %v1216
  %v1281 = vunpack.c.l.b16 %v1217
  %v1282 = vunpack.c.l.b16 %v1218
  %v1283 = vunpack.c.l.b16 %v1219
  %v1284 = vpack.c.b16 %v1253, %v1252
  %v1285 = vpack.c.b16 %v1255, %v1254
  %v1286 = vpack.c.b16 %v1257, %v1256
  %v1287 = vpack.c.b16 %v1259, %v1258
  %v1288 = vpack.c.b16 %v1261, %v1260
  %v1289 = vpack.c.b16 %v1263, %v1262
  %v1290 = vpack.c.b16 %v1265, %v1264
  %v1291 = vpack.c.b16 %v1267, %v1266
  %v1292 = vpack.c.b16 %v1269, %v1268
  %v1293 = vpack.c.b16 %v1271, %v1270
  %v1294 = vpack.c.b16 %v1273, %v1272
  %v1295 = vpack.c.b16 %v1275, %v1274
  %v1296 = vpack.c.b16 %v1277, %v1276
  %v1297 = vpack.c.b16 %v1279, %v1278
  %v1298 = vpack.c.b16 %v1281, %v1280
  %v1299 = vpack.c.b16 %v1283, %v1282
  %1316 = vmatpush.bf16.msra.mxu0 %v1291
  %1317 = vmatpush.bf16.msra.mxu0 %v1290
  %1318 = vmatpush.bf16.msra.mxu0 %v1289
  %1319 = vmatpush.bf16.msra.mxu0 %v1288
  %1320 = vmatpush.bf16.msra.mxu0 %v1287
  %1321 = vmatpush.bf16.msra.mxu0 %v1286
  %1322 = vmatpush.bf16.msra.mxu0 %v1285
  %1323 = vmatpush.bf16.msra.mxu0 %v1284
  %1324 = vmatmul.bf16.gmra.mxu0 %v69
  %v1325 = vpop.f32.mrf.mxu0
  %v1326 = vadd.f32 0.0, %v1325
  %v1327 = vpop.f32.mrf.mxu0
  %v1328 = vadd.f32 0.0, %v1327
  %1329 = vdwg.mxu0
  %1330 = vmatpush.bf16.msra.mxu0 %v1299
  %1331 = vmatpush.bf16.msra.mxu0 %v1298
  %1332 = vmatpush.bf16.msra.mxu0 %v1297
  %1333 = vmatpush.bf16.msra.mxu0 %v1296
  %1334 = vmatpush.bf16.msra.mxu0 %v1295
  %1335 = vmatpush.bf16.msra.mxu0 %v1294
  %1336 = vmatpush.bf16.msra.mxu0 %v1293
  %1337 = vmatpush.bf16.msra.mxu0 %v1292
  %1338 = vmatmul.bf16.gmra.mxu0 %v70
  %v1339 = vpop.f32.mrf.mxu0
  %v1340 = vadd.f32 %v1326, %v1339
  %v1341 = vpop.f32.mrf.mxu0
  %v1342 = vadd.f32 %v1328, %v1341
  %1343 = vdwg.mxu0
  %v1344 = vmax.f32 %v1340, 0.0
  %v1345 = vmax.f32 %v1342, 0.0
  %v1346 = vpack.c.bf16 %v1344, %v1344
  %v1347 = vpack.c.bf16 %v1345, %v1345
  %s1348 = scalar_lea.vmem [#allocation2], 56
  %1349 = vst [vmem:[%s1348] sm:$0xf] %v1346
  %1350 = vst [vmem:[%s1348 + $0x4] sm:$0xf] %v1347
  %v1351 = vld [vmem:[#allocation2] sm:$0x1]
  %v1352 = vld [vmem:[#allocation2 + $0x8] sm:$0x1]
  %v1353 = vld [vmem:[#allocation2 + $0x10] sm:$0x1]
  %v1354 = vld [vmem:[#allocation2 + $0x18] sm:$0x1]
  %v1355 = vld [vmem:[#allocation2 + $0x20] sm:$0x1]
  %v1356 = vld [vmem:[#allocation2 + $0x28] sm:$0x1]
  %v1357 = vld [vmem:[#allocation2 + $0x30] sm:$0x1]
  %v1358 = vld [vmem:[#allocation2 + $0x38] sm:$0x1]
  %v1359 = vld [vmem:[%s2] sm:$0xf]
  %v1360 = vld [vmem:[%s2 + $0x4] sm:$0xf]
  %v1361 = vld [vmem:[%s2 + $0x8] sm:$0xf]
  %v1362 = vld [vmem:[%s2 + $0xc] sm:$0xf]
  %v1363 = vld [vmem:[%s2 + $0x10] sm:$0xf]
  %v1364 = vld [vmem:[%s2 + $0x14] sm:$0xf]
  %v1365 = vld [vmem:[%s2 + $0x18] sm:$0xf]
  %v1366 = vld [vmem:[%s2 + $0x1c] sm:$0xf]
  %v1367 = vld [vmem:[%s2 + $0x20] sm:$0xf]
  %v1368 = vld [vmem:[%s2 + $0x24] sm:$0xf]
  %v1369 = vld [vmem:[%s2 + $0x28] sm:$0xf]
  %v1370 = vld [vmem:[%s2 + $0x2c] sm:$0xf]
  %v1371 = vld [vmem:[%s2 + $0x30] sm:$0xf]
  %v1372 = vld [vmem:[%s2 + $0x34] sm:$0xf]
  %v1373 = vld [vmem:[%s2 + $0x38] sm:$0xf]
  %v1374 = vld [vmem:[%s2 + $0x3c] sm:$0xf]
  %s1375 = scalar_lea.vmem %s2, 64
  %v1376 = vld [vmem:[%s1375] sm:$0xf]
  %v1377 = vld [vmem:[%s1375 + $0x4] sm:$0xf]
  %v1378 = vld [vmem:[%s1375 + $0x8] sm:$0xf]
  %v1379 = vld [vmem:[%s1375 + $0xc] sm:$0xf]
  %v1380 = vld [vmem:[%s1375 + $0x10] sm:$0xf]
  %v1381 = vld [vmem:[%s1375 + $0x14] sm:$0xf]
  %v1382 = vld [vmem:[%s1375 + $0x18] sm:$0xf]
  %v1383 = vld [vmem:[%s1375 + $0x1c] sm:$0xf]
  %v1384 = vld [vmem:[%s1375 + $0x20] sm:$0xf]
  %v1385 = vld [vmem:[%s1375 + $0x24] sm:$0xf]
  %v1386 = vld [vmem:[%s1375 + $0x28] sm:$0xf]
  %v1387 = vld [vmem:[%s1375 + $0x2c] sm:$0xf]
  %v1388 = vld [vmem:[%s1375 + $0x30] sm:$0xf]
  %v1389 = vld [vmem:[%s1375 + $0x34] sm:$0xf]
  %v1390 = vld [vmem:[%s1375 + $0x38] sm:$0xf]
  %v1391 = vld [vmem:[%s1375 + $0x3c] sm:$0xf]
  %v1400 = vunpack.c.l.b16 %v1351
  %v1401 = vunpack.c.l.b16 %v1352
  %v1402 = vunpack.c.l.b16 %v1353
  %v1403 = vunpack.c.l.b16 %v1354
  %v1404 = vunpack.c.l.b16 %v1355
  %v1405 = vunpack.c.l.b16 %v1356
  %v1406 = vunpack.c.l.b16 %v1357
  %v1407 = vunpack.c.l.b16 %v1358
  %v1408 = vpack.c.b16 %v1400, %v1400
  %v1409 = vpack.c.b16 %v1401, %v1401
  %v1410 = vpack.c.b16 %v1402, %v1402
  %v1411 = vpack.c.b16 %v1403, %v1403
  %v1412 = vpack.c.b16 %v1404, %v1404
  %v1413 = vpack.c.b16 %v1405, %v1405
  %v1414 = vpack.c.b16 %v1406, %v1406
  %v1415 = vpack.c.b16 %v1407, %v1407
  %v1416 = vunpack.c.l.b16 %v1408
  %v1417 = vunpack.c.l.b16 %v1409
  %v1418 = vunpack.c.l.b16 %v1410
  %v1419 = vunpack.c.l.b16 %v1411
  %v1420 = vunpack.c.l.b16 %v1412
  %v1421 = vunpack.c.l.b16 %v1413
  %v1422 = vunpack.c.l.b16 %v1414
  %v1423 = vunpack.c.l.b16 %v1415
  %v1424 = vrot.slane %v1416, 1
  %vm1425 = vcmask 1041409
  %v1426 = vsel %vm1425, %v1417, %v1424
  %v1427 = vrot.slane %v1418, 7
  %vm1428 = vcmask 1042434
  %v1429 = vsel %vm1428, %v1427, %v1426
  %v1430 = vrot.slane %v1419, 6
  %vm1431 = vcmask 1043459
  %v1432 = vsel %vm1431, %v1430, %v1429
  %v1433 = vrot.slane %v1420, 5
  %vm1434 = vcmask 1044484
  %v1435 = vsel %vm1434, %v1433, %v1432
  %v1436 = vrot.slane %v1421, 4
  %vm1437 = vcmask 1045509
  %v1438 = vsel %vm1437, %v1436, %v1435
  %v1439 = vrot.slane %v1422, 3
  %vm1440 = vcmask 1046534
  %v1441 = vsel %vm1440, %v1439, %v1438
  %v1442 = vrot.slane %v1423, 2
  %vm1443 = vcmask 1047559
  %v1444 = vsel %vm1443, %v1442, %v1441
  %v1445 = vpack.c.b16 %v1444, %v1444
  %v1463 = vunpack.c.l.b16 %v1376
  %v1464 = vunpack.c.l.b16 %v1377
  %v1465 = vunpack.c.l.b16 %v1378
  %v1466 = vunpack.c.l.b16 %v1379
  %v1467 = vunpack.c.l.b16 %v1380
  %v1468 = vunpack.c.l.b16 %v1381
  %v1469 = vunpack.c.l.b16 %v1382
  %v1470 = vunpack.c.l.b16 %v1383
  %v1471 = vunpack.c.l.b16 %v1384
  %v1472 = vunpack.c.l.b16 %v1385
  %v1473 = vunpack.c.l.b16 %v1386
  %v1474 = vunpack.c.l.b16 %v1387
  %v1475 = vunpack.c.l.b16 %v1388
  %v1476 = vunpack.c.l.b16 %v1389
  %v1477 = vunpack.c.l.b16 %v1390
  %v1478 = vunpack.c.l.b16 %v1391
  %v1479 = vpack.c.b16 %v1464, %v1463
  %v1480 = vpack.c.b16 %v1466, %v1465
  %v1481 = vpack.c.b16 %v1468, %v1467
  %v1482 = vpack.c.b16 %v1470, %v1469
  %v1483 = vpack.c.b16 %v1472, %v1471
  %v1484 = vpack.c.b16 %v1474, %v1473
  %v1485 = vpack.c.b16 %v1476, %v1475
  %v1486 = vpack.c.b16 %v1478, %v1477
  %1495 = vmatpush.bf16.msra.mxu0 %v1486
  %1496 = vmatpush.bf16.msra.mxu0 %v1485
  %1497 = vmatpush.bf16.msra.mxu0 %v1484
  %1498 = vmatpush.bf16.msra.mxu0 %v1483
  %1499 = vmatpush.bf16.msra.mxu0 %v1482
  %1500 = vmatpush.bf16.msra.mxu0 %v1481
  %1501 = vmatpush.bf16.msra.mxu0 %v1480
  %1502 = vmatpush.bf16.msra.mxu0 %v1479
  %1503 = vmatmul.bf16.gmra.mxu0 %v1445
  %v1504 = vpop.f32.mrf.mxu0
  %v1505 = vadd.f32 0.0, %v1504
  %v1506 = vpop.f32.mrf.mxu0
  %1507 = vdwg.mxu0
  %v1508 = vrot.slane %v1417, 7
  %v1509 = vsel %vm1425, %v1508, %v1416
  %v1510 = vrot.slane %v1418, 6
  %v1511 = vsel %vm1428, %v1510, %v1509
  %v1512 = vrot.slane %v1419, 5
  %v1513 = vsel %vm1431, %v1512, %v1511
  %v1514 = vrot.slane %v1420, 4
  %v1515 = vsel %vm1434, %v1514, %v1513
  %v1516 = vrot.slane %v1421, 3
  %v1517 = vsel %vm1437, %v1516, %v1515
  %v1518 = vrot.slane %v1422, 2
  %v1519 = vsel %vm1440, %v1518, %v1517
  %v1520 = vrot.slane %v1423, 1
  %v1521 = vsel %vm1443, %v1520, %v1519
  %v1522 = vpack.c.b16 %v1521, %v1521
  %v1540 = vunpack.c.l.b16 %v1359
  %v1541 = vunpack.c.l.b16 %v1360
  %v1542 = vunpack.c.l.b16 %v1361
  %v1543 = vunpack.c.l.b16 %v1362
  %v1544 = vunpack.c.l.b16 %v1363
  %v1545 = vunpack.c.l.b16 %v1364
  %v1546 = vunpack.c.l.b16 %v1365
  %v1547 = vunpack.c.l.b16 %v1366
  %v1548 = vunpack.c.l.b16 %v1367
  %v1549 = vunpack.c.l.b16 %v1368
  %v1550 = vunpack.c.l.b16 %v1369
  %v1551 = vunpack.c.l.b16 %v1370
  %v1552 = vunpack.c.l.b16 %v1371
  %v1553 = vunpack.c.l.b16 %v1372
  %v1554 = vunpack.c.l.b16 %v1373
  %v1555 = vunpack.c.l.b16 %v1374
  %v1556 = vpack.c.b16 %v1541, %v1540
  %v1557 = vpack.c.b16 %v1543, %v1542
  %v1558 = vpack.c.b16 %v1545, %v1544
  %v1559 = vpack.c.b16 %v1547, %v1546
  %v1560 = vpack.c.b16 %v1549, %v1548
  %v1561 = vpack.c.b16 %v1551, %v1550
  %v1562 = vpack.c.b16 %v1553, %v1552
  %v1563 = vpack.c.b16 %v1555, %v1554
  %1572 = vmatpush.bf16.msra.mxu0 %v1563
  %1573 = vmatpush.bf16.msra.mxu0 %v1562
  %1574 = vmatpush.bf16.msra.mxu0 %v1561
  %1575 = vmatpush.bf16.msra.mxu0 %v1560
  %1576 = vmatpush.bf16.msra.mxu0 %v1559
  %1577 = vmatpush.bf16.msra.mxu0 %v1558
  %1578 = vmatpush.bf16.msra.mxu0 %v1557
  %1579 = vmatpush.bf16.msra.mxu0 %v1556
  %1580 = vmatmul.bf16.gmra.mxu0 %v1522
  %v1581 = vpop.f32.mrf.mxu0
  %v1582 = vadd.f32 %v1505, %v1581
  %v1583 = vpop.f32.mrf.mxu0
  %1584 = vdwg.mxu0
  %v1585 = vld [vmem:[#allocation2] sm:$0x2]
  %v1586 = vld [vmem:[#allocation2 + $0x8] sm:$0x2]
  %v1587 = vld [vmem:[#allocation2 + $0x10] sm:$0x2]
  %v1588 = vld [vmem:[#allocation2 + $0x18] sm:$0x2]
  %v1589 = vld [vmem:[#allocation2 + $0x20] sm:$0x2]
  %v1590 = vld [vmem:[#allocation2 + $0x28] sm:$0x2]
  %v1591 = vld [vmem:[#allocation2 + $0x30] sm:$0x2]
  %v1592 = vld [vmem:[#allocation2 + $0x38] sm:$0x2]
  %s1593 = scalar_lea.vmem %s2, 128
  %v1594 = vld [vmem:[%s1593] sm:$0xf]
  %v1595 = vld [vmem:[%s1593 + $0x4] sm:$0xf]
  %v1596 = vld [vmem:[%s1593 + $0x8] sm:$0xf]
  %v1597 = vld [vmem:[%s1593 + $0xc] sm:$0xf]
  %v1598 = vld [vmem:[%s1593 + $0x10] sm:$0xf]
  %v1599 = vld [vmem:[%s1593 + $0x14] sm:$0xf]
  %v1600 = vld [vmem:[%s1593 + $0x18] sm:$0xf]
  %v1601 = vld [vmem:[%s1593 + $0x1c] sm:$0xf]
  %v1602 = vld [vmem:[%s1593 + $0x20] sm:$0xf]
  %v1603 = vld [vmem:[%s1593 + $0x24] sm:$0xf]
  %v1604 = vld [vmem:[%s1593 + $0x28] sm:$0xf]
  %v1605 = vld [vmem:[%s1593 + $0x2c] sm:$0xf]
  %v1606 = vld [vmem:[%s1593 + $0x30] sm:$0xf]
  %v1607 = vld [vmem:[%s1593 + $0x34] sm:$0xf]
  %v1608 = vld [vmem:[%s1593 + $0x38] sm:$0xf]
  %v1609 = vld [vmem:[%s1593 + $0x3c] sm:$0xf]
  %v1618 = vunpack.c.l.b16 %v1585
  %v1619 = vunpack.c.l.b16 %v1586
  %v1620 = vunpack.c.l.b16 %v1587
  %v1621 = vunpack.c.l.b16 %v1588
  %v1622 = vunpack.c.l.b16 %v1589
  %v1623 = vunpack.c.l.b16 %v1590
  %v1624 = vunpack.c.l.b16 %v1591
  %v1625 = vunpack.c.l.b16 %v1592
  %v1626 = vpack.c.b16 %v1618, %v1618
  %v1627 = vpack.c.b16 %v1619, %v1619
  %v1628 = vpack.c.b16 %v1620, %v1620
  %v1629 = vpack.c.b16 %v1621, %v1621
  %v1630 = vpack.c.b16 %v1622, %v1622
  %v1631 = vpack.c.b16 %v1623, %v1623
  %v1632 = vpack.c.b16 %v1624, %v1624
  %v1633 = vpack.c.b16 %v1625, %v1625
  %v1634 = vunpack.c.l.b16 %v1626
  %v1635 = vunpack.c.l.b16 %v1627
  %v1636 = vunpack.c.l.b16 %v1628
  %v1637 = vunpack.c.l.b16 %v1629
  %v1638 = vunpack.c.l.b16 %v1630
  %v1639 = vunpack.c.l.b16 %v1631
  %v1640 = vunpack.c.l.b16 %v1632
  %v1641 = vunpack.c.l.b16 %v1633
  %v1642 = vrot.slane %v1634, 2
  %v1643 = vrot.slane %v1635, 1
  %v1644 = vsel %vm1425, %v1643, %v1642
  %v1645 = vsel %vm1428, %v1636, %v1644
  %v1646 = vrot.slane %v1637, 7
  %v1647 = vsel %vm1431, %v1646, %v1645
  %v1648 = vrot.slane %v1638, 6
  %v1649 = vsel %vm1434, %v1648, %v1647
  %v1650 = vrot.slane %v1639, 5
  %v1651 = vsel %vm1437, %v1650, %v1649
  %v1652 = vrot.slane %v1640, 4
  %v1653 = vsel %vm1440, %v1652, %v1651
  %v1654 = vrot.slane %v1641, 3
  %v1655 = vsel %vm1443, %v1654, %v1653
  %v1656 = vpack.c.b16 %v1655, %v1655
  %v1674 = vunpack.c.l.b16 %v1594
  %v1675 = vunpack.c.l.b16 %v1595
  %v1676 = vunpack.c.l.b16 %v1596
  %v1677 = vunpack.c.l.b16 %v1597
  %v1678 = vunpack.c.l.b16 %v1598
  %v1679 = vunpack.c.l.b16 %v1599
  %v1680 = vunpack.c.l.b16 %v1600
  %v1681 = vunpack.c.l.b16 %v1601
  %v1682 = vunpack.c.l.b16 %v1602
  %v1683 = vunpack.c.l.b16 %v1603
  %v1684 = vunpack.c.l.b16 %v1604
  %v1685 = vunpack.c.l.b16 %v1605
  %v1686 = vunpack.c.l.b16 %v1606
  %v1687 = vunpack.c.l.b16 %v1607
  %v1688 = vunpack.c.l.b16 %v1608
  %v1689 = vunpack.c.l.b16 %v1609
  %v1690 = vpack.c.b16 %v1675, %v1674
  %v1691 = vpack.c.b16 %v1677, %v1676
  %v1692 = vpack.c.b16 %v1679, %v1678
  %v1693 = vpack.c.b16 %v1681, %v1680
  %v1694 = vpack.c.b16 %v1683, %v1682
  %v1695 = vpack.c.b16 %v1685, %v1684
  %v1696 = vpack.c.b16 %v1687, %v1686
  %v1697 = vpack.c.b16 %v1689, %v1688
  %1706 = vmatpush.bf16.msra.mxu0 %v1697
  %1707 = vmatpush.bf16.msra.mxu0 %v1696
  %1708 = vmatpush.bf16.msra.mxu0 %v1695
  %1709 = vmatpush.bf16.msra.mxu0 %v1694
  %1710 = vmatpush.bf16.msra.mxu0 %v1693
  %1711 = vmatpush.bf16.msra.mxu0 %v1692
  %1712 = vmatpush.bf16.msra.mxu0 %v1691
  %1713 = vmatpush.bf16.msra.mxu0 %v1690
  %1714 = vmatmul.bf16.gmra.mxu0 %v1656
  %v1715 = vpop.f32.mrf.mxu0
  %v1716 = vadd.f32 0.0, %v1715
  %v1717 = vpop.f32.mrf.mxu0
  %1718 = vdwg.mxu0
  %v1719 = vadd.f32 %v1582, %v1716
  %s1720 = scalar_lea.vmem %s2, 192
  %v1721 = vld [vmem:[%s1720] sm:$0xf]
  %v1722 = vld [vmem:[%s1720 + $0x4] sm:$0xf]
  %v1723 = vld [vmem:[%s1720 + $0x8] sm:$0xf]
  %v1724 = vld [vmem:[%s1720 + $0xc] sm:$0xf]
  %v1725 = vld [vmem:[%s1720 + $0x10] sm:$0xf]
  %v1726 = vld [vmem:[%s1720 + $0x14] sm:$0xf]
  %v1727 = vld [vmem:[%s1720 + $0x18] sm:$0xf]
  %v1728 = vld [vmem:[%s1720 + $0x1c] sm:$0xf]
  %v1729 = vld [vmem:[%s1720 + $0x20] sm:$0xf]
  %v1730 = vld [vmem:[%s1720 + $0x24] sm:$0xf]
  %v1731 = vld [vmem:[%s1720 + $0x28] sm:$0xf]
  %v1732 = vld [vmem:[%s1720 + $0x2c] sm:$0xf]
  %v1733 = vld [vmem:[%s1720 + $0x30] sm:$0xf]
  %v1734 = vld [vmem:[%s1720 + $0x34] sm:$0xf]
  %v1735 = vld [vmem:[%s1720 + $0x38] sm:$0xf]
  %v1736 = vld [vmem:[%s1720 + $0x3c] sm:$0xf]
  %v1737 = vrot.slane %v1634, 3
  %v1738 = vrot.slane %v1635, 2
  %v1739 = vsel %vm1425, %v1738, %v1737
  %v1740 = vrot.slane %v1636, 1
  %v1741 = vsel %vm1428, %v1740, %v1739
  %v1742 = vsel %vm1431, %v1637, %v1741
  %v1743 = vrot.slane %v1638, 7
  %v1744 = vsel %vm1434, %v1743, %v1742
  %v1745 = vrot.slane %v1639, 6
  %v1746 = vsel %vm1437, %v1745, %v1744
  %v1747 = vrot.slane %v1640, 5
  %v1748 = vsel %vm1440, %v1747, %v1746
  %v1749 = vrot.slane %v1641, 4
  %v1750 = vsel %vm1443, %v1749, %v1748
  %v1751 = vpack.c.b16 %v1750, %v1750
  %v1769 = vunpack.c.l.b16 %v1721
  %v1770 = vunpack.c.l.b16 %v1722
  %v1771 = vunpack.c.l.b16 %v1723
  %v1772 = vunpack.c.l.b16 %v1724
  %v1773 = vunpack.c.l.b16 %v1725
  %v1774 = vunpack.c.l.b16 %v1726
  %v1775 = vunpack.c.l.b16 %v1727
  %v1776 = vunpack.c.l.b16 %v1728
  %v1777 = vunpack.c.l.b16 %v1729
  %v1778 = vunpack.c.l.b16 %v1730
  %v1779 = vunpack.c.l.b16 %v1731
  %v1780 = vunpack.c.l.b16 %v1732
  %v1781 = vunpack.c.l.b16 %v1733
  %v1782 = vunpack.c.l.b16 %v1734
  %v1783 = vunpack.c.l.b16 %v1735
  %v1784 = vunpack.c.l.b16 %v1736
  %v1785 = vpack.c.b16 %v1770, %v1769
  %v1786 = vpack.c.b16 %v1772, %v1771
  %v1787 = vpack.c.b16 %v1774, %v1773
  %v1788 = vpack.c.b16 %v1776, %v1775
  %v1789 = vpack.c.b16 %v1778, %v1777
  %v1790 = vpack.c.b16 %v1780, %v1779
  %v1791 = vpack.c.b16 %v1782, %v1781
  %v1792 = vpack.c.b16 %v1784, %v1783
  %1801 = vmatpush.bf16.msra.mxu0 %v1792
  %1802 = vmatpush.bf16.msra.mxu0 %v1791
  %1803 = vmatpush.bf16.msra.mxu0 %v1790
  %1804 = vmatpush.bf16.msra.mxu0 %v1789
  %1805 = vmatpush.bf16.msra.mxu0 %v1788
  %1806 = vmatpush.bf16.msra.mxu0 %v1787
  %1807 = vmatpush.bf16.msra.mxu0 %v1786
  %1808 = vmatpush.bf16.msra.mxu0 %v1785
  %1809 = vmatmul.bf16.gmra.mxu0 %v1751
  %v1810 = vpop.f32.mrf.mxu0
  %v1811 = vadd.f32 0.0, %v1810
  %v1812 = vpop.f32.mrf.mxu0
  %1813 = vdwg.mxu0
  %v1814 = vadd.f32 %v1719, %v1811
  %v1815 = vld [vmem:[#allocation2] sm:$0x4]
  %v1816 = vld [vmem:[#allocation2 + $0x8] sm:$0x4]
  %v1817 = vld [vmem:[#allocation2 + $0x10] sm:$0x4]
  %v1818 = vld [vmem:[#allocation2 + $0x18] sm:$0x4]
  %v1819 = vld [vmem:[#allocation2 + $0x20] sm:$0x4]
  %v1820 = vld [vmem:[#allocation2 + $0x28] sm:$0x4]
  %v1821 = vld [vmem:[#allocation2 + $0x30] sm:$0x4]
  %v1822 = vld [vmem:[#allocation2 + $0x38] sm:$0x4]
  %s1823 = scalar_lea.vmem %s2, 256
  %v1824 = vld [vmem:[%s1823] sm:$0xf]
  %v1825 = vld [vmem:[%s1823 + $0x4] sm:$0xf]
  %v1826 = vld [vmem:[%s1823 + $0x8] sm:$0xf]
  %v1827 = vld [vmem:[%s1823 + $0xc] sm:$0xf]
  %v1828 = vld [vmem:[%s1823 + $0x10] sm:$0xf]
  %v1829 = vld [vmem:[%s1823 + $0x14] sm:$0xf]
  %v1830 = vld [vmem:[%s1823 + $0x18] sm:$0xf]
  %v1831 = vld [vmem:[%s1823 + $0x1c] sm:$0xf]
  %v1832 = vld [vmem:[%s1823 + $0x20] sm:$0xf]
  %v1833 = vld [vmem:[%s1823 + $0x24] sm:$0xf]
  %v1834 = vld [vmem:[%s1823 + $0x28] sm:$0xf]
  %v1835 = vld [vmem:[%s1823 + $0x2c] sm:$0xf]
  %v1836 = vld [vmem:[%s1823 + $0x30] sm:$0xf]
  %v1837 = vld [vmem:[%s1823 + $0x34] sm:$0xf]
  %v1838 = vld [vmem:[%s1823 + $0x38] sm:$0xf]
  %v1839 = vld [vmem:[%s1823 + $0x3c] sm:$0xf]
  %v1848 = vunpack.c.l.b16 %v1815
  %v1849 = vunpack.c.l.b16 %v1816
  %v1850 = vunpack.c.l.b16 %v1817
  %v1851 = vunpack.c.l.b16 %v1818
  %v1852 = vunpack.c.l.b16 %v1819
  %v1853 = vunpack.c.l.b16 %v1820
  %v1854 = vunpack.c.l.b16 %v1821
  %v1855 = vunpack.c.l.b16 %v1822
  %v1856 = vpack.c.b16 %v1848, %v1848
  %v1857 = vpack.c.b16 %v1849, %v1849
  %v1858 = vpack.c.b16 %v1850, %v1850
  %v1859 = vpack.c.b16 %v1851, %v1851
  %v1860 = vpack.c.b16 %v1852, %v1852
  %v1861 = vpack.c.b16 %v1853, %v1853
  %v1862 = vpack.c.b16 %v1854, %v1854
  %v1863 = vpack.c.b16 %v1855, %v1855
  %v1864 = vunpack.c.l.b16 %v1856
  %v1865 = vunpack.c.l.b16 %v1857
  %v1866 = vunpack.c.l.b16 %v1858
  %v1867 = vunpack.c.l.b16 %v1859
  %v1868 = vunpack.c.l.b16 %v1860
  %v1869 = vunpack.c.l.b16 %v1861
  %v1870 = vunpack.c.l.b16 %v1862
  %v1871 = vunpack.c.l.b16 %v1863
  %v1872 = vrot.slane %v1864, 4
  %v1873 = vrot.slane %v1865, 3
  %v1874 = vsel %vm1425, %v1873, %v1872
  %v1875 = vrot.slane %v1866, 2
  %v1876 = vsel %vm1428, %v1875, %v1874
  %v1877 = vrot.slane %v1867, 1
  %v1878 = vsel %vm1431, %v1877, %v1876
  %v1879 = vsel %vm1434, %v1868, %v1878
  %v1880 = vrot.slane %v1869, 7
  %v1881 = vsel %vm1437, %v1880, %v1879
  %v1882 = vrot.slane %v1870, 6
  %v1883 = vsel %vm1440, %v1882, %v1881
  %v1884 = vrot.slane %v1871, 5
  %v1885 = vsel %vm1443, %v1884, %v1883
  %v1886 = vpack.c.b16 %v1885, %v1885
  %v1904 = vunpack.c.l.b16 %v1824
  %v1905 = vunpack.c.l.b16 %v1825
  %v1906 = vunpack.c.l.b16 %v1826
  %v1907 = vunpack.c.l.b16 %v1827
  %v1908 = vunpack.c.l.b16 %v1828
  %v1909 = vunpack.c.l.b16 %v1829
  %v1910 = vunpack.c.l.b16 %v1830
  %v1911 = vunpack.c.l.b16 %v1831
  %v1912 = vunpack.c.l.b16 %v1832
  %v1913 = vunpack.c.l.b16 %v1833
  %v1914 = vunpack.c.l.b16 %v1834
  %v1915 = vunpack.c.l.b16 %v1835
  %v1916 = vunpack.c.l.b16 %v1836
  %v1917 = vunpack.c.l.b16 %v1837
  %v1918 = vunpack.c.l.b16 %v1838
  %v1919 = vunpack.c.l.b16 %v1839
  %v1920 = vpack.c.b16 %v1905, %v1904
  %v1921 = vpack.c.b16 %v1907, %v1906
  %v1922 = vpack.c.b16 %v1909, %v1908
  %v1923 = vpack.c.b16 %v1911, %v1910
  %v1924 = vpack.c.b16 %v1913, %v1912
  %v1925 = vpack.c.b16 %v1915, %v1914
  %v1926 = vpack.c.b16 %v1917, %v1916
  %v1927 = vpack.c.b16 %v1919, %v1918
  %1936 = vmatpush.bf16.msra.mxu0 %v1927
  %1937 = vmatpush.bf16.msra.mxu0 %v1926
  %1938 = vmatpush.bf16.msra.mxu0 %v1925
  %1939 = vmatpush.bf16.msra.mxu0 %v1924
  %1940 = vmatpush.bf16.msra.mxu0 %v1923
  %1941 = vmatpush.bf16.msra.mxu0 %v1922
  %1942 = vmatpush.bf16.msra.mxu0 %v1921
  %1943 = vmatpush.bf16.msra.mxu0 %v1920
  %1944 = vmatmul.bf16.gmra.mxu0 %v1886
  %v1945 = vpop.f32.mrf.mxu0
  %v1946 = vadd.f32 0.0, %v1945
  %v1947 = vpop.f32.mrf.mxu0
  %1948 = vdwg.mxu0
  %v1949 = vadd.f32 %v1814, %v1946
  %s1950 = scalar_lea.vmem %s2, 320
  %v1951 = vld [vmem:[%s1950] sm:$0xf]
  %v1952 = vld [vmem:[%s1950 + $0x4] sm:$0xf]
  %v1953 = vld [vmem:[%s1950 + $0x8] sm:$0xf]
  %v1954 = vld [vmem:[%s1950 + $0xc] sm:$0xf]
  %v1955 = vld [vmem:[%s1950 + $0x10] sm:$0xf]
  %v1956 = vld [vmem:[%s1950 + $0x14] sm:$0xf]
  %v1957 = vld [vmem:[%s1950 + $0x18] sm:$0xf]
  %v1958 = vld [vmem:[%s1950 + $0x1c] sm:$0xf]
  %v1959 = vld [vmem:[%s1950 + $0x20] sm:$0xf]
  %v1960 = vld [vmem:[%s1950 + $0x24] sm:$0xf]
  %v1961 = vld [vmem:[%s1950 + $0x28] sm:$0xf]
  %v1962 = vld [vmem:[%s1950 + $0x2c] sm:$0xf]
  %v1963 = vld [vmem:[%s1950 + $0x30] sm:$0xf]
  %v1964 = vld [vmem:[%s1950 + $0x34] sm:$0xf]
  %v1965 = vld [vmem:[%s1950 + $0x38] sm:$0xf]
  %v1966 = vld [vmem:[%s1950 + $0x3c] sm:$0xf]
  %v1967 = vrot.slane %v1864, 5
  %v1968 = vrot.slane %v1865, 4
  %v1969 = vsel %vm1425, %v1968, %v1967
  %v1970 = vrot.slane %v1866, 3
  %v1971 = vsel %vm1428, %v1970, %v1969
  %v1972 = vrot.slane %v1867, 2
  %v1973 = vsel %vm1431, %v1972, %v1971
  %v1974 = vrot.slane %v1868, 1
  %v1975 = vsel %vm1434, %v1974, %v1973
  %v1976 = vsel %vm1437, %v1869, %v1975
  %v1977 = vrot.slane %v1870, 7
  %v1978 = vsel %vm1440, %v1977, %v1976
  %v1979 = vrot.slane %v1871, 6
  %v1980 = vsel %vm1443, %v1979, %v1978
  %v1981 = vpack.c.b16 %v1980, %v1980
  %v1999 = vunpack.c.l.b16 %v1951
  %v2000 = vunpack.c.l.b16 %v1952
  %v2001 = vunpack.c.l.b16 %v1953
  %v2002 = vunpack.c.l.b16 %v1954
  %v2003 = vunpack.c.l.b16 %v1955
  %v2004 = vunpack.c.l.b16 %v1956
  %v2005 = vunpack.c.l.b16 %v1957
  %v2006 = vunpack.c.l.b16 %v1958
  %v2007 = vunpack.c.l.b16 %v1959
  %v2008 = vunpack.c.l.b16 %v1960
  %v2009 = vunpack.c.l.b16 %v1961
  %v2010 = vunpack.c.l.b16 %v1962
  %v2011 = vunpack.c.l.b16 %v1963
  %v2012 = vunpack.c.l.b16 %v1964
  %v2013 = vunpack.c.l.b16 %v1965
  %v2014 = vunpack.c.l.b16 %v1966
  %v2015 = vpack.c.b16 %v2000, %v1999
  %v2016 = vpack.c.b16 %v2002, %v2001
  %v2017 = vpack.c.b16 %v2004, %v2003
  %v2018 = vpack.c.b16 %v2006, %v2005
  %v2019 = vpack.c.b16 %v2008, %v2007
  %v2020 = vpack.c.b16 %v2010, %v2009
  %v2021 = vpack.c.b16 %v2012, %v2011
  %v2022 = vpack.c.b16 %v2014, %v2013
  %2031 = vmatpush.bf16.msra.mxu0 %v2022
  %2032 = vmatpush.bf16.msra.mxu0 %v2021
  %2033 = vmatpush.bf16.msra.mxu0 %v2020
  %2034 = vmatpush.bf16.msra.mxu0 %v2019
  %2035 = vmatpush.bf16.msra.mxu0 %v2018
  %2036 = vmatpush.bf16.msra.mxu0 %v2017
  %2037 = vmatpush.bf16.msra.mxu0 %v2016
  %2038 = vmatpush.bf16.msra.mxu0 %v2015
  %2039 = vmatmul.bf16.gmra.mxu0 %v1981
  %v2040 = vpop.f32.mrf.mxu0
  %v2041 = vadd.f32 0.0, %v2040
  %v2042 = vpop.f32.mrf.mxu0
  %2043 = vdwg.mxu0
  %v2044 = vadd.f32 %v1949, %v2041
  %v2045 = vld [vmem:[#allocation2] sm:$0x8]
  %v2046 = vld [vmem:[#allocation2 + $0x8] sm:$0x8]
  %v2047 = vld [vmem:[#allocation2 + $0x10] sm:$0x8]
  %v2048 = vld [vmem:[#allocation2 + $0x18] sm:$0x8]
  %v2049 = vld [vmem:[#allocation2 + $0x20] sm:$0x8]
  %v2050 = vld [vmem:[#allocation2 + $0x28] sm:$0x8]
  %v2051 = vld [vmem:[#allocation2 + $0x30] sm:$0x8]
  %v2052 = vld [vmem:[#allocation2 + $0x38] sm:$0x8]
  %s2053 = scalar_lea.vmem %s2, 384
  %v2054 = vld [vmem:[%s2053] sm:$0xf]
  %v2055 = vld [vmem:[%s2053 + $0x4] sm:$0xf]
  %v2056 = vld [vmem:[%s2053 + $0x8] sm:$0xf]
  %v2057 = vld [vmem:[%s2053 + $0xc] sm:$0xf]
  %v2058 = vld [vmem:[%s2053 + $0x10] sm:$0xf]
  %v2059 = vld [vmem:[%s2053 + $0x14] sm:$0xf]
  %v2060 = vld [vmem:[%s2053 + $0x18] sm:$0xf]
  %v2061 = vld [vmem:[%s2053 + $0x1c] sm:$0xf]
  %v2062 = vld [vmem:[%s2053 + $0x20] sm:$0xf]
  %v2063 = vld [vmem:[%s2053 + $0x24] sm:$0xf]
  %v2064 = vld [vmem:[%s2053 + $0x28] sm:$0xf]
  %v2065 = vld [vmem:[%s2053 + $0x2c] sm:$0xf]
  %v2066 = vld [vmem:[%s2053 + $0x30] sm:$0xf]
  %v2067 = vld [vmem:[%s2053 + $0x34] sm:$0xf]
  %v2068 = vld [vmem:[%s2053 + $0x38] sm:$0xf]
  %v2069 = vld [vmem:[%s2053 + $0x3c] sm:$0xf]
  %v2078 = vunpack.c.l.b16 %v2045
  %v2079 = vunpack.c.l.b16 %v2046
  %v2080 = vunpack.c.l.b16 %v2047
  %v2081 = vunpack.c.l.b16 %v2048
  %v2082 = vunpack.c.l.b16 %v2049
  %v2083 = vunpack.c.l.b16 %v2050
  %v2084 = vunpack.c.l.b16 %v2051
  %v2085 = vunpack.c.l.b16 %v2052
  %v2086 = vpack.c.b16 %v2078, %v2078
  %v2087 = vpack.c.b16 %v2079, %v2079
  %v2088 = vpack.c.b16 %v2080, %v2080
  %v2089 = vpack.c.b16 %v2081, %v2081
  %v2090 = vpack.c.b16 %v2082, %v2082
  %v2091 = vpack.c.b16 %v2083, %v2083
  %v2092 = vpack.c.b16 %v2084, %v2084
  %v2093 = vpack.c.b16 %v2085, %v2085
  %v2094 = vunpack.c.l.b16 %v2086
  %v2095 = vunpack.c.l.b16 %v2087
  %v2096 = vunpack.c.l.b16 %v2088
  %v2097 = vunpack.c.l.b16 %v2089
  %v2098 = vunpack.c.l.b16 %v2090
  %v2099 = vunpack.c.l.b16 %v2091
  %v2100 = vunpack.c.l.b16 %v2092
  %v2101 = vunpack.c.l.b16 %v2093
  %v2102 = vrot.slane %v2094, 6
  %v2103 = vrot.slane %v2095, 5
  %v2104 = vsel %vm1425, %v2103, %v2102
  %v2105 = vrot.slane %v2096, 4
  %v2106 = vsel %vm1428, %v2105, %v2104
  %v2107 = vrot.slane %v2097, 3
  %v2108 = vsel %vm1431, %v2107, %v2106
  %v2109 = vrot.slane %v2098, 2
  %v2110 = vsel %vm1434, %v2109, %v2108
  %v2111 = vrot.slane %v2099, 1
  %v2112 = vsel %vm1437, %v2111, %v2110
  %v2113 = vsel %vm1440, %v2100, %v2112
  %v2114 = vrot.slane %v2101, 7
  %v2115 = vsel %vm1443, %v2114, %v2113
  %v2116 = vpack.c.b16 %v2115, %v2115
  %v2134 = vunpack.c.l.b16 %v2054
  %v2135 = vunpack.c.l.b16 %v2055
  %v2136 = vunpack.c.l.b16 %v2056
  %v2137 = vunpack.c.l.b16 %v2057
  %v2138 = vunpack.c.l.b16 %v2058
  %v2139 = vunpack.c.l.b16 %v2059
  %v2140 = vunpack.c.l.b16 %v2060
  %v2141 = vunpack.c.l.b16 %v2061
  %v2142 = vunpack.c.l.b16 %v2062
  %v2143 = vunpack.c.l.b16 %v2063
  %v2144 = vunpack.c.l.b16 %v2064
  %v2145 = vunpack.c.l.b16 %v2065
  %v2146 = vunpack.c.l.b16 %v2066
  %v2147 = vunpack.c.l.b16 %v2067
  %v2148 = vunpack.c.l.b16 %v2068
  %v2149 = vunpack.c.l.b16 %v2069
  %v2150 = vpack.c.b16 %v2135, %v2134
  %v2151 = vpack.c.b16 %v2137, %v2136
  %v2152 = vpack.c.b16 %v2139, %v2138
  %v2153 = vpack.c.b16 %v2141, %v2140
  %v2154 = vpack.c.b16 %v2143, %v2142
  %v2155 = vpack.c.b16 %v2145, %v2144
  %v2156 = vpack.c.b16 %v2147, %v2146
  %v2157 = vpack.c.b16 %v2149, %v2148
  %2166 = vmatpush.bf16.msra.mxu0 %v2157
  %2167 = vmatpush.bf16.msra.mxu0 %v2156
  %2168 = vmatpush.bf16.msra.mxu0 %v2155
  %2169 = vmatpush.bf16.msra.mxu0 %v2154
  %2170 = vmatpush.bf16.msra.mxu0 %v2153
  %2171 = vmatpush.bf16.msra.mxu0 %v2152
  %2172 = vmatpush.bf16.msra.mxu0 %v2151
  %2173 = vmatpush.bf16.msra.mxu0 %v2150
  %2174 = vmatmul.bf16.gmra.mxu0 %v2116
  %v2175 = vpop.f32.mrf.mxu0
  %v2176 = vadd.f32 0.0, %v2175
  %v2177 = vpop.f32.mrf.mxu0
  %2178 = vdwg.mxu0
  %v2179 = vadd.f32 %v2044, %v2176
  %s2180 = scalar_lea.vmem %s2, 448
  %v2181 = vld [vmem:[%s2180] sm:$0xf]
  %v2182 = vld [vmem:[%s2180 + $0x4] sm:$0xf]
  %v2183 = vld [vmem:[%s2180 + $0x8] sm:$0xf]
  %v2184 = vld [vmem:[%s2180 + $0xc] sm:$0xf]
  %v2185 = vld [vmem:[%s2180 + $0x10] sm:$0xf]
  %v2186 = vld [vmem:[%s2180 + $0x14] sm:$0xf]
  %v2187 = vld [vmem:[%s2180 + $0x18] sm:$0xf]
  %v2188 = vld [vmem:[%s2180 + $0x1c] sm:$0xf]
  %v2189 = vld [vmem:[%s2180 + $0x20] sm:$0xf]
  %v2190 = vld [vmem:[%s2180 + $0x24] sm:$0xf]
  %v2191 = vld [vmem:[%s2180 + $0x28] sm:$0xf]
  %v2192 = vld [vmem:[%s2180 + $0x2c] sm:$0xf]
  %v2193 = vld [vmem:[%s2180 + $0x30] sm:$0xf]
  %v2194 = vld [vmem:[%s2180 + $0x34] sm:$0xf]
  %v2195 = vld [vmem:[%s2180 + $0x38] sm:$0xf]
  %v2196 = vld [vmem:[%s2180 + $0x3c] sm:$0xf]
  %v2197 = vrot.slane %v2094, 7
  %v2198 = vrot.slane %v2095, 6
  %v2199 = vsel %vm1425, %v2198, %v2197
  %v2200 = vrot.slane %v2096, 5
  %v2201 = vsel %vm1428, %v2200, %v2199
  %v2202 = vrot.slane %v2097, 4
  %v2203 = vsel %vm1431, %v2202, %v2201
  %v2204 = vrot.slane %v2098, 3
  %v2205 = vsel %vm1434, %v2204, %v2203
  %v2206 = vrot.slane %v2099, 2
  %v2207 = vsel %vm1437, %v2206, %v2205
  %v2208 = vrot.slane %v2100, 1
  %v2209 = vsel %vm1440, %v2208, %v2207
  %v2210 = vsel %vm1443, %v2101, %v2209
  %v2211 = vpack.c.b16 %v2210, %v2210
  %v2229 = vunpack.c.l.b16 %v2181
  %v2230 = vunpack.c.l.b16 %v2182
  %v2231 = vunpack.c.l.b16 %v2183
  %v2232 = vunpack.c.l.b16 %v2184
  %v2233 = vunpack.c.l.b16 %v2185
  %v2234 = vunpack.c.l.b16 %v2186
  %v2235 = vunpack.c.l.b16 %v2187
  %v2236 = vunpack.c.l.b16 %v2188
  %v2237 = vunpack.c.l.b16 %v2189
  %v2238 = vunpack.c.l.b16 %v2190
  %v2239 = vunpack.c.l.b16 %v2191
  %v2240 = vunpack.c.l.b16 %v2192
  %v2241 = vunpack.c.l.b16 %v2193
  %v2242 = vunpack.c.l.b16 %v2194
  %v2243 = vunpack.c.l.b16 %v2195
  %v2244 = vunpack.c.l.b16 %v2196
  %v2245 = vpack.c.b16 %v2230, %v2229
  %v2246 = vpack.c.b16 %v2232, %v2231
  %v2247 = vpack.c.b16 %v2234, %v2233
  %v2248 = vpack.c.b16 %v2236, %v2235
  %v2249 = vpack.c.b16 %v2238, %v2237
  %v2250 = vpack.c.b16 %v2240, %v2239
  %v2251 = vpack.c.b16 %v2242, %v2241
  %v2252 = vpack.c.b16 %v2244, %v2243
  %2261 = vmatpush.bf16.msra.mxu0 %v2252
  %2262 = vmatpush.bf16.msra.mxu0 %v2251
  %2263 = vmatpush.bf16.msra.mxu0 %v2250
  %2264 = vmatpush.bf16.msra.mxu0 %v2249
  %2265 = vmatpush.bf16.msra.mxu0 %v2248
  %2266 = vmatpush.bf16.msra.mxu0 %v2247
  %2267 = vmatpush.bf16.msra.mxu0 %v2246
  %2268 = vmatpush.bf16.msra.mxu0 %v2245
  %2269 = vmatmul.bf16.gmra.mxu0 %v2211
  %v2270 = vpop.f32.mrf.mxu0
  %v2271 = vadd.f32 0.0, %v2270
  %v2272 = vpop.f32.mrf.mxu0
  %2273 = vdwg.mxu0
  %v2274 = vadd.f32 %v2179, %v2271
  %v2275 = vld [vmem:[#allocation2 + $0x4] sm:$0x1]
  %v2276 = vld [vmem:[#allocation2 + $0xc] sm:$0x1]
  %v2277 = vld [vmem:[#allocation2 + $0x14] sm:$0x1]
  %v2278 = vld [vmem:[#allocation2 + $0x1c] sm:$0x1]
  %v2279 = vld [vmem:[#allocation2 + $0x24] sm:$0x1]
  %v2280 = vld [vmem:[#allocation2 + $0x2c] sm:$0x1]
  %v2281 = vld [vmem:[#allocation2 + $0x34] sm:$0x1]
  %v2282 = vld [vmem:[#allocation2 + $0x3c] sm:$0x1]
  %s2283 = scalar_lea.vmem %s2, 512
  %v2284 = vld [vmem:[%s2283] sm:$0xf]
  %v2285 = vld [vmem:[%s2283 + $0x4] sm:$0xf]
  %v2286 = vld [vmem:[%s2283 + $0x8] sm:$0xf]
  %v2287 = vld [vmem:[%s2283 + $0xc] sm:$0xf]
  %v2288 = vld [vmem:[%s2283 + $0x10] sm:$0xf]
  %v2289 = vld [vmem:[%s2283 + $0x14] sm:$0xf]
  %v2290 = vld [vmem:[%s2283 + $0x18] sm:$0xf]
  %v2291 = vld [vmem:[%s2283 + $0x1c] sm:$0xf]
  %v2292 = vld [vmem:[%s2283 + $0x20] sm:$0xf]
  %v2293 = vld [vmem:[%s2283 + $0x24] sm:$0xf]
  %v2294 = vld [vmem:[%s2283 + $0x28] sm:$0xf]
  %v2295 = vld [vmem:[%s2283 + $0x2c] sm:$0xf]
  %v2296 = vld [vmem:[%s2283 + $0x30] sm:$0xf]
  %v2297 = vld [vmem:[%s2283 + $0x34] sm:$0xf]
  %v2298 = vld [vmem:[%s2283 + $0x38] sm:$0xf]
  %v2299 = vld [vmem:[%s2283 + $0x3c] sm:$0xf]
  %v2308 = vunpack.c.l.b16 %v2275
  %v2309 = vunpack.c.l.b16 %v2276
  %v2310 = vunpack.c.l.b16 %v2277
  %v2311 = vunpack.c.l.b16 %v2278
  %v2312 = vunpack.c.l.b16 %v2279
  %v2313 = vunpack.c.l.b16 %v2280
  %v2314 = vunpack.c.l.b16 %v2281
  %v2315 = vunpack.c.l.b16 %v2282
  %v2316 = vpack.c.b16 %v2308, %v2308
  %v2317 = vpack.c.b16 %v2309, %v2309
  %v2318 = vpack.c.b16 %v2310, %v2310
  %v2319 = vpack.c.b16 %v2311, %v2311
  %v2320 = vpack.c.b16 %v2312, %v2312
  %v2321 = vpack.c.b16 %v2313, %v2313
  %v2322 = vpack.c.b16 %v2314, %v2314
  %v2323 = vpack.c.b16 %v2315, %v2315
  %v2324 = vunpack.c.l.b16 %v2316
  %v2325 = vunpack.c.l.b16 %v2317
  %v2326 = vunpack.c.l.b16 %v2318
  %v2327 = vunpack.c.l.b16 %v2319
  %v2328 = vunpack.c.l.b16 %v2320
  %v2329 = vunpack.c.l.b16 %v2321
  %v2330 = vunpack.c.l.b16 %v2322
  %v2331 = vunpack.c.l.b16 %v2323
  %v2332 = vrot.slane %v2325, 7
  %v2333 = vsel %vm1425, %v2332, %v2324
  %v2334 = vrot.slane %v2326, 6
  %v2335 = vsel %vm1428, %v2334, %v2333
  %v2336 = vrot.slane %v2327, 5
  %v2337 = vsel %vm1431, %v2336, %v2335
  %v2338 = vrot.slane %v2328, 4
  %v2339 = vsel %vm1434, %v2338, %v2337
  %v2340 = vrot.slane %v2329, 3
  %v2341 = vsel %vm1437, %v2340, %v2339
  %v2342 = vrot.slane %v2330, 2
  %v2343 = vsel %vm1440, %v2342, %v2341
  %v2344 = vrot.slane %v2331, 1
  %v2345 = vsel %vm1443, %v2344, %v2343
  %v2346 = vpack.c.b16 %v2345, %v2345
  %v2364 = vunpack.c.l.b16 %v2284
  %v2365 = vunpack.c.l.b16 %v2285
  %v2366 = vunpack.c.l.b16 %v2286
  %v2367 = vunpack.c.l.b16 %v2287
  %v2368 = vunpack.c.l.b16 %v2288
  %v2369 = vunpack.c.l.b16 %v2289
  %v2370 = vunpack.c.l.b16 %v2290
  %v2371 = vunpack.c.l.b16 %v2291
  %v2372 = vunpack.c.l.b16 %v2292
  %v2373 = vunpack.c.l.b16 %v2293
  %v2374 = vunpack.c.l.b16 %v2294
  %v2375 = vunpack.c.l.b16 %v2295
  %v2376 = vunpack.c.l.b16 %v2296
  %v2377 = vunpack.c.l.b16 %v2297
  %v2378 = vunpack.c.l.b16 %v2298
  %v2379 = vunpack.c.l.b16 %v2299
  %v2380 = vpack.c.b16 %v2365, %v2364
  %v2381 = vpack.c.b16 %v2367, %v2366
  %v2382 = vpack.c.b16 %v2369, %v2368
  %v2383 = vpack.c.b16 %v2371, %v2370
  %v2384 = vpack.c.b16 %v2373, %v2372
  %v2385 = vpack.c.b16 %v2375, %v2374
  %v2386 = vpack.c.b16 %v2377, %v2376
  %v2387 = vpack.c.b16 %v2379, %v2378
  %2396 = vmatpush.bf16.msra.mxu0 %v2387
  %2397 = vmatpush.bf16.msra.mxu0 %v2386
  %2398 = vmatpush.bf16.msra.mxu0 %v2385
  %2399 = vmatpush.bf16.msra.mxu0 %v2384
  %2400 = vmatpush.bf16.msra.mxu0 %v2383
  %2401 = vmatpush.bf16.msra.mxu0 %v2382
  %2402 = vmatpush.bf16.msra.mxu0 %v2381
  %2403 = vmatpush.bf16.msra.mxu0 %v2380
  %2404 = vmatmul.bf16.gmra.mxu0 %v2346
  %v2405 = vpop.f32.mrf.mxu0
  %v2406 = vadd.f32 0.0, %v2405
  %v2407 = vpop.f32.mrf.mxu0
  %2408 = vdwg.mxu0
  %v2409 = vadd.f32 %v2274, %v2406
  %s2410 = scalar_lea.vmem %s2, 576
  %v2411 = vld [vmem:[%s2410] sm:$0xf]
  %v2412 = vld [vmem:[%s2410 + $0x4] sm:$0xf]
  %v2413 = vld [vmem:[%s2410 + $0x8] sm:$0xf]
  %v2414 = vld [vmem:[%s2410 + $0xc] sm:$0xf]
  %v2415 = vld [vmem:[%s2410 + $0x10] sm:$0xf]
  %v2416 = vld [vmem:[%s2410 + $0x14] sm:$0xf]
  %v2417 = vld [vmem:[%s2410 + $0x18] sm:$0xf]
  %v2418 = vld [vmem:[%s2410 + $0x1c] sm:$0xf]
  %v2419 = vld [vmem:[%s2410 + $0x20] sm:$0xf]
  %v2420 = vld [vmem:[%s2410 + $0x24] sm:$0xf]
  %v2421 = vld [vmem:[%s2410 + $0x28] sm:$0xf]
  %v2422 = vld [vmem:[%s2410 + $0x2c] sm:$0xf]
  %v2423 = vld [vmem:[%s2410 + $0x30] sm:$0xf]
  %v2424 = vld [vmem:[%s2410 + $0x34] sm:$0xf]
  %v2425 = vld [vmem:[%s2410 + $0x38] sm:$0xf]
  %v2426 = vld [vmem:[%s2410 + $0x3c] sm:$0xf]
  %v2427 = vrot.slane %v2324, 1
  %v2428 = vsel %vm1425, %v2325, %v2427
  %v2429 = vrot.slane %v2326, 7
  %v2430 = vsel %vm1428, %v2429, %v2428
  %v2431 = vrot.slane %v2327, 6
  %v2432 = vsel %vm1431, %v2431, %v2430
  %v2433 = vrot.slane %v2328, 5
  %v2434 = vsel %vm1434, %v2433, %v2432
  %v2435 = vrot.slane %v2329, 4
  %v2436 = vsel %vm1437, %v2435, %v2434
  %v2437 = vrot.slane %v2330, 3
  %v2438 = vsel %vm1440, %v2437, %v2436
  %v2439 = vrot.slane %v2331, 2
  %v2440 = vsel %vm1443, %v2439, %v2438
  %v2441 = vpack.c.b16 %v2440, %v2440
  %v2459 = vunpack.c.l.b16 %v2411
  %v2460 = vunpack.c.l.b16 %v2412
  %v2461 = vunpack.c.l.b16 %v2413
  %v2462 = vunpack.c.l.b16 %v2414
  %v2463 = vunpack.c.l.b16 %v2415
  %v2464 = vunpack.c.l.b16 %v2416
  %v2465 = vunpack.c.l.b16 %v2417
  %v2466 = vunpack.c.l.b16 %v2418
  %v2467 = vunpack.c.l.b16 %v2419
  %v2468 = vunpack.c.l.b16 %v2420
  %v2469 = vunpack.c.l.b16 %v2421
  %v2470 = vunpack.c.l.b16 %v2422
  %v2471 = vunpack.c.l.b16 %v2423
  %v2472 = vunpack.c.l.b16 %v2424
  %v2473 = vunpack.c.l.b16 %v2425
  %v2474 = vunpack.c.l.b16 %v2426
  %v2475 = vpack.c.b16 %v2460, %v2459
  %v2476 = vpack.c.b16 %v2462, %v2461
  %v2477 = vpack.c.b16 %v2464, %v2463
  %v2478 = vpack.c.b16 %v2466, %v2465
  %v2479 = vpack.c.b16 %v2468, %v2467
  %v2480 = vpack.c.b16 %v2470, %v2469
  %v2481 = vpack.c.b16 %v2472, %v2471
  %v2482 = vpack.c.b16 %v2474, %v2473
  %2491 = vmatpush.bf16.msra.mxu0 %v2482
  %2492 = vmatpush.bf16.msra.mxu0 %v2481
  %2493 = vmatpush.bf16.msra.mxu0 %v2480
  %2494 = vmatpush.bf16.msra.mxu0 %v2479
  %2495 = vmatpush.bf16.msra.mxu0 %v2478
  %2496 = vmatpush.bf16.msra.mxu0 %v2477
  %2497 = vmatpush.bf16.msra.mxu0 %v2476
  %2498 = vmatpush.bf16.msra.mxu0 %v2475
  %2499 = vmatmul.bf16.gmra.mxu0 %v2441
  %v2500 = vpop.f32.mrf.mxu0
  %v2501 = vadd.f32 0.0, %v2500
  %v2502 = vpop.f32.mrf.mxu0
  %2503 = vdwg.mxu0
  %v2504 = vadd.f32 %v2409, %v2501
  %v2505 = vld [vmem:[#allocation2 + $0x4] sm:$0x2]
  %v2506 = vld [vmem:[#allocation2 + $0xc] sm:$0x2]
  %v2507 = vld [vmem:[#allocation2 + $0x14] sm:$0x2]
  %v2508 = vld [vmem:[#allocation2 + $0x1c] sm:$0x2]
  %v2509 = vld [vmem:[#allocation2 + $0x24] sm:$0x2]
  %v2510 = vld [vmem:[#allocation2 + $0x2c] sm:$0x2]
  %v2511 = vld [vmem:[#allocation2 + $0x34] sm:$0x2]
  %v2512 = vld [vmem:[#allocation2 + $0x3c] sm:$0x2]
  %s2513 = scalar_lea.vmem %s2, 640
  %v2514 = vld [vmem:[%s2513] sm:$0xf]
  %v2515 = vld [vmem:[%s2513 + $0x4] sm:$0xf]
  %v2516 = vld [vmem:[%s2513 + $0x8] sm:$0xf]
  %v2517 = vld [vmem:[%s2513 + $0xc] sm:$0xf]
  %v2518 = vld [vmem:[%s2513 + $0x10] sm:$0xf]
  %v2519 = vld [vmem:[%s2513 + $0x14] sm:$0xf]
  %v2520 = vld [vmem:[%s2513 + $0x18] sm:$0xf]
  %v2521 = vld [vmem:[%s2513 + $0x1c] sm:$0xf]
  %v2522 = vld [vmem:[%s2513 + $0x20] sm:$0xf]
  %v2523 = vld [vmem:[%s2513 + $0x24] sm:$0xf]
  %v2524 = vld [vmem:[%s2513 + $0x28] sm:$0xf]
  %v2525 = vld [vmem:[%s2513 + $0x2c] sm:$0xf]
  %v2526 = vld [vmem:[%s2513 + $0x30] sm:$0xf]
  %v2527 = vld [vmem:[%s2513 + $0x34] sm:$0xf]
  %v2528 = vld [vmem:[%s2513 + $0x38] sm:$0xf]
  %v2529 = vld [vmem:[%s2513 + $0x3c] sm:$0xf]
  %v2538 = vunpack.c.l.b16 %v2505
  %v2539 = vunpack.c.l.b16 %v2506
  %v2540 = vunpack.c.l.b16 %v2507
  %v2541 = vunpack.c.l.b16 %v2508
  %v2542 = vunpack.c.l.b16 %v2509
  %v2543 = vunpack.c.l.b16 %v2510
  %v2544 = vunpack.c.l.b16 %v2511
  %v2545 = vunpack.c.l.b16 %v2512
  %v2546 = vpack.c.b16 %v2538, %v2538
  %v2547 = vpack.c.b16 %v2539, %v2539
  %v2548 = vpack.c.b16 %v2540, %v2540
  %v2549 = vpack.c.b16 %v2541, %v2541
  %v2550 = vpack.c.b16 %v2542, %v2542
  %v2551 = vpack.c.b16 %v2543, %v2543
  %v2552 = vpack.c.b16 %v2544, %v2544
  %v2553 = vpack.c.b16 %v2545, %v2545
  %v2554 = vunpack.c.l.b16 %v2546
  %v2555 = vunpack.c.l.b16 %v2547
  %v2556 = vunpack.c.l.b16 %v2548
  %v2557 = vunpack.c.l.b16 %v2549
  %v2558 = vunpack.c.l.b16 %v2550
  %v2559 = vunpack.c.l.b16 %v2551
  %v2560 = vunpack.c.l.b16 %v2552
  %v2561 = vunpack.c.l.b16 %v2553
  %v2562 = vrot.slane %v2554, 2
  %v2563 = vrot.slane %v2555, 1
  %v2564 = vsel %vm1425, %v2563, %v2562
  %v2565 = vsel %vm1428, %v2556, %v2564
  %v2566 = vrot.slane %v2557, 7
  %v2567 = vsel %vm1431, %v2566, %v2565
  %v2568 = vrot.slane %v2558, 6
  %v2569 = vsel %vm1434, %v2568, %v2567
  %v2570 = vrot.slane %v2559, 5
  %v2571 = vsel %vm1437, %v2570, %v2569
  %v2572 = vrot.slane %v2560, 4
  %v2573 = vsel %vm1440, %v2572, %v2571
  %v2574 = vrot.slane %v2561, 3
  %v2575 = vsel %vm1443, %v2574, %v2573
  %v2576 = vpack.c.b16 %v2575, %v2575
  %v2594 = vunpack.c.l.b16 %v2514
  %v2595 = vunpack.c.l.b16 %v2515
  %v2596 = vunpack.c.l.b16 %v2516
  %v2597 = vunpack.c.l.b16 %v2517
  %v2598 = vunpack.c.l.b16 %v2518
  %v2599 = vunpack.c.l.b16 %v2519
  %v2600 = vunpack.c.l.b16 %v2520
  %v2601 = vunpack.c.l.b16 %v2521
  %v2602 = vunpack.c.l.b16 %v2522
  %v2603 = vunpack.c.l.b16 %v2523
  %v2604 = vunpack.c.l.b16 %v2524
  %v2605 = vunpack.c.l.b16 %v2525
  %v2606 = vunpack.c.l.b16 %v2526
  %v2607 = vunpack.c.l.b16 %v2527
  %v2608 = vunpack.c.l.b16 %v2528
  %v2609 = vunpack.c.l.b16 %v2529
  %v2610 = vpack.c.b16 %v2595, %v2594
  %v2611 = vpack.c.b16 %v2597, %v2596
  %v2612 = vpack.c.b16 %v2599, %v2598
  %v2613 = vpack.c.b16 %v2601, %v2600
  %v2614 = vpack.c.b16 %v2603, %v2602
  %v2615 = vpack.c.b16 %v2605, %v2604
  %v2616 = vpack.c.b16 %v2607, %v2606
  %v2617 = vpack.c.b16 %v2609, %v2608
  %2626 = vmatpush.bf16.msra.mxu0 %v2617
  %2627 = vmatpush.bf16.msra.mxu0 %v2616
  %2628 = vmatpush.bf16.msra.mxu0 %v2615
  %2629 = vmatpush.bf16.msra.mxu0 %v2614
  %2630 = vmatpush.bf16.msra.mxu0 %v2613
  %2631 = vmatpush.bf16.msra.mxu0 %v2612
  %2632 = vmatpush.bf16.msra.mxu0 %v2611
  %2633 = vmatpush.bf16.msra.mxu0 %v2610
  %2634 = vmatmul.bf16.gmra.mxu0 %v2576
  %v2635 = vpop.f32.mrf.mxu0
  %v2636 = vadd.f32 0.0, %v2635
  %v2637 = vpop.f32.mrf.mxu0
  %2638 = vdwg.mxu0
  %v2639 = vadd.f32 %v2504, %v2636
  %s2640 = scalar_lea.vmem %s2, 704
  %v2641 = vld [vmem:[%s2640] sm:$0xf]
  %v2642 = vld [vmem:[%s2640 + $0x4] sm:$0xf]
  %v2643 = vld [vmem:[%s2640 + $0x8] sm:$0xf]
  %v2644 = vld [vmem:[%s2640 + $0xc] sm:$0xf]
  %v2645 = vld [vmem:[%s2640 + $0x10] sm:$0xf]
  %v2646 = vld [vmem:[%s2640 + $0x14] sm:$0xf]
  %v2647 = vld [vmem:[%s2640 + $0x18] sm:$0xf]
  %v2648 = vld [vmem:[%s2640 + $0x1c] sm:$0xf]
  %v2649 = vld [vmem:[%s2640 + $0x20] sm:$0xf]
  %v2650 = vld [vmem:[%s2640 + $0x24] sm:$0xf]
  %v2651 = vld [vmem:[%s2640 + $0x28] sm:$0xf]
  %v2652 = vld [vmem:[%s2640 + $0x2c] sm:$0xf]
  %v2653 = vld [vmem:[%s2640 + $0x30] sm:$0xf]
  %v2654 = vld [vmem:[%s2640 + $0x34] sm:$0xf]
  %v2655 = vld [vmem:[%s2640 + $0x38] sm:$0xf]
  %v2656 = vld [vmem:[%s2640 + $0x3c] sm:$0xf]
  %v2657 = vrot.slane %v2554, 3
  %v2658 = vrot.slane %v2555, 2
  %v2659 = vsel %vm1425, %v2658, %v2657
  %v2660 = vrot.slane %v2556, 1
  %v2661 = vsel %vm1428, %v2660, %v2659
  %v2662 = vsel %vm1431, %v2557, %v2661
  %v2663 = vrot.slane %v2558, 7
  %v2664 = vsel %vm1434, %v2663, %v2662
  %v2665 = vrot.slane %v2559, 6
  %v2666 = vsel %vm1437, %v2665, %v2664
  %v2667 = vrot.slane %v2560, 5
  %v2668 = vsel %vm1440, %v2667, %v2666
  %v2669 = vrot.slane %v2561, 4
  %v2670 = vsel %vm1443, %v2669, %v2668
  %v2671 = vpack.c.b16 %v2670, %v2670
  %v2689 = vunpack.c.l.b16 %v2641
  %v2690 = vunpack.c.l.b16 %v2642
  %v2691 = vunpack.c.l.b16 %v2643
  %v2692 = vunpack.c.l.b16 %v2644
  %v2693 = vunpack.c.l.b16 %v2645
  %v2694 = vunpack.c.l.b16 %v2646
  %v2695 = vunpack.c.l.b16 %v2647
  %v2696 = vunpack.c.l.b16 %v2648
  %v2697 = vunpack.c.l.b16 %v2649
  %v2698 = vunpack.c.l.b16 %v2650
  %v2699 = vunpack.c.l.b16 %v2651
  %v2700 = vunpack.c.l.b16 %v2652
  %v2701 = vunpack.c.l.b16 %v2653
  %v2702 = vunpack.c.l.b16 %v2654
  %v2703 = vunpack.c.l.b16 %v2655
  %v2704 = vunpack.c.l.b16 %v2656
  %v2705 = vpack.c.b16 %v2690, %v2689
  %v2706 = vpack.c.b16 %v2692, %v2691
  %v2707 = vpack.c.b16 %v2694, %v2693
  %v2708 = vpack.c.b16 %v2696, %v2695
  %v2709 = vpack.c.b16 %v2698, %v2697
  %v2710 = vpack.c.b16 %v2700, %v2699
  %v2711 = vpack.c.b16 %v2702, %v2701
  %v2712 = vpack.c.b16 %v2704, %v2703
  %2721 = vmatpush.bf16.msra.mxu0 %v2712
  %2722 = vmatpush.bf16.msra.mxu0 %v2711
  %2723 = vmatpush.bf16.msra.mxu0 %v2710
  %2724 = vmatpush.bf16.msra.mxu0 %v2709
  %2725 = vmatpush.bf16.msra.mxu0 %v2708
  %2726 = vmatpush.bf16.msra.mxu0 %v2707
  %2727 = vmatpush.bf16.msra.mxu0 %v2706
  %2728 = vmatpush.bf16.msra.mxu0 %v2705
  %2729 = vmatmul.bf16.gmra.mxu0 %v2671
  %v2730 = vpop.f32.mrf.mxu0
  %v2731 = vadd.f32 0.0, %v2730
  %v2732 = vpop.f32.mrf.mxu0
  %2733 = vdwg.mxu0
  %v2734 = vadd.f32 %v2639, %v2731
  %v2735 = vld [vmem:[#allocation2 + $0x4] sm:$0x4]
  %v2736 = vld [vmem:[#allocation2 + $0xc] sm:$0x4]
  %v2737 = vld [vmem:[#allocation2 + $0x14] sm:$0x4]
  %v2738 = vld [vmem:[#allocation2 + $0x1c] sm:$0x4]
  %v2739 = vld [vmem:[#allocation2 + $0x24] sm:$0x4]
  %v2740 = vld [vmem:[#allocation2 + $0x2c] sm:$0x4]
  %v2741 = vld [vmem:[#allocation2 + $0x34] sm:$0x4]
  %v2742 = vld [vmem:[#allocation2 + $0x3c] sm:$0x4]
  %s2743 = scalar_lea.vmem %s2, 768
  %v2744 = vld [vmem:[%s2743] sm:$0xf]
  %v2745 = vld [vmem:[%s2743 + $0x4] sm:$0xf]
  %v2746 = vld [vmem:[%s2743 + $0x8] sm:$0xf]
  %v2747 = vld [vmem:[%s2743 + $0xc] sm:$0xf]
  %v2748 = vld [vmem:[%s2743 + $0x10] sm:$0xf]
  %v2749 = vld [vmem:[%s2743 + $0x14] sm:$0xf]
  %v2750 = vld [vmem:[%s2743 + $0x18] sm:$0xf]
  %v2751 = vld [vmem:[%s2743 + $0x1c] sm:$0xf]
  %v2752 = vld [vmem:[%s2743 + $0x20] sm:$0xf]
  %v2753 = vld [vmem:[%s2743 + $0x24] sm:$0xf]
  %v2754 = vld [vmem:[%s2743 + $0x28] sm:$0xf]
  %v2755 = vld [vmem:[%s2743 + $0x2c] sm:$0xf]
  %v2756 = vld [vmem:[%s2743 + $0x30] sm:$0xf]
  %v2757 = vld [vmem:[%s2743 + $0x34] sm:$0xf]
  %v2758 = vld [vmem:[%s2743 + $0x38] sm:$0xf]
  %v2759 = vld [vmem:[%s2743 + $0x3c] sm:$0xf]
  %v2768 = vunpack.c.l.b16 %v2735
  %v2769 = vunpack.c.l.b16 %v2736
  %v2770 = vunpack.c.l.b16 %v2737
  %v2771 = vunpack.c.l.b16 %v2738
  %v2772 = vunpack.c.l.b16 %v2739
  %v2773 = vunpack.c.l.b16 %v2740
  %v2774 = vunpack.c.l.b16 %v2741
  %v2775 = vunpack.c.l.b16 %v2742
  %v2776 = vpack.c.b16 %v2768, %v2768
  %v2777 = vpack.c.b16 %v2769, %v2769
  %v2778 = vpack.c.b16 %v2770, %v2770
  %v2779 = vpack.c.b16 %v2771, %v2771
  %v2780 = vpack.c.b16 %v2772, %v2772
  %v2781 = vpack.c.b16 %v2773, %v2773
  %v2782 = vpack.c.b16 %v2774, %v2774
  %v2783 = vpack.c.b16 %v2775, %v2775
  %v2784 = vunpack.c.l.b16 %v2776
  %v2785 = vunpack.c.l.b16 %v2777
  %v2786 = vunpack.c.l.b16 %v2778
  %v2787 = vunpack.c.l.b16 %v2779
  %v2788 = vunpack.c.l.b16 %v2780
  %v2789 = vunpack.c.l.b16 %v2781
  %v2790 = vunpack.c.l.b16 %v2782
  %v2791 = vunpack.c.l.b16 %v2783
  %v2792 = vrot.slane %v2784, 4
  %v2793 = vrot.slane %v2785, 3
  %v2794 = vsel %vm1425, %v2793, %v2792
  %v2795 = vrot.slane %v2786, 2
  %v2796 = vsel %vm1428, %v2795, %v2794
  %v2797 = vrot.slane %v2787, 1
  %v2798 = vsel %vm1431, %v2797, %v2796
  %v2799 = vsel %vm1434, %v2788, %v2798
  %v2800 = vrot.slane %v2789, 7
  %v2801 = vsel %vm1437, %v2800, %v2799
  %v2802 = vrot.slane %v2790, 6
  %v2803 = vsel %vm1440, %v2802, %v2801
  %v2804 = vrot.slane %v2791, 5
  %v2805 = vsel %vm1443, %v2804, %v2803
  %v2806 = vpack.c.b16 %v2805, %v2805
  %v2824 = vunpack.c.l.b16 %v2744
  %v2825 = vunpack.c.l.b16 %v2745
  %v2826 = vunpack.c.l.b16 %v2746
  %v2827 = vunpack.c.l.b16 %v2747
  %v2828 = vunpack.c.l.b16 %v2748
  %v2829 = vunpack.c.l.b16 %v2749
  %v2830 = vunpack.c.l.b16 %v2750
  %v2831 = vunpack.c.l.b16 %v2751
  %v2832 = vunpack.c.l.b16 %v2752
  %v2833 = vunpack.c.l.b16 %v2753
  %v2834 = vunpack.c.l.b16 %v2754
  %v2835 = vunpack.c.l.b16 %v2755
  %v2836 = vunpack.c.l.b16 %v2756
  %v2837 = vunpack.c.l.b16 %v2757
  %v2838 = vunpack.c.l.b16 %v2758
  %v2839 = vunpack.c.l.b16 %v2759
  %v2840 = vpack.c.b16 %v2825, %v2824
  %v2841 = vpack.c.b16 %v2827, %v2826
  %v2842 = vpack.c.b16 %v2829, %v2828
  %v2843 = vpack.c.b16 %v2831, %v2830
  %v2844 = vpack.c.b16 %v2833, %v2832
  %v2845 = vpack.c.b16 %v2835, %v2834
  %v2846 = vpack.c.b16 %v2837, %v2836
  %v2847 = vpack.c.b16 %v2839, %v2838
  %2856 = vmatpush.bf16.msra.mxu0 %v2847
  %2857 = vmatpush.bf16.msra.mxu0 %v2846
  %2858 = vmatpush.bf16.msra.mxu0 %v2845
  %2859 = vmatpush.bf16.msra.mxu0 %v2844
  %2860 = vmatpush.bf16.msra.mxu0 %v2843
  %2861 = vmatpush.bf16.msra.mxu0 %v2842
  %2862 = vmatpush.bf16.msra.mxu0 %v2841
  %2863 = vmatpush.bf16.msra.mxu0 %v2840
  %2864 = vmatmul.bf16.gmra.mxu0 %v2806
  %v2865 = vpop.f32.mrf.mxu0
  %v2866 = vadd.f32 0.0, %v2865
  %v2867 = vpop.f32.mrf.mxu0
  %2868 = vdwg.mxu0
  %v2869 = vadd.f32 %v2734, %v2866
  %s2870 = scalar_lea.vmem %s2, 832
  %v2871 = vld [vmem:[%s2870] sm:$0xf]
  %v2872 = vld [vmem:[%s2870 + $0x4] sm:$0xf]
  %v2873 = vld [vmem:[%s2870 + $0x8] sm:$0xf]
  %v2874 = vld [vmem:[%s2870 + $0xc] sm:$0xf]
  %v2875 = vld [vmem:[%s2870 + $0x10] sm:$0xf]
  %v2876 = vld [vmem:[%s2870 + $0x14] sm:$0xf]
  %v2877 = vld [vmem:[%s2870 + $0x18] sm:$0xf]
  %v2878 = vld [vmem:[%s2870 + $0x1c] sm:$0xf]
  %v2879 = vld [vmem:[%s2870 + $0x20] sm:$0xf]
  %v2880 = vld [vmem:[%s2870 + $0x24] sm:$0xf]
  %v2881 = vld [vmem:[%s2870 + $0x28] sm:$0xf]
  %v2882 = vld [vmem:[%s2870 + $0x2c] sm:$0xf]
  %v2883 = vld [vmem:[%s2870 + $0x30] sm:$0xf]
  %v2884 = vld [vmem:[%s2870 + $0x34] sm:$0xf]
  %v2885 = vld [vmem:[%s2870 + $0x38] sm:$0xf]
  %v2886 = vld [vmem:[%s2870 + $0x3c] sm:$0xf]
  %v2887 = vrot.slane %v2784, 5
  %v2888 = vrot.slane %v2785, 4
  %v2889 = vsel %vm1425, %v2888, %v2887
  %v2890 = vrot.slane %v2786, 3
  %v2891 = vsel %vm1428, %v2890, %v2889
  %v2892 = vrot.slane %v2787, 2
  %v2893 = vsel %vm1431, %v2892, %v2891
  %v2894 = vrot.slane %v2788, 1
  %v2895 = vsel %vm1434, %v2894, %v2893
  %v2896 = vsel %vm1437, %v2789, %v2895
  %v2897 = vrot.slane %v2790, 7
  %v2898 = vsel %vm1440, %v2897, %v2896
  %v2899 = vrot.slane %v2791, 6
  %v2900 = vsel %vm1443, %v2899, %v2898
  %v2901 = vpack.c.b16 %v2900, %v2900
  %v2919 = vunpack.c.l.b16 %v2871
  %v2920 = vunpack.c.l.b16 %v2872
  %v2921 = vunpack.c.l.b16 %v2873
  %v2922 = vunpack.c.l.b16 %v2874
  %v2923 = vunpack.c.l.b16 %v2875
  %v2924 = vunpack.c.l.b16 %v2876
  %v2925 = vunpack.c.l.b16 %v2877
  %v2926 = vunpack.c.l.b16 %v2878
  %v2927 = vunpack.c.l.b16 %v2879
  %v2928 = vunpack.c.l.b16 %v2880
  %v2929 = vunpack.c.l.b16 %v2881
  %v2930 = vunpack.c.l.b16 %v2882
  %v2931 = vunpack.c.l.b16 %v2883
  %v2932 = vunpack.c.l.b16 %v2884
  %v2933 = vunpack.c.l.b16 %v2885
  %v2934 = vunpack.c.l.b16 %v2886
  %v2935 = vpack.c.b16 %v2920, %v2919
  %v2936 = vpack.c.b16 %v2922, %v2921
  %v2937 = vpack.c.b16 %v2924, %v2923
  %v2938 = vpack.c.b16 %v2926, %v2925
  %v2939 = vpack.c.b16 %v2928, %v2927
  %v2940 = vpack.c.b16 %v2930, %v2929
  %v2941 = vpack.c.b16 %v2932, %v2931
  %v2942 = vpack.c.b16 %v2934, %v2933
  %2951 = vmatpush.bf16.msra.mxu0 %v2942
  %2952 = vmatpush.bf16.msra.mxu0 %v2941
  %2953 = vmatpush.bf16.msra.mxu0 %v2940
  %2954 = vmatpush.bf16.msra.mxu0 %v2939
  %2955 = vmatpush.bf16.msra.mxu0 %v2938
  %2956 = vmatpush.bf16.msra.mxu0 %v2937
  %2957 = vmatpush.bf16.msra.mxu0 %v2936
  %2958 = vmatpush.bf16.msra.mxu0 %v2935
  %2959 = vmatmul.bf16.gmra.mxu0 %v2901
  %v2960 = vpop.f32.mrf.mxu0
  %v2961 = vadd.f32 0.0, %v2960
  %v2962 = vpop.f32.mrf.mxu0
  %2963 = vdwg.mxu0
  %v2964 = vadd.f32 %v2869, %v2961
  %v2965 = vld [vmem:[#allocation2 + $0x4] sm:$0x8]
  %v2966 = vld [vmem:[#allocation2 + $0xc] sm:$0x8]
  %v2967 = vld [vmem:[#allocation2 + $0x14] sm:$0x8]
  %v2968 = vld [vmem:[#allocation2 + $0x1c] sm:$0x8]
  %v2969 = vld [vmem:[#allocation2 + $0x24] sm:$0x8]
  %v2970 = vld [vmem:[#allocation2 + $0x2c] sm:$0x8]
  %v2971 = vld [vmem:[#allocation2 + $0x34] sm:$0x8]
  %v2972 = vld [vmem:[#allocation2 + $0x3c] sm:$0x8]
  %s2973 = scalar_lea.vmem %s2, 896
  %v2974 = vld [vmem:[%s2973] sm:$0xf]
  %v2975 = vld [vmem:[%s2973 + $0x4] sm:$0xf]
  %v2976 = vld [vmem:[%s2973 + $0x8] sm:$0xf]
  %v2977 = vld [vmem:[%s2973 + $0xc] sm:$0xf]
  %v2978 = vld [vmem:[%s2973 + $0x10] sm:$0xf]
  %v2979 = vld [vmem:[%s2973 + $0x14] sm:$0xf]
  %v2980 = vld [vmem:[%s2973 + $0x18] sm:$0xf]
  %v2981 = vld [vmem:[%s2973 + $0x1c] sm:$0xf]
  %v2982 = vld [vmem:[%s2973 + $0x20] sm:$0xf]
  %v2983 = vld [vmem:[%s2973 + $0x24] sm:$0xf]
  %v2984 = vld [vmem:[%s2973 + $0x28] sm:$0xf]
  %v2985 = vld [vmem:[%s2973 + $0x2c] sm:$0xf]
  %v2986 = vld [vmem:[%s2973 + $0x30] sm:$0xf]
  %v2987 = vld [vmem:[%s2973 + $0x34] sm:$0xf]
  %v2988 = vld [vmem:[%s2973 + $0x38] sm:$0xf]
  %v2989 = vld [vmem:[%s2973 + $0x3c] sm:$0xf]
  %v2998 = vunpack.c.l.b16 %v2965
  %v2999 = vunpack.c.l.b16 %v2966
  %v3000 = vunpack.c.l.b16 %v2967
  %v3001 = vunpack.c.l.b16 %v2968
  %v3002 = vunpack.c.l.b16 %v2969
  %v3003 = vunpack.c.l.b16 %v2970
  %v3004 = vunpack.c.l.b16 %v2971
  %v3005 = vunpack.c.l.b16 %v2972
  %v3006 = vpack.c.b16 %v2998, %v2998
  %v3007 = vpack.c.b16 %v2999, %v2999
  %v3008 = vpack.c.b16 %v3000, %v3000
  %v3009 = vpack.c.b16 %v3001, %v3001
  %v3010 = vpack.c.b16 %v3002, %v3002
  %v3011 = vpack.c.b16 %v3003, %v3003
  %v3012 = vpack.c.b16 %v3004, %v3004
  %v3013 = vpack.c.b16 %v3005, %v3005
  %v3014 = vunpack.c.l.b16 %v3006
  %v3015 = vunpack.c.l.b16 %v3007
  %v3016 = vunpack.c.l.b16 %v3008
  %v3017 = vunpack.c.l.b16 %v3009
  %v3018 = vunpack.c.l.b16 %v3010
  %v3019 = vunpack.c.l.b16 %v3011
  %v3020 = vunpack.c.l.b16 %v3012
  %v3021 = vunpack.c.l.b16 %v3013
  %v3022 = vrot.slane %v3014, 6
  %v3023 = vrot.slane %v3015, 5
  %v3024 = vsel %vm1425, %v3023, %v3022
  %v3025 = vrot.slane %v3016, 4
  %v3026 = vsel %vm1428, %v3025, %v3024
  %v3027 = vrot.slane %v3017, 3
  %v3028 = vsel %vm1431, %v3027, %v3026
  %v3029 = vrot.slane %v3018, 2
  %v3030 = vsel %vm1434, %v3029, %v3028
  %v3031 = vrot.slane %v3019, 1
  %v3032 = vsel %vm1437, %v3031, %v3030
  %v3033 = vsel %vm1440, %v3020, %v3032
  %v3034 = vrot.slane %v3021, 7
  %v3035 = vsel %vm1443, %v3034, %v3033
  %v3036 = vpack.c.b16 %v3035, %v3035
  %v3054 = vunpack.c.l.b16 %v2974
  %v3055 = vunpack.c.l.b16 %v2975
  %v3056 = vunpack.c.l.b16 %v2976
  %v3057 = vunpack.c.l.b16 %v2977
  %v3058 = vunpack.c.l.b16 %v2978
  %v3059 = vunpack.c.l.b16 %v2979
  %v3060 = vunpack.c.l.b16 %v2980
  %v3061 = vunpack.c.l.b16 %v2981
  %v3062 = vunpack.c.l.b16 %v2982
  %v3063 = vunpack.c.l.b16 %v2983
  %v3064 = vunpack.c.l.b16 %v2984
  %v3065 = vunpack.c.l.b16 %v2985
  %v3066 = vunpack.c.l.b16 %v2986
  %v3067 = vunpack.c.l.b16 %v2987
  %v3068 = vunpack.c.l.b16 %v2988
  %v3069 = vunpack.c.l.b16 %v2989
  %v3070 = vpack.c.b16 %v3055, %v3054
  %v3071 = vpack.c.b16 %v3057, %v3056
  %v3072 = vpack.c.b16 %v3059, %v3058
  %v3073 = vpack.c.b16 %v3061, %v3060
  %v3074 = vpack.c.b16 %v3063, %v3062
  %v3075 = vpack.c.b16 %v3065, %v3064
  %v3076 = vpack.c.b16 %v3067, %v3066
  %v3077 = vpack.c.b16 %v3069, %v3068
  %3086 = vmatpush.bf16.msra.mxu0 %v3077
  %3087 = vmatpush.bf16.msra.mxu0 %v3076
  %3088 = vmatpush.bf16.msra.mxu0 %v3075
  %3089 = vmatpush.bf16.msra.mxu0 %v3074
  %3090 = vmatpush.bf16.msra.mxu0 %v3073
  %3091 = vmatpush.bf16.msra.mxu0 %v3072
  %3092 = vmatpush.bf16.msra.mxu0 %v3071
  %3093 = vmatpush.bf16.msra.mxu0 %v3070
  %3094 = vmatmul.bf16.gmra.mxu0 %v3036
  %v3095 = vpop.f32.mrf.mxu0
  %v3096 = vadd.f32 0.0, %v3095
  %v3097 = vpop.f32.mrf.mxu0
  %3098 = vdwg.mxu0
  %v3099 = vadd.f32 %v2964, %v3096
  %s3100 = scalar_lea.vmem %s2, 960
  %v3101 = vld [vmem:[%s3100] sm:$0xf]
  %v3102 = vld [vmem:[%s3100 + $0x4] sm:$0xf]
  %v3103 = vld [vmem:[%s3100 + $0x8] sm:$0xf]
  %v3104 = vld [vmem:[%s3100 + $0xc] sm:$0xf]
  %v3105 = vld [vmem:[%s3100 + $0x10] sm:$0xf]
  %v3106 = vld [vmem:[%s3100 + $0x14] sm:$0xf]
  %v3107 = vld [vmem:[%s3100 + $0x18] sm:$0xf]
  %v3108 = vld [vmem:[%s3100 + $0x1c] sm:$0xf]
  %v3109 = vld [vmem:[%s3100 + $0x20] sm:$0xf]
  %v3110 = vld [vmem:[%s3100 + $0x24] sm:$0xf]
  %v3111 = vld [vmem:[%s3100 + $0x28] sm:$0xf]
  %v3112 = vld [vmem:[%s3100 + $0x2c] sm:$0xf]
  %v3113 = vld [vmem:[%s3100 + $0x30] sm:$0xf]
  %v3114 = vld [vmem:[%s3100 + $0x34] sm:$0xf]
  %v3115 = vld [vmem:[%s3100 + $0x38] sm:$0xf]
  %v3116 = vld [vmem:[%s3100 + $0x3c] sm:$0xf]
  %v3117 = vrot.slane %v3014, 7
  %v3118 = vrot.slane %v3015, 6
  %v3119 = vsel %vm1425, %v3118, %v3117
  %v3120 = vrot.slane %v3016, 5
  %v3121 = vsel %vm1428, %v3120, %v3119
  %v3122 = vrot.slane %v3017, 4
  %v3123 = vsel %vm1431, %v3122, %v3121
  %v3124 = vrot.slane %v3018, 3
  %v3125 = vsel %vm1434, %v3124, %v3123
  %v3126 = vrot.slane %v3019, 2
  %v3127 = vsel %vm1437, %v3126, %v3125
  %v3128 = vrot.slane %v3020, 1
  %v3129 = vsel %vm1440, %v3128, %v3127
  %v3130 = vsel %vm1443, %v3021, %v3129
  %v3131 = vpack.c.b16 %v3130, %v3130
  %v3149 = vunpack.c.l.b16 %v3101
  %v3150 = vunpack.c.l.b16 %v3102
  %v3151 = vunpack.c.l.b16 %v3103
  %v3152 = vunpack.c.l.b16 %v3104
  %v3153 = vunpack.c.l.b16 %v3105
  %v3154 = vunpack.c.l.b16 %v3106
  %v3155 = vunpack.c.l.b16 %v3107
  %v3156 = vunpack.c.l.b16 %v3108
  %v3157 = vunpack.c.l.b16 %v3109
  %v3158 = vunpack.c.l.b16 %v3110
  %v3159 = vunpack.c.l.b16 %v3111
  %v3160 = vunpack.c.l.b16 %v3112
  %v3161 = vunpack.c.l.b16 %v3113
  %v3162 = vunpack.c.l.b16 %v3114
  %v3163 = vunpack.c.l.b16 %v3115
  %v3164 = vunpack.c.l.b16 %v3116
  %v3165 = vpack.c.b16 %v3150, %v3149
  %v3166 = vpack.c.b16 %v3152, %v3151
  %v3167 = vpack.c.b16 %v3154, %v3153
  %v3168 = vpack.c.b16 %v3156, %v3155
  %v3169 = vpack.c.b16 %v3158, %v3157
  %v3170 = vpack.c.b16 %v3160, %v3159
  %v3171 = vpack.c.b16 %v3162, %v3161
  %v3172 = vpack.c.b16 %v3164, %v3163
  %3181 = vmatpush.bf16.msra.mxu0 %v3172
  %3182 = vmatpush.bf16.msra.mxu0 %v3171
  %3183 = vmatpush.bf16.msra.mxu0 %v3170
  %3184 = vmatpush.bf16.msra.mxu0 %v3169
  %3185 = vmatpush.bf16.msra.mxu0 %v3168
  %3186 = vmatpush.bf16.msra.mxu0 %v3167
  %3187 = vmatpush.bf16.msra.mxu0 %v3166
  %3188 = vmatpush.bf16.msra.mxu0 %v3165
  %3189 = vmatmul.bf16.gmra.mxu0 %v3131
  %v3190 = vpop.f32.mrf.mxu0
  %v3191 = vadd.f32 0.0, %v3190
  %v3192 = vpop.f32.mrf.mxu0
  %3193 = vdwg.mxu0
  %v3194 = vadd.f32 %v3099, %v3191
  %v3195 = vld [vmem:[%s3] sm:$0x1]
  %v3197 = vperm.slane %v3195, 0
  %v3199 = vadd.f32 %v3194, %v3197
  %v3200 = vmax.f32 %v3199, 0.0
  %v3201 = vpack.c.bf16 %v3200, %v3200
  %v3202 = vld [vmem:[%s4] sm:$0xf]
  %v3203 = vld [vmem:[%s4 + $0x4] sm:$0xf]
  %v3204 = vld [vmem:[%s4 + $0x8] sm:$0xf]
  %v3205 = vld [vmem:[%s4 + $0xc] sm:$0xf]
  %v3206 = vld [vmem:[%s4 + $0x10] sm:$0xf]
  %v3207 = vld [vmem:[%s4 + $0x14] sm:$0xf]
  %v3208 = vld [vmem:[%s4 + $0x18] sm:$0xf]
  %v3209 = vld [vmem:[%s4 + $0x1c] sm:$0xf]
  %v3210 = vld [vmem:[%s4 + $0x20] sm:$0xf]
  %v3211 = vld [vmem:[%s4 + $0x24] sm:$0xf]
  %v3212 = vld [vmem:[%s4 + $0x28] sm:$0xf]
  %v3213 = vld [vmem:[%s4 + $0x2c] sm:$0xf]
  %v3214 = vld [vmem:[%s4 + $0x30] sm:$0xf]
  %v3215 = vld [vmem:[%s4 + $0x34] sm:$0xf]
  %v3216 = vld [vmem:[%s4 + $0x38] sm:$0xf]
  %v3217 = vld [vmem:[%s4 + $0x3c] sm:$0xf]
  %v3218 = vld [vmem:[%s5] sm:$0x1]
  %v3220 = vperm.slane %v3218, 0
  %v3238 = vunpack.c.l.b16 %v3202
  %v3239 = vunpack.c.l.b16 %v3203
  %v3240 = vunpack.c.l.b16 %v3204
  %v3241 = vunpack.c.l.b16 %v3205
  %v3242 = vunpack.c.l.b16 %v3206
  %v3243 = vunpack.c.l.b16 %v3207
  %v3244 = vunpack.c.l.b16 %v3208
  %v3245 = vunpack.c.l.b16 %v3209
  %v3246 = vunpack.c.l.b16 %v3210
  %v3247 = vunpack.c.l.b16 %v3211
  %v3248 = vunpack.c.l.b16 %v3212
  %v3249 = vunpack.c.l.b16 %v3213
  %v3250 = vunpack.c.l.b16 %v3214
  %v3251 = vunpack.c.l.b16 %v3215
  %v3252 = vunpack.c.l.b16 %v3216
  %v3253 = vunpack.c.l.b16 %v3217
  %v3254 = vpack.c.b16 %v3239, %v3238
  %v3255 = vpack.c.b16 %v3241, %v3240
  %v3256 = vpack.c.b16 %v3243, %v3242
  %v3257 = vpack.c.b16 %v3245, %v3244
  %v3258 = vpack.c.b16 %v3247, %v3246
  %v3259 = vpack.c.b16 %v3249, %v3248
  %v3260 = vpack.c.b16 %v3251, %v3250
  %v3261 = vpack.c.b16 %v3253, %v3252
  %3270 = vmatpush.bf16.msra.mxu0 %v3261
  %3271 = vmatpush.bf16.msra.mxu0 %v3260
  %3272 = vmatpush.bf16.msra.mxu0 %v3259
  %3273 = vmatpush.bf16.msra.mxu0 %v3258
  %3274 = vmatpush.bf16.msra.mxu0 %v3257
  %3275 = vmatpush.bf16.msra.mxu0 %v3256
  %3276 = vmatpush.bf16.msra.mxu0 %v3255
  %3277 = vmatpush.bf16.msra.mxu0 %v3254
  %3278 = vmatmul.bf16.gmra.mxu0 %v3201
  %v3279 = vpop.f32.mrf.mxu0
  %v3280 = vadd.f32 %v3220, %v3279
  %v3281 = vpop.f32.mrf.mxu0
  %3282 = vdwg.mxu0
  %v3283 = vmax.f32 %v3280, 0.0
  %v3284 = vpack.c.bf16 %v3283, %v3283
  %v3285 = vld [vmem:[%s6] sm:$0xf]
  %v3286 = vld [vmem:[%s6 + $0x4] sm:$0xf]
  %v3287 = vld [vmem:[%s6 + $0x8] sm:$0xf]
  %v3288 = vld [vmem:[%s6 + $0xc] sm:$0xf]
  %v3289 = vld [vmem:[%s6 + $0x10] sm:$0xf]
  %v3290 = vld [vmem:[%s6 + $0x14] sm:$0xf]
  %v3291 = vld [vmem:[%s6 + $0x18] sm:$0xf]
  %v3292 = vld [vmem:[%s6 + $0x1c] sm:$0xf]
  %v3293 = vld [vmem:[%s6 + $0x20] sm:$0xf]
  %v3294 = vld [vmem:[%s6 + $0x24] sm:$0xf]
  %v3295 = vld [vmem:[%s6 + $0x28] sm:$0xf]
  %v3296 = vld [vmem:[%s6 + $0x2c] sm:$0xf]
  %v3297 = vld [vmem:[%s6 + $0x30] sm:$0xf]
  %v3298 = vld [vmem:[%s6 + $0x34] sm:$0xf]
  %v3299 = vld [vmem:[%s6 + $0x38] sm:$0xf]
  %v3300 = vld [vmem:[%s6 + $0x3c] sm:$0xf]
  %v3301 = vld [vmem:[%s7] sm:$0x1]
  %v3303 = vperm.slane %v3301, 0
  %v3321 = vunpack.c.l.b16 %v3285
  %v3322 = vunpack.c.l.b16 %v3286
  %v3323 = vunpack.c.l.b16 %v3287
  %v3324 = vunpack.c.l.b16 %v3288
  %v3325 = vunpack.c.l.b16 %v3289
  %v3326 = vunpack.c.l.b16 %v3290
  %v3327 = vunpack.c.l.b16 %v3291
  %v3328 = vunpack.c.l.b16 %v3292
  %v3329 = vunpack.c.l.b16 %v3293
  %v3330 = vunpack.c.l.b16 %v3294
  %v3331 = vunpack.c.l.b16 %v3295
  %v3332 = vunpack.c.l.b16 %v3296
  %v3333 = vunpack.c.l.b16 %v3297
  %v3334 = vunpack.c.l.b16 %v3298
  %v3335 = vunpack.c.l.b16 %v3299
  %v3336 = vunpack.c.l.b16 %v3300
  %v3337 = vpack.c.b16 %v3322, %v3321
  %v3338 = vpack.c.b16 %v3324, %v3323
  %v3339 = vpack.c.b16 %v3326, %v3325
  %v3340 = vpack.c.b16 %v3328, %v3327
  %v3341 = vpack.c.b16 %v3330, %v3329
  %v3342 = vpack.c.b16 %v3332, %v3331
  %v3343 = vpack.c.b16 %v3334, %v3333
  %v3344 = vpack.c.b16 %v3336, %v3335
  %3353 = vmatpush.bf16.msra.mxu0 %v3344
  %3354 = vmatpush.bf16.msra.mxu0 %v3343
  %3355 = vmatpush.bf16.msra.mxu0 %v3342
  %3356 = vmatpush.bf16.msra.mxu0 %v3341
  %3357 = vmatpush.bf16.msra.mxu0 %v3340
  %3358 = vmatpush.bf16.msra.mxu0 %v3339
  %3359 = vmatpush.bf16.msra.mxu0 %v3338
  %3360 = vmatpush.bf16.msra.mxu0 %v3337
  %3361 = vmatmul.bf16.gmra.mxu0 %v3284
  %v3362 = vpop.f32.mrf.mxu0
  %v3363 = vadd.f32 %v3303, %v3362
  %v3364 = vpop.f32.mrf.mxu0
  %3365 = vdwg.mxu0
  %3366 = vmax.xlane.f32.xlu0 %v3363
  %v3367 = vpop.xlane.xlu0 %3366
  %v3368 = vsub.f32 %v3363, %v3367
  %v3369 = vmul.f32 %v3368, 1.442695
  %v3370 = vpow.pop %v3369
  %3371 = vadd.xlane.f32.xlu0 %v3370
  %v3372 = vpop.xlane.xlu0 %3371
  %v3373 = vlog2.pop %v3372
  %v3374 = vmul.f32 %v3373, 0.6931472
  %v3375 = vsub.f32 %v3368, %v3374
  %3376 = vst [vmem:[%s8] sm:$0xff] %v3375
  // Predicated region
  $region34: #{cnn4_forward.3} parent=0 // pred_check
    _
  $region35: #{cnn4_forward.3} parent=0 // pred_check_branch
    %3378 = sbr.rel (0) target = $region37
  $region36: #{cnn4_forward.3} parent=0 // pred_region
    _
  $region37: #{cnn4_forward.3} parent=0 // pred_fallthru
    _
  // Predicated region
  $region38: #{cnn4_forward.3} parent=0 // pred_check
    _
  $region39: #{cnn4_forward.3} parent=0 // pred_check_branch
    %3380 = sbr.rel (0) target = $region41
  $region40: #{cnn4_forward.3} parent=0 // pred_region
    _
  $region41: #{cnn4_forward.3} parent=0 // pred_fallthru
    _

</llo_original>
